<compile_context>
chip_gen: v5e
topology: v5e:2x2
jax: 0.10.0
libtpu: 0.0.40
codegen_flags: <defaults>
</compile_context>

<pallas_src>
import functools

import jax
import jax.numpy as jnp
from jax import lax
from jax.experimental import pallas as pl
from jax.experimental.pallas import tpu as pltpu

HIDDEN = 100       # forced by the architecture (bidirectional 2*100 output split+summed)
INPUT_SIZE = 40
HP = 128           # hidden dim padded to the 128-lane vreg width


# ----------------------------------------------------------------------------
# Fused bidirectional GRU recurrence kernel (both directions in one loop).
#   gi_ref   : (T, B, 6*Hp)  precomputed x@Wih^T (+ r/z biases), lane layout
#              [fwd_r | bwd_r | fwd_z | bwd_z | fwd_n | bwd_n]; the backward
#              direction's gi is already time-reversed.
#   whh_ref  : (2*Hp, 6*Hp)  block-diagonal [fwd | bwd] hidden-to-hidden weights
#   bhhn_ref : (1, 2*Hp)     b_hn for [fwd | bwd] (must stay inside r * (...))
#   h_out_ref: (T, B, 2*Hp)  [fwd_h(t) | bwd_h(T-1-t)]
# ----------------------------------------------------------------------------
def _bigru_kernel(gi_ref, whh_ref, bhhn_ref, h_out_ref):
    T, B, W = gi_ref.shape
    hp = W // 6
    h2 = 2 * hp                              # fused [fwd | bwd] hidden width

    whh = whh_ref[...]                       # (2Hp, 6Hp)
    bhh_n = bhhn_ref[...]                    # (1, 2Hp)

    def step(t, h):                          # h: (B, 2Hp) f32 carry
        gi = gi_ref[t]                       # (B, 6Hp) one contiguous slab
        gh = jnp.dot(h, whh, preferred_element_type=jnp.float32)     # (B, 6Hp)
        # One sigmoid over both directions' r and z gates (lanes [0:4Hp)).
        rz = jax.nn.sigmoid(gi[:, :2 * h2] + gh[:, :2 * h2])
        r = rz[:, :h2]                       # [fwd_r | bwd_r]
        z = rz[:, h2:]                       # [fwd_z | bwd_z]
        n = jnp.tanh(gi[:, 2 * h2:] + r * (gh[:, 2 * h2:] + bhh_n))
        h_new = (1.0 - z) * n + z * h
        h_out_ref[t] = h_new
        return h_new

    lax.fori_loop(0, T, step, jnp.zeros((B, h2), jnp.float32), unroll=8)


def bigru_pallas(gi, whh_comb, bhh_n):
    """gi: (T,B,6Hp); whh_comb: (2Hp,6Hp); bhh_n: (1,2Hp) -> (T,B,2Hp)."""
    T, B, W = gi.shape
    hp = W // 6
    ce = pl.CostEstimate(
        flops=T * 2 * B * (2 * hp) * (6 * hp),
        transcendentals=T * B * 6 * hp,
        bytes_accessed=4 * (gi.size + whh_comb.size + bhh_n.size + T * B * 2 * hp),
    )
    return pl.pallas_call(
        _bigru_kernel,
        out_shape=jax.ShapeDtypeStruct((T, B, 2 * hp), jnp.float32),
        grid_spec=pltpu.PrefetchScalarGridSpec(
            num_scalar_prefetch=0,
            grid=(1,),
            in_specs=[
                pl.BlockSpec((T, B, W), lambda i: (0, 0, 0)),
                pl.BlockSpec((2 * hp, W), lambda i: (0, 0)),
                pl.BlockSpec((1, 2 * hp), lambda i: (0, 0)),
            ],
            out_specs=pl.BlockSpec((T, B, 2 * hp), lambda i: (0, 0, 0)),
        ),
        compiler_params=pltpu.CompilerParams(
            dimension_semantics=("arbitrary",),
            vmem_limit_bytes=48 * 1024 * 1024),
        cost_estimate=ce,
    )(gi, whh_comb, bhh_n)


# ----------------------------------------------------------------------------
# Attention + LayerNorm + 3x(FC,ReLU) + residual + global max.
# Gridded over batch tiles ("parallel" -> megacore on v7x, bounded VMEM).
# ----------------------------------------------------------------------------
def _attn_mlp_kernel(seq_ref, gamma_ref, beta_ref, wfc_ref, bfc_ref,
                     attn_ref, final_ref, *, h_real):
    seq = seq_ref[...]                                   # (tb, T, Hp) f32
    tb, T, hp = seq.shape
    seq_bf = seq.astype(jnp.bfloat16)

    # energy[b,i,j] = <seq[b,i], seq[b,j]> ; softmax over dim=1 (the i axis).
    energy = jnp.einsum("bid,bjd->bij", seq_bf, seq_bf,
                        preferred_element_type=jnp.float32)      # (tb, T, T)
    e_max = jnp.max(energy, axis=1, keepdims=True)
    e = jnp.exp(energy - e_max)
    denom = jnp.sum(e, axis=1, keepdims=True)
    weights = e * pl.reciprocal(denom, approx=True)
    attn_ref[...] = weights

    out = jnp.einsum("bij,bjd->bid", weights.astype(jnp.bfloat16), seq_bf,
                     preferred_element_type=jnp.float32)         # (tb, T, Hp)

    # Dropout2d(p=0.5) eval = identity.  LayerNorm(100), eps=1e-5, computed
    # over the h_real real features only (padded lanes are exactly zero and
    # stay zero because gamma/beta pads are zero).
    s1 = jnp.sum(out, axis=-1, keepdims=True)
    s2 = jnp.sum(out * out, axis=-1, keepdims=True)
    mu = s1 / h_real
    var = s2 / h_real - mu * mu
    ln = (out - mu) * lax.rsqrt(var + 1e-5) * gamma_ref[...] + beta_ref[...]

    # 3x (fc, ReLU) with the SAME weights on the flattened (tb*T, Hp) slab.
    flat = ln.reshape(tb * T, hp)
    wfc = wfc_ref[...].astype(jnp.bfloat16)
    bias = bfc_ref[...]
    x1 = flat
    for _ in range(3):
        x1 = jnp.maximum(
            jnp.dot(x1.astype(jnp.bfloat16), wfc,
                    preferred_element_type=jnp.float32) + bias, 0.0)

    # Residual to the post-LayerNorm attention output (self_attention returns
    # the layer-normed tensor, which is what the PyTorch residual uses).
    out1 = (x1 + flat).reshape(tb, T, hp)

    # max_pool2d(kernel=(T, hidden)) == per-batch global max, then ReLU.
    # Padded lanes are exactly 0 and relu(max(S ∪ {0})) == relu(max(S)).
    m = jnp.max(out1, axis=2, keepdims=True)             # (tb, T, 1)
    m = jnp.max(m, axis=1, keepdims=True)                # (tb, 1, 1)
    final_ref[...] = jnp.maximum(m, 0.0)


def attention_mlp(seq, gamma_p, beta_p, wfcT_p, bfc_p, h_real):
    B_pad, T, hp = seq.shape
    tb = max(1, B_pad // 2)                  # >= 2 grid steps -> both TCs on v7x
    assert B_pad % tb == 0
    n_tiles = B_pad // tb
    BT = tb * T
    ce = pl.CostEstimate(
        flops=n_tiles * (2 * (2 * tb * T * T * hp) + 3 * 2 * BT * hp * hp),
        transcendentals=n_tiles * (tb * T * T + BT),
        bytes_accessed=4 * (seq.size + 4 * hp + hp * hp + B_pad * T * T + B_pad),
    )
    kernel = functools.partial(_attn_mlp_kernel, h_real=float(h_real))
    attn, final = pl.pallas_call(
        kernel,
        out_shape=(jax.ShapeDtypeStruct((B_pad, T, T), jnp.float32),
                   jax.ShapeDtypeStruct((B_pad, 1, 1), jnp.float32)),
        grid_spec=pltpu.PrefetchScalarGridSpec(
            num_scalar_prefetch=0,
            grid=(n_tiles,),
            in_specs=[
                pl.BlockSpec((tb, T, hp), lambda i: (i, 0, 0)),
                pl.BlockSpec((1, hp), lambda i: (0, 0)),
                pl.BlockSpec((1, hp), lambda i: (0, 0)),
                pl.BlockSpec((hp, hp), lambda i: (0, 0)),
                pl.BlockSpec((1, hp), lambda i: (0, 0)),
            ],
            out_specs=(pl.BlockSpec((tb, T, T), lambda i: (i, 0, 0)),
                       pl.BlockSpec((tb, 1, 1), lambda i: (i, 0, 0))),
        ),
        compiler_params=pltpu.CompilerParams(
            dimension_semantics=("parallel",),
            vmem_limit_bytes=48 * 1024 * 1024),
        cost_estimate=ce,
    )(seq, gamma_p, beta_p, wfcT_p, bfc_p)
    return final, attn


# ----------------------------------------------------------------------------
# Full forward + deterministic parameter initialization / weight prep
# ----------------------------------------------------------------------------
def transformer_forward(params, input_btf, seq_len):
    # TODO(synk): PackedSequence variable-length masking of padded timesteps is
    # not reproduced; this matches PyTorch when all seq_len == T (full length).
    del seq_len
    x = input_btf.astype(jnp.float32)
    B, T, _ = x.shape
    hp = params["Hp"]
    h_real = params["H"]

    # Pad batch to a multiple of 8 (dense sublanes for the per-step carry/store).
    B_pad = max(8, ((B + 7) // 8) * 8)
    if B_pad != B:
        x = jnp.pad(x, ((0, B_pad - B), (0, 0), (0, 0)))

    h_fwd = h_bwd = None
    layers = params["gru_layers"]
    for li, layer in enumerate(layers):
        # Hoisted input projection for all timesteps, both directions, with the
        # backward direction's time axis pre-reversed (XLA matmul).
        x2 = jnp.stack([x, x[:, ::-1, :]], axis=0)               # (2, B, T, I)
        gi = jnp.einsum("dbti,dik->tbk", x2, layer["wih_comb"],
                        preferred_element_type=jnp.float32)      # (T, B, 6Hp)
        gi = gi + layer["gi_bias"]
        h_all = bigru_pallas(gi, layer["whh_comb"], layer["bhh_n"])  # (T,B,2Hp)
        h_fwd = h_all[:, :, :hp]                  # fwd output at time t
        h_bwd = h_all[::-1, :, hp:]               # bwd output at time t (un-reverse)
        if li + 1 < len(layers):
            # next layer consumes the [fwd | bwd] concatenation (real dims, batch-major)
            x = jnp.transpose(
                jnp.concatenate([h_fwd[:, :, :h_real], h_bwd[:, :, :h_real]],
                                axis=-1), (1, 0, 2))

    # fwd+bwd sum and (T,B,Hp)->(B,T,Hp) relayout in XLA (lane-dense slab).
    seq = jnp.transpose(h_fwd + h_bwd, (1, 0, 2))                # (B_pad, T, Hp)

    final, attn = attention_mlp(seq, params["ln_gamma_p"], params["ln_beta_p"],
                                params["fc_wT_p"], params["fc_b_p"], h_real)
    return final[:B], attn[:B]                    # ((B,1,1), (B,T,T))


def _prep_gru_layer(wih, whh, bih, bhh, h, hp):
    """Build the fused fwd+bwd, 128-padded weight layout.

    Lane layout (each slot `hp` wide): [fwd_r | bwd_r | fwd_z | bwd_z | fwd_n | bwd_n]
    Hidden-state lane layout: [fwd_h | bwd_h] (2*hp wide).
    """
    in_size = wih.shape[-1]
    wih_comb = jnp.zeros((2, in_size, 6 * hp), jnp.float32)
    whh_comb = jnp.zeros((2 * hp, 6 * hp), jnp.float32)
    gi_bias = jnp.zeros((6 * hp,), jnp.float32)
    bhh_n = jnp.zeros((1, 2 * hp), jnp.float32)
    for d in range(2):
        for g in range(3):                       # gate order [r, z, n]
            c0 = (2 * g + d) * hp
            wih_comb = wih_comb.at[d, :, c0:c0 + h].set(wih[d, g].T)
            whh_comb = whh_comb.at[d * hp:d * hp + h, c0:c0 + h].set(whh[d, g].T)
            b = bih[d, g] + (bhh[d, g] if g < 2 else jnp.zeros_like(bih[d, g]))
            gi_bias = gi_bias.at[c0:c0 + h].set(b)
        bhh_n = bhh_n.at[0, d * hp:d * hp + h].set(bhh[d, 2])
    return {"wih_comb": wih_comb, "whh_comb": whh_comb,
            "gi_bias": gi_bias, "bhh_n": bhh_n}


def init_params(key, n_gru_layers=1, input_size=INPUT_SIZE, hidden=HIDDEN, hp=HP):
    keys = iter(jax.random.split(key, 4 * n_gru_layers + 2))

    def u(shape, scale):
        return jax.random.uniform(next(keys), shape, jnp.float32, -scale, scale)

    kg = float(1.0 / (hidden ** 0.5))
    layers = []
    in_size = input_size
    for _ in range(n_gru_layers):
        # PyTorch layout: per direction, per gate [r, z, n]: W (H, in), b (H,)
        wih = u((2, 3, hidden, in_size), kg)
        whh = u((2, 3, hidden, hidden), kg)
        bih = u((2, 3, hidden), kg)
        bhh = u((2, 3, hidden), kg)
        layers.append(_prep_gru_layer(wih, whh, bih, bhh, hidden, hp))
        in_size = 2 * hidden

    kf = float(1.0 / (hidden ** 0.5))
    fc_w = u((hidden, hidden), kf)
    fc_b = u((hidden,), kf)

    fc_wT_p = jnp.zeros((hp, hp), jnp.float32).at[:hidden, :hidden].set(fc_w.T)
    fc_b_p = jnp.zeros((1, hp), jnp.float32).at[0, :hidden].set(fc_b)
    gamma_p = jnp.zeros((1, hp), jnp.float32).at[0, :hidden].set(1.0)  # LN default
    beta_p = jnp.zeros((1, hp), jnp.float32)

    return {"H": hidden, "Hp": hp, "gru_layers": layers,
            "fc_wT_p": fc_wT_p, "fc_b_p": fc_b_p,
            "ln_gamma_p": gamma_p, "ln_beta_p": beta_p}


if __name__ == "__main__":
    B, T, F = 2, 8, 40
    key = jax.random.PRNGKey(0)
    k_x, k_p = jax.random.split(key)

    x = jax.random.normal(k_x, (B, T, F), jnp.float32)
    seq_len = jnp.full((B,), T, dtype=jnp.int32)      # full-length sequences
    params = init_params(k_p, n_gru_layers=1)

    fwd = jax.jit(functools.partial(transformer_forward, params))
    final, attn = fwd(x, seq_len)
    jax.block_until_ready((final, attn))

    assert final.shape == (B, 1, 1) and final.dtype == jnp.float32
    assert attn.shape == (B, T, T) and attn.dtype == jnp.float32
    assert bool(jnp.all(jnp.isfinite(final))) and bool(jnp.all(jnp.isfinite(attn)))
    print("KERNEL_OK")
</pallas_src>

<mosaic_0001>
module attributes {stable_mosaic.version = 11 : i64} {
  func.func @_bigru_kernel(%arg0: i32, %arg1: memref<8x8x768xf32, #tpu.memory_space<vmem>>, %arg2: memref<256x768xf32, #tpu.memory_space<vmem>>, %arg3: memref<1x256xf32, #tpu.memory_space<vmem>>, %arg4: memref<8x8x256xf32, #tpu.memory_space<vmem>>) attributes {dimension_semantics = [#tpu.dimension_semantics<arbitrary>], iteration_bounds = array<i64: 1>, scalar_prefetch = 0 : i64, scratch_operands = 0 : i64, tpu.core_type = #tpu.core_type<tc>, window_params = [{pipeline_mode = #tpu.pipeline_mode<synchronous>, transform_indices = @transform_0, window_bounds = array<i64: 8, 8, 768>}, {pipeline_mode = #tpu.pipeline_mode<synchronous>, transform_indices = @transform_1, window_bounds = array<i64: 256, 768>}, {pipeline_mode = #tpu.pipeline_mode<synchronous>, transform_indices = @transform_2, window_bounds = array<i64: 1, 256>}, {pipeline_mode = #tpu.pipeline_mode<synchronous>, transform_indices = @transform_3, window_bounds = array<i64: 8, 8, 256>}]} {
    %c0 = arith.constant 0 : index
    %c0_0 = arith.constant 0 : index
    %0 = vector.load %arg2[%c0, %c0_0] : memref<256x768xf32, #tpu.memory_space<vmem>>, vector<256x768xf32>
    %c0_1 = arith.constant 0 : index
    %c0_2 = arith.constant 0 : index
    %1 = vector.load %arg3[%c0_1, %c0_2] : memref<1x256xf32, #tpu.memory_space<vmem>>, vector<1x256xf32>
    %cst = arith.constant 0.000000e+00 : f32
    %2 = vector.broadcast %cst : f32 to vector<8x256xf32>
    %c0_i32 = arith.constant 0 : i32
    %3 = arith.index_cast %c0_i32 : i32 to index
    %c0_3 = arith.constant 0 : index
    %c0_4 = arith.constant 0 : index
    %4 = vector.load %arg1[%3, %c0_3, %c0_4] : memref<8x8x768xf32, #tpu.memory_space<vmem>>, vector<1x8x768xf32>
    %5 = vector.shape_cast %4 : vector<1x8x768xf32> to vector<8x768xf32>
    %cst_5 = arith.constant dense<0.000000e+00> : vector<8x768xf32>
    %6 = tpu.matmul %2, %0, %cst_5 {dimension_numbers = #tpu.dot_dimension_numbers<[1], [0], [0], [1], [0, 0, 1, 1], [], []>} : vector<8x256xf32>, vector<256x768xf32>, vector<8x768xf32> -> vector<8x768xf32>
    %7 = vector.extract_strided_slice %5 {offsets = [0, 0], sizes = [8, 512], strides = [1, 1]} : vector<8x768xf32> to vector<8x512xf32>
    %8 = vector.extract_strided_slice %6 {offsets = [0, 0], sizes = [8, 512], strides = [1, 1]} : vector<8x768xf32> to vector<8x512xf32>
    %9 = arith.addf %7, %8 : vector<8x512xf32>
    %10 = arith.negf %9 : vector<8x512xf32>
    %11 = math.exp %10 : vector<8x512xf32>
    %cst_6 = arith.constant 1.000000e+00 : f32
    %12 = vector.broadcast %cst_6 : f32 to vector<8x512xf32>
    %13 = arith.addf %12, %11 : vector<8x512xf32>
    %14 = arith.divf %12, %13 : vector<8x512xf32>
    %15 = vector.extract_strided_slice %14 {offsets = [0, 0], sizes = [8, 256], strides = [1, 1]} : vector<8x512xf32> to vector<8x256xf32>
    %16 = vector.extract_strided_slice %14 {offsets = [0, 256], sizes = [8, 256], strides = [1, 1]} : vector<8x512xf32> to vector<8x256xf32>
    %17 = vector.extract_strided_slice %5 {offsets = [0, 512], sizes = [8, 256], strides = [1, 1]} : vector<8x768xf32> to vector<8x256xf32>
    %18 = vector.extract_strided_slice %6 {offsets = [0, 512], sizes = [8, 256], strides = [1, 1]} : vector<8x768xf32> to vector<8x256xf32>
    %19 = vector.broadcast %1 : vector<1x256xf32> to vector<8x256xf32>
    %20 = arith.addf %18, %19 : vector<8x256xf32>
    %21 = arith.mulf %15, %20 : vector<8x256xf32>
    %22 = arith.addf %17, %21 : vector<8x256xf32>
    %23 = math.tanh %22 : vector<8x256xf32>
    %cst_7 = arith.constant 1.000000e+00 : f32
    %24 = vector.broadcast %cst_7 : f32 to vector<8x256xf32>
    %25 = arith.subf %24, %16 : vector<8x256xf32>
    %26 = arith.mulf %25, %23 : vector<8x256xf32>
    %27 = arith.mulf %16, %2 : vector<8x256xf32>
    %28 = arith.addf %26, %27 : vector<8x256xf32>
    %29 = arith.index_cast %c0_i32 : i32 to index
    %c0_8 = arith.constant 0 : index
    %c0_9 = arith.constant 0 : index
    %30 = vector.load %arg4[%29, %c0_8, %c0_9] : memref<8x8x256xf32, #tpu.memory_space<vmem>>, vector<1x8x256xf32>
    %31 = vector.shape_cast %30 : vector<1x8x256xf32> to vector<8x256xf32>
    %32 = vector.shape_cast %28 : vector<8x256xf32> to vector<1x8x256xf32>
    tpu.vector_store %arg4[%29, %c0_8, %c0_9], %32 {strides = array<i32>} : memref<8x8x256xf32, #tpu.memory_space<vmem>>, vector<1x8x256xf32>,
    %c1_i32 = arith.constant 1 : i32
    %33 = arith.index_cast %c1_i32 : i32 to index
    %c0_10 = arith.constant 0 : index
    %c0_11 = arith.constant 0 : index
    %34 = vector.load %arg1[%33, %c0_10, %c0_11] : memref<8x8x768xf32, #tpu.memory_space<vmem>>, vector<1x8x768xf32>
    %35 = vector.shape_cast %34 : vector<1x8x768xf32> to vector<8x768xf32>
    %cst_12 = arith.constant dense<0.000000e+00> : vector<8x768xf32>
    %36 = tpu.matmul %28, %0, %cst_12 {dimension_numbers = #tpu.dot_dimension_numbers<[1], [0], [0], [1], [0, 0, 1, 1], [], []>} : vector<8x256xf32>, vector<256x768xf32>, vector<8x768xf32> -> vector<8x768xf32>
    %37 = vector.extract_strided_slice %35 {offsets = [0, 0], sizes = [8, 512], strides = [1, 1]} : vector<8x768xf32> to vector<8x512xf32>
    %38 = vector.extract_strided_slice %36 {offsets = [0, 0], sizes = [8, 512], strides = [1, 1]} : vector<8x768xf32> to vector<8x512xf32>
    %39 = arith.addf %37, %38 : vector<8x512xf32>
    %40 = arith.negf %39 : vector<8x512xf32>
    %41 = math.exp %40 : vector<8x512xf32>
    %cst_13 = arith.constant 1.000000e+00 : f32
    %42 = vector.broadcast %cst_13 : f32 to vector<8x512xf32>
    %43 = arith.addf %42, %41 : vector<8x512xf32>
    %44 = arith.divf %42, %43 : vector<8x512xf32>
    %45 = vector.extract_strided_slice %44 {offsets = [0, 0], sizes = [8, 256], strides = [1, 1]} : vector<8x512xf32> to vector<8x256xf32>
    %46 = vector.extract_strided_slice %44 {offsets = [0, 256], sizes = [8, 256], strides = [1, 1]} : vector<8x512xf32> to vector<8x256xf32>
    %47 = vector.extract_strided_slice %35 {offsets = [0, 512], sizes = [8, 256], strides = [1, 1]} : vector<8x768xf32> to vector<8x256xf32>
    %48 = vector.extract_strided_slice %36 {offsets = [0, 512], sizes = [8, 256], strides = [1, 1]} : vector<8x768xf32> to vector<8x256xf32>
    %49 = vector.broadcast %1 : vector<1x256xf32> to vector<8x256xf32>
    %50 = arith.addf %48, %49 : vector<8x256xf32>
    %51 = arith.mulf %45, %50 : vector<8x256xf32>
    %52 = arith.addf %47, %51 : vector<8x256xf32>
    %53 = math.tanh %52 : vector<8x256xf32>
    %cst_14 = arith.constant 1.000000e+00 : f32
    %54 = vector.broadcast %cst_14 : f32 to vector<8x256xf32>
    %55 = arith.subf %54, %46 : vector<8x256xf32>
    %56 = arith.mulf %55, %53 : vector<8x256xf32>
    %57 = arith.mulf %46, %28 : vector<8x256xf32>
    %58 = arith.addf %56, %57 : vector<8x256xf32>
    %59 = arith.index_cast %c1_i32 : i32 to index
    %c0_15 = arith.constant 0 : index
    %c0_16 = arith.constant 0 : index
    %60 = vector.load %arg4[%59, %c0_15, %c0_16] : memref<8x8x256xf32, #tpu.memory_space<vmem>>, vector<1x8x256xf32>
    %61 = vector.shape_cast %60 : vector<1x8x256xf32> to vector<8x256xf32>
    %62 = vector.shape_cast %58 : vector<8x256xf32> to vector<1x8x256xf32>
    tpu.vector_store %arg4[%59, %c0_15, %c0_16], %62 {strides = array<i32>} : memref<8x8x256xf32, #tpu.memory_space<vmem>>, vector<1x8x256xf32>,
    %c2_i32 = arith.constant 2 : i32
    %63 = arith.index_cast %c2_i32 : i32 to index
    %c0_17 = arith.constant 0 : index
    %c0_18 = arith.constant 0 : index
    %64 = vector.load %arg1[%63, %c0_17, %c0_18] : memref<8x8x768xf32, #tpu.memory_space<vmem>>, vector<1x8x768xf32>
    %65 = vector.shape_cast %64 : vector<1x8x768xf32> to vector<8x768xf32>
    %cst_19 = arith.constant dense<0.000000e+00> : vector<8x768xf32>
    %66 = tpu.matmul %58, %0, %cst_19 {dimension_numbers = #tpu.dot_dimension_numbers<[1], [0], [0], [1], [0, 0, 1, 1], [], []>} : vector<8x256xf32>, vector<256x768xf32>, vector<8x768xf32> -> vector<8x768xf32>
    %67 = vector.extract_strided_slice %65 {offsets = [0, 0], sizes = [8, 512], strides = [1, 1]} : vector<8x768xf32> to vector<8x512xf32>
    %68 = vector.extract_strided_slice %66 {offsets = [0, 0], sizes = [8, 512], strides = [1, 1]} : vector<8x768xf32> to vector<8x512xf32>
    %69 = arith.addf %67, %68 : vector<8x512xf32>
    %70 = arith.negf %69 : vector<8x512xf32>
    %71 = math.exp %70 : vector<8x512xf32>
    %cst_20 = arith.constant 1.000000e+00 : f32
    %72 = vector.broadcast %cst_20 : f32 to vector<8x512xf32>
    %73 = arith.addf %72, %71 : vector<8x512xf32>
    %74 = arith.divf %72, %73 : vector<8x512xf32>
    %75 = vector.extract_strided_slice %74 {offsets = [0, 0], sizes = [8, 256], strides = [1, 1]} : vector<8x512xf32> to vector<8x256xf32>
    %76 = vector.extract_strided_slice %74 {offsets = [0, 256], sizes = [8, 256], strides = [1, 1]} : vector<8x512xf32> to vector<8x256xf32>
    %77 = vector.extract_strided_slice %65 {offsets = [0, 512], sizes = [8, 256], strides = [1, 1]} : vector<8x768xf32> to vector<8x256xf32>
    %78 = vector.extract_strided_slice %66 {offsets = [0, 512], sizes = [8, 256], strides = [1, 1]} : vector<8x768xf32> to vector<8x256xf32>
    %79 = vector.broadcast %1 : vector<1x256xf32> to vector<8x256xf32>
    %80 = arith.addf %78, %79 : vector<8x256xf32>
    %81 = arith.mulf %75, %80 : vector<8x256xf32>
    %82 = arith.addf %77, %81 : vector<8x256xf32>
    %83 = math.tanh %82 : vector<8x256xf32>
    %cst_21 = arith.constant 1.000000e+00 : f32
    %84 = vector.broadcast %cst_21 : f32 to vector<8x256xf32>
    %85 = arith.subf %84, %76 : vector<8x256xf32>
    %86 = arith.mulf %85, %83 : vector<8x256xf32>
    %87 = arith.mulf %76, %58 : vector<8x256xf32>
    %88 = arith.addf %86, %87 : vector<8x256xf32>
    %89 = arith.index_cast %c2_i32 : i32 to index
    %c0_22 = arith.constant 0 : index
    %c0_23 = arith.constant 0 : index
    %90 = vector.load %arg4[%89, %c0_22, %c0_23] : memref<8x8x256xf32, #tpu.memory_space<vmem>>, vector<1x8x256xf32>
    %91 = vector.shape_cast %90 : vector<1x8x256xf32> to vector<8x256xf32>
    %92 = vector.shape_cast %88 : vector<8x256xf32> to vector<1x8x256xf32>
    tpu.vector_store %arg4[%89, %c0_22, %c0_23], %92 {strides = array<i32>} : memref<8x8x256xf32, #tpu.memory_space<vmem>>, vector<1x8x256xf32>,
    %c3_i32 = arith.constant 3 : i32
    %93 = arith.index_cast %c3_i32 : i32 to index
    %c0_24 = arith.constant 0 : index
    %c0_25 = arith.constant 0 : index
    %94 = vector.load %arg1[%93, %c0_24, %c0_25] : memref<8x8x768xf32, #tpu.memory_space<vmem>>, vector<1x8x768xf32>
    %95 = vector.shape_cast %94 : vector<1x8x768xf32> to vector<8x768xf32>
    %cst_26 = arith.constant dense<0.000000e+00> : vector<8x768xf32>
    %96 = tpu.matmul %88, %0, %cst_26 {dimension_numbers = #tpu.dot_dimension_numbers<[1], [0], [0], [1], [0, 0, 1, 1], [], []>} : vector<8x256xf32>, vector<256x768xf32>, vector<8x768xf32> -> vector<8x768xf32>
    %97 = vector.extract_strided_slice %95 {offsets = [0, 0], sizes = [8, 512], strides = [1, 1]} : vector<8x768xf32> to vector<8x512xf32>
    %98 = vector.extract_strided_slice %96 {offsets = [0, 0], sizes = [8, 512], strides = [1, 1]} : vector<8x768xf32> to vector<8x512xf32>
    %99 = arith.addf %97, %98 : vector<8x512xf32>
    %100 = arith.negf %99 : vector<8x512xf32>
    %101 = math.exp %100 : vector<8x512xf32>
    %cst_27 = arith.constant 1.000000e+00 : f32
    %102 = vector.broadcast %cst_27 : f32 to vector<8x512xf32>
    %103 = arith.addf %102, %101 : vector<8x512xf32>
    %104 = arith.divf %102, %103 : vector<8x512xf32>
    %105 = vector.extract_strided_slice %104 {offsets = [0, 0], sizes = [8, 256], strides = [1, 1]} : vector<8x512xf32> to vector<8x256xf32>
    %106 = vector.extract_strided_slice %104 {offsets = [0, 256], sizes = [8, 256], strides = [1, 1]} : vector<8x512xf32> to vector<8x256xf32>
    %107 = vector.extract_strided_slice %95 {offsets = [0, 512], sizes = [8, 256], strides = [1, 1]} : vector<8x768xf32> to vector<8x256xf32>
    %108 = vector.extract_strided_slice %96 {offsets = [0, 512], sizes = [8, 256], strides = [1, 1]} : vector<8x768xf32> to vector<8x256xf32>
    %109 = vector.broadcast %1 : vector<1x256xf32> to vector<8x256xf32>
    %110 = arith.addf %108, %109 : vector<8x256xf32>
    %111 = arith.mulf %105, %110 : vector<8x256xf32>
    %112 = arith.addf %107, %111 : vector<8x256xf32>
    %113 = math.tanh %112 : vector<8x256xf32>
    %cst_28 = arith.constant 1.000000e+00 : f32
    %114 = vector.broadcast %cst_28 : f32 to vector<8x256xf32>
    %115 = arith.subf %114, %106 : vector<8x256xf32>
    %116 = arith.mulf %115, %113 : vector<8x256xf32>
    %117 = arith.mulf %106, %88 : vector<8x256xf32>
    %118 = arith.addf %116, %117 : vector<8x256xf32>
    %119 = arith.index_cast %c3_i32 : i32 to index
    %c0_29 = arith.constant 0 : index
    %c0_30 = arith.constant 0 : index
    %120 = vector.load %arg4[%119, %c0_29, %c0_30] : memref<8x8x256xf32, #tpu.memory_space<vmem>>, vector<1x8x256xf32>
    %121 = vector.shape_cast %120 : vector<1x8x256xf32> to vector<8x256xf32>
    %122 = vector.shape_cast %118 : vector<8x256xf32> to vector<1x8x256xf32>
    tpu.vector_store %arg4[%119, %c0_29, %c0_30], %122 {strides = array<i32>} : memref<8x8x256xf32, #tpu.memory_space<vmem>>, vector<1x8x256xf32>,
    %c4_i32 = arith.constant 4 : i32
    %123 = arith.index_cast %c4_i32 : i32 to index
    %c0_31 = arith.constant 0 : index
    %c0_32 = arith.constant 0 : index
    %124 = vector.load %arg1[%123, %c0_31, %c0_32] : memref<8x8x768xf32, #tpu.memory_space<vmem>>, vector<1x8x768xf32>
    %125 = vector.shape_cast %124 : vector<1x8x768xf32> to vector<8x768xf32>
    %cst_33 = arith.constant dense<0.000000e+00> : vector<8x768xf32>
    %126 = tpu.matmul %118, %0, %cst_33 {dimension_numbers = #tpu.dot_dimension_numbers<[1], [0], [0], [1], [0, 0, 1, 1], [], []>} : vector<8x256xf32>, vector<256x768xf32>, vector<8x768xf32> -> vector<8x768xf32>
    %127 = vector.extract_strided_slice %125 {offsets = [0, 0], sizes = [8, 512], strides = [1, 1]} : vector<8x768xf32> to vector<8x512xf32>
    %128 = vector.extract_strided_slice %126 {offsets = [0, 0], sizes = [8, 512], strides = [1, 1]} : vector<8x768xf32> to vector<8x512xf32>
    %129 = arith.addf %127, %128 : vector<8x512xf32>
    %130 = arith.negf %129 : vector<8x512xf32>
    %131 = math.exp %130 : vector<8x512xf32>
    %cst_34 = arith.constant 1.000000e+00 : f32
    %132 = vector.broadcast %cst_34 : f32 to vector<8x512xf32>
    %133 = arith.addf %132, %131 : vector<8x512xf32>
    %134 = arith.divf %132, %133 : vector<8x512xf32>
    %135 = vector.extract_strided_slice %134 {offsets = [0, 0], sizes = [8, 256], strides = [1, 1]} : vector<8x512xf32> to vector<8x256xf32>
    %136 = vector.extract_strided_slice %134 {offsets = [0, 256], sizes = [8, 256], strides = [1, 1]} : vector<8x512xf32> to vector<8x256xf32>
    %137 = vector.extract_strided_slice %125 {offsets = [0, 512], sizes = [8, 256], strides = [1, 1]} : vector<8x768xf32> to vector<8x256xf32>
    %138 = vector.extract_strided_slice %126 {offsets = [0, 512], sizes = [8, 256], strides = [1, 1]} : vector<8x768xf32> to vector<8x256xf32>
    %139 = vector.broadcast %1 : vector<1x256xf32> to vector<8x256xf32>
    %140 = arith.addf %138, %139 : vector<8x256xf32>
    %141 = arith.mulf %135, %140 : vector<8x256xf32>
    %142 = arith.addf %137, %141 : vector<8x256xf32>
    %143 = math.tanh %142 : vector<8x256xf32>
    %cst_35 = arith.constant 1.000000e+00 : f32
    %144 = vector.broadcast %cst_35 : f32 to vector<8x256xf32>
    %145 = arith.subf %144, %136 : vector<8x256xf32>
    %146 = arith.mulf %145, %143 : vector<8x256xf32>
    %147 = arith.mulf %136, %118 : vector<8x256xf32>
    %148 = arith.addf %146, %147 : vector<8x256xf32>
    %149 = arith.index_cast %c4_i32 : i32 to index
    %c0_36 = arith.constant 0 : index
    %c0_37 = arith.constant 0 : index
    %150 = vector.load %arg4[%149, %c0_36, %c0_37] : memref<8x8x256xf32, #tpu.memory_space<vmem>>, vector<1x8x256xf32>
    %151 = vector.shape_cast %150 : vector<1x8x256xf32> to vector<8x256xf32>
    %152 = vector.shape_cast %148 : vector<8x256xf32> to vector<1x8x256xf32>
    tpu.vector_store %arg4[%149, %c0_36, %c0_37], %152 {strides = array<i32>} : memref<8x8x256xf32, #tpu.memory_space<vmem>>, vector<1x8x256xf32>,
    %c5_i32 = arith.constant 5 : i32
    %153 = arith.index_cast %c5_i32 : i32 to index
    %c0_38 = arith.constant 0 : index
    %c0_39 = arith.constant 0 : index
    %154 = vector.load %arg1[%153, %c0_38, %c0_39] : memref<8x8x768xf32, #tpu.memory_space<vmem>>, vector<1x8x768xf32>
    %155 = vector.shape_cast %154 : vector<1x8x768xf32> to vector<8x768xf32>
    %cst_40 = arith.constant dense<0.000000e+00> : vector<8x768xf32>
    %156 = tpu.matmul %148, %0, %cst_40 {dimension_numbers = #tpu.dot_dimension_numbers<[1], [0], [0], [1], [0, 0, 1, 1], [], []>} : vector<8x256xf32>, vector<256x768xf32>, vector<8x768xf32> -> vector<8x768xf32>
    %157 = vector.extract_strided_slice %155 {offsets = [0, 0], sizes = [8, 512], strides = [1, 1]} : vector<8x768xf32> to vector<8x512xf32>
    %158 = vector.extract_strided_slice %156 {offsets = [0, 0], sizes = [8, 512], strides = [1, 1]} : vector<8x768xf32> to vector<8x512xf32>
    %159 = arith.addf %157, %158 : vector<8x512xf32>
    %160 = arith.negf %159 : vector<8x512xf32>
    %161 = math.exp %160 : vector<8x512xf32>
    %cst_41 = arith.constant 1.000000e+00 : f32
    %162 = vector.broadcast %cst_41 : f32 to vector<8x512xf32>
    %163 = arith.addf %162, %161 : vector<8x512xf32>
    %164 = arith.divf %162, %163 : vector<8x512xf32>
    %165 = vector.extract_strided_slice %164 {offsets = [0, 0], sizes = [8, 256], strides = [1, 1]} : vector<8x512xf32> to vector<8x256xf32>
    %166 = vector.extract_strided_slice %164 {offsets = [0, 256], sizes = [8, 256], strides = [1, 1]} : vector<8x512xf32> to vector<8x256xf32>
    %167 = vector.extract_strided_slice %155 {offsets = [0, 512], sizes = [8, 256], strides = [1, 1]} : vector<8x768xf32> to vector<8x256xf32>
    %168 = vector.extract_strided_slice %156 {offsets = [0, 512], sizes = [8, 256], strides = [1, 1]} : vector<8x768xf32> to vector<8x256xf32>
    %169 = vector.broadcast %1 : vector<1x256xf32> to vector<8x256xf32>
    %170 = arith.addf %168, %169 : vector<8x256xf32>
    %171 = arith.mulf %165, %170 : vector<8x256xf32>
    %172 = arith.addf %167, %171 : vector<8x256xf32>
    %173 = math.tanh %172 : vector<8x256xf32>
    %cst_42 = arith.constant 1.000000e+00 : f32
    %174 = vector.broadcast %cst_42 : f32 to vector<8x256xf32>
    %175 = arith.subf %174, %166 : vector<8x256xf32>
    %176 = arith.mulf %175, %173 : vector<8x256xf32>
    %177 = arith.mulf %166, %148 : vector<8x256xf32>
    %178 = arith.addf %176, %177 : vector<8x256xf32>
    %179 = arith.index_cast %c5_i32 : i32 to index
    %c0_43 = arith.constant 0 : index
    %c0_44 = arith.constant 0 : index
    %180 = vector.load %arg4[%179, %c0_43, %c0_44] : memref<8x8x256xf32, #tpu.memory_space<vmem>>, vector<1x8x256xf32>
    %181 = vector.shape_cast %180 : vector<1x8x256xf32> to vector<8x256xf32>
    %182 = vector.shape_cast %178 : vector<8x256xf32> to vector<1x8x256xf32>
    tpu.vector_store %arg4[%179, %c0_43, %c0_44], %182 {strides = array<i32>} : memref<8x8x256xf32, #tpu.memory_space<vmem>>, vector<1x8x256xf32>,
    %c6_i32 = arith.constant 6 : i32
    %183 = arith.index_cast %c6_i32 : i32 to index
    %c0_45 = arith.constant 0 : index
    %c0_46 = arith.constant 0 : index
    %184 = vector.load %arg1[%183, %c0_45, %c0_46] : memref<8x8x768xf32, #tpu.memory_space<vmem>>, vector<1x8x768xf32>
    %185 = vector.shape_cast %184 : vector<1x8x768xf32> to vector<8x768xf32>
    %cst_47 = arith.constant dense<0.000000e+00> : vector<8x768xf32>
    %186 = tpu.matmul %178, %0, %cst_47 {dimension_numbers = #tpu.dot_dimension_numbers<[1], [0], [0], [1], [0, 0, 1, 1], [], []>} : vector<8x256xf32>, vector<256x768xf32>, vector<8x768xf32> -> vector<8x768xf32>
    %187 = vector.extract_strided_slice %185 {offsets = [0, 0], sizes = [8, 512], strides = [1, 1]} : vector<8x768xf32> to vector<8x512xf32>
    %188 = vector.extract_strided_slice %186 {offsets = [0, 0], sizes = [8, 512], strides = [1, 1]} : vector<8x768xf32> to vector<8x512xf32>
    %189 = arith.addf %187, %188 : vector<8x512xf32>
    %190 = arith.negf %189 : vector<8x512xf32>
    %191 = math.exp %190 : vector<8x512xf32>
    %cst_48 = arith.constant 1.000000e+00 : f32
    %192 = vector.broadcast %cst_48 : f32 to vector<8x512xf32>
    %193 = arith.addf %192, %191 : vector<8x512xf32>
    %194 = arith.divf %192, %193 : vector<8x512xf32>
    %195 = vector.extract_strided_slice %194 {offsets = [0, 0], sizes = [8, 256], strides = [1, 1]} : vector<8x512xf32> to vector<8x256xf32>
    %196 = vector.extract_strided_slice %194 {offsets = [0, 256], sizes = [8, 256], strides = [1, 1]} : vector<8x512xf32> to vector<8x256xf32>
    %197 = vector.extract_strided_slice %185 {offsets = [0, 512], sizes = [8, 256], strides = [1, 1]} : vector<8x768xf32> to vector<8x256xf32>
    %198 = vector.extract_strided_slice %186 {offsets = [0, 512], sizes = [8, 256], strides = [1, 1]} : vector<8x768xf32> to vector<8x256xf32>
    %199 = vector.broadcast %1 : vector<1x256xf32> to vector<8x256xf32>
    %200 = arith.addf %198, %199 : vector<8x256xf32>
    %201 = arith.mulf %195, %200 : vector<8x256xf32>
    %202 = arith.addf %197, %201 : vector<8x256xf32>
    %203 = math.tanh %202 : vector<8x256xf32>
    %cst_49 = arith.constant 1.000000e+00 : f32
    %204 = vector.broadcast %cst_49 : f32 to vector<8x256xf32>
    %205 = arith.subf %204, %196 : vector<8x256xf32>
    %206 = arith.mulf %205, %203 : vector<8x256xf32>
    %207 = arith.mulf %196, %178 : vector<8x256xf32>
    %208 = arith.addf %206, %207 : vector<8x256xf32>
    %209 = arith.index_cast %c6_i32 : i32 to index
    %c0_50 = arith.constant 0 : index
    %c0_51 = arith.constant 0 : index
    %210 = vector.load %arg4[%209, %c0_50, %c0_51] : memref<8x8x256xf32, #tpu.memory_space<vmem>>, vector<1x8x256xf32>
    %211 = vector.shape_cast %210 : vector<1x8x256xf32> to vector<8x256xf32>
    %212 = vector.shape_cast %208 : vector<8x256xf32> to vector<1x8x256xf32>
    tpu.vector_store %arg4[%209, %c0_50, %c0_51], %212 {strides = array<i32>} : memref<8x8x256xf32, #tpu.memory_space<vmem>>, vector<1x8x256xf32>,
    %c7_i32 = arith.constant 7 : i32
    %213 = arith.index_cast %c7_i32 : i32 to index
    %c0_52 = arith.constant 0 : index
    %c0_53 = arith.constant 0 : index
    %214 = vector.load %arg1[%213, %c0_52, %c0_53] : memref<8x8x768xf32, #tpu.memory_space<vmem>>, vector<1x8x768xf32>
    %215 = vector.shape_cast %214 : vector<1x8x768xf32> to vector<8x768xf32>
    %cst_54 = arith.constant dense<0.000000e+00> : vector<8x768xf32>
    %216 = tpu.matmul %208, %0, %cst_54 {dimension_numbers = #tpu.dot_dimension_numbers<[1], [0], [0], [1], [0, 0, 1, 1], [], []>} : vector<8x256xf32>, vector<256x768xf32>, vector<8x768xf32> -> vector<8x768xf32>
    %217 = vector.extract_strided_slice %215 {offsets = [0, 0], sizes = [8, 512], strides = [1, 1]} : vector<8x768xf32> to vector<8x512xf32>
    %218 = vector.extract_strided_slice %216 {offsets = [0, 0], sizes = [8, 512], strides = [1, 1]} : vector<8x768xf32> to vector<8x512xf32>
    %219 = arith.addf %217, %218 : vector<8x512xf32>
    %220 = arith.negf %219 : vector<8x512xf32>
    %221 = math.exp %220 : vector<8x512xf32>
    %cst_55 = arith.constant 1.000000e+00 : f32
    %222 = vector.broadcast %cst_55 : f32 to vector<8x512xf32>
    %223 = arith.addf %222, %221 : vector<8x512xf32>
    %224 = arith.divf %222, %223 : vector<8x512xf32>
    %225 = vector.extract_strided_slice %224 {offsets = [0, 0], sizes = [8, 256], strides = [1, 1]} : vector<8x512xf32> to vector<8x256xf32>
    %226 = vector.extract_strided_slice %224 {offsets = [0, 256], sizes = [8, 256], strides = [1, 1]} : vector<8x512xf32> to vector<8x256xf32>
    %227 = vector.extract_strided_slice %215 {offsets = [0, 512], sizes = [8, 256], strides = [1, 1]} : vector<8x768xf32> to vector<8x256xf32>
    %228 = vector.extract_strided_slice %216 {offsets = [0, 512], sizes = [8, 256], strides = [1, 1]} : vector<8x768xf32> to vector<8x256xf32>
    %229 = vector.broadcast %1 : vector<1x256xf32> to vector<8x256xf32>
    %230 = arith.addf %228, %229 : vector<8x256xf32>
    %231 = arith.mulf %225, %230 : vector<8x256xf32>
    %232 = arith.addf %227, %231 : vector<8x256xf32>
    %233 = math.tanh %232 : vector<8x256xf32>
    %cst_56 = arith.constant 1.000000e+00 : f32
    %234 = vector.broadcast %cst_56 : f32 to vector<8x256xf32>
    %235 = arith.subf %234, %226 : vector<8x256xf32>
    %236 = arith.mulf %235, %233 : vector<8x256xf32>
    %237 = arith.mulf %226, %208 : vector<8x256xf32>
    %238 = arith.addf %236, %237 : vector<8x256xf32>
    %239 = arith.index_cast %c7_i32 : i32 to index
    %c0_57 = arith.constant 0 : index
    %c0_58 = arith.constant 0 : index
    %240 = vector.load %arg4[%239, %c0_57, %c0_58] : memref<8x8x256xf32, #tpu.memory_space<vmem>>, vector<1x8x256xf32>
    %241 = vector.shape_cast %240 : vector<1x8x256xf32> to vector<8x256xf32>
    %242 = vector.shape_cast %238 : vector<8x256xf32> to vector<1x8x256xf32>
    tpu.vector_store %arg4[%239, %c0_57, %c0_58], %242 {strides = array<i32>} : memref<8x8x256xf32, #tpu.memory_space<vmem>>, vector<1x8x256xf32>,
    %c8_i32 = arith.constant 8 : i32
    return
  }
  func.func @transform_0(%arg0: i32) -> (i32, i32, i32) {
    %c0_i32 = arith.constant 0 : i32
    %c0_i32_0 = arith.constant 0 : i32
    %c0_i32_1 = arith.constant 0 : i32
    %c0_i32_2 = arith.constant 0 : i32
    return %c0_i32, %c0_i32_0, %c0_i32_1 : i32, i32, i32
  }
  func.func @transform_1(%arg0: i32) -> (i32, i32) {
    %c0_i32 = arith.constant 0 : i32
    %c0_i32_0 = arith.constant 0 : i32
    %c0_i32_1 = arith.constant 0 : i32
    return %c0_i32, %c0_i32_0 : i32, i32
  }
  func.func @transform_2(%arg0: i32) -> (i32, i32) {
    %c0_i32 = arith.constant 0 : i32
    %c0_i32_0 = arith.constant 0 : i32
    %c0_i32_1 = arith.constant 0 : i32
    return %c0_i32, %c0_i32_0 : i32, i32
  }
  func.func @transform_3(%arg0: i32) -> (i32, i32, i32) {
    %c0_i32 = arith.constant 0 : i32
    %c0_i32_0 = arith.constant 0 : i32
    %c0_i32_1 = arith.constant 0 : i32
    %c0_i32_2 = arith.constant 0 : i32
    return %c0_i32, %c0_i32_0, %c0_i32_1 : i32, i32, i32
  }
}

module attributes {stable_mosaic.version = 11 : i64} {
  func.func @_attn_mlp_kernel(%arg0: i32, %arg1: memref<4x8x128xf32, #tpu.memory_space<vmem>>, %arg2: memref<1x128xf32, #tpu.memory_space<vmem>>, %arg3: memref<1x128xf32, #tpu.memory_space<vmem>>, %arg4: memref<128x128xf32, #tpu.memory_space<vmem>>, %arg5: memref<1x128xf32, #tpu.memory_space<vmem>>, %arg6: memref<4x8x8xf32, #tpu.memory_space<vmem>>, %arg7: memref<4x1x1xf32, #tpu.memory_space<vmem>>) attributes {dimension_semantics = [#tpu.dimension_semantics<parallel>], iteration_bounds = array<i64: 2>, scalar_prefetch = 0 : i64, scratch_operands = 0 : i64, tpu.core_type = #tpu.core_type<tc>, window_params = [{transform_indices = @transform_0, window_bounds = array<i64: 4, 8, 128>}, {pipeline_mode = #tpu.pipeline_mode<synchronous>, transform_indices = @transform_1, window_bounds = array<i64: 1, 128>}, {pipeline_mode = #tpu.pipeline_mode<synchronous>, transform_indices = @transform_2, window_bounds = array<i64: 1, 128>}, {pipeline_mode = #tpu.pipeline_mode<synchronous>, transform_indices = @transform_3, window_bounds = array<i64: 128, 128>}, {pipeline_mode = #tpu.pipeline_mode<synchronous>, transform_indices = @transform_4, window_bounds = array<i64: 1, 128>}, {transform_indices = @transform_5, window_bounds = array<i64: 4, 8, 8>}, {transform_indices = @transform_6, window_bounds = array<i64: 4, 1, 1>}]} {
    %c0 = arith.constant 0 : index
    %c0_0 = arith.constant 0 : index
    %c0_1 = arith.constant 0 : index
    %0 = vector.load %arg1[%c0, %c0_0, %c0_1] : memref<4x8x128xf32, #tpu.memory_space<vmem>>, vector<4x8x128xf32>
    %1 = arith.truncf %0 : vector<4x8x128xf32> to vector<4x8x128xbf16>
    "tpu.trace_start"() <{level = 10 : i32, message = "bid,bjd->bij"}> : () -> ()
    %cst = arith.constant dense<0.000000e+00> : vector<4x8x8xf32>
    %2 = tpu.matmul %1, %1, %cst {dimension_numbers = #tpu.dot_dimension_numbers<[2], [2], [1], [1], [0, 0, 0, 1, 1, 1], [0], [0]>} : vector<4x8x128xbf16>, vector<4x8x128xbf16>, vector<4x8x8xf32> -> vector<4x8x8xf32>
    "tpu.trace_stop"() : () -> ()
    %cst_2 = arith.constant dense<0xFF800000> : vector<4x8xf32>
    %3 = vector.multi_reduction <maximumf>, %2, %cst_2 [1] : vector<4x8x8xf32> to vector<4x8xf32>
    %4 = vector.shape_cast %3 : vector<4x8xf32> to vector<4x1x8xf32>
    %5 = vector.broadcast %4 : vector<4x1x8xf32> to vector<4x8x8xf32>
    %6 = arith.subf %2, %5 : vector<4x8x8xf32>
    %7 = math.exp %6 : vector<4x8x8xf32>
    %cst_3 = arith.constant dense<0.000000e+00> : vector<4x8xf32>
    %8 = vector.multi_reduction <add>, %7, %cst_3 [1] : vector<4x8x8xf32> to vector<4x8xf32>
    %9 = vector.shape_cast %8 : vector<4x8xf32> to vector<4x1x8xf32>
    %10 = tpu.reciprocal %9 {approx = true} : vector<4x1x8xf32> -> vector<4x1x8xf32>
    %11 = vector.broadcast %10 : vector<4x1x8xf32> to vector<4x8x8xf32>
    %12 = arith.mulf %7, %11 : vector<4x8x8xf32>
    %c0_4 = arith.constant 0 : index
    %c0_5 = arith.constant 0 : index
    %c0_6 = arith.constant 0 : index
    %13 = vector.load %arg6[%c0_4, %c0_5, %c0_6] : memref<4x8x8xf32, #tpu.memory_space<vmem>>, vector<4x8x8xf32>
    tpu.vector_store %arg6[%c0_4, %c0_5, %c0_6], %12 {strides = array<i32>} : memref<4x8x8xf32, #tpu.memory_space<vmem>>, vector<4x8x8xf32>,
    %14 = arith.truncf %12 : vector<4x8x8xf32> to vector<4x8x8xbf16>
    "tpu.trace_start"() <{level = 10 : i32, message = "bij,bjd->bid"}> : () -> ()
    %cst_7 = arith.constant dense<0.000000e+00> : vector<4x8x128xf32>
    %15 = tpu.matmul %14, %1, %cst_7 {dimension_numbers = #tpu.dot_dimension_numbers<[2], [1], [1], [2], [0, 0, 0, 1, 1, 2], [0], [0]>} : vector<4x8x8xbf16>, vector<4x8x128xbf16>, vector<4x8x128xf32> -> vector<4x8x128xf32>
    "tpu.trace_stop"() : () -> ()
    %cst_8 = arith.constant dense<0.000000e+00> : vector<4x8xf32>
    %16 = vector.multi_reduction <add>, %15, %cst_8 [2] : vector<4x8x128xf32> to vector<4x8xf32>
    %17 = vector.shape_cast %16 : vector<4x8xf32> to vector<4x8x1xf32>
    %18 = arith.mulf %15, %15 : vector<4x8x128xf32>
    %cst_9 = arith.constant dense<0.000000e+00> : vector<4x8xf32>
    %19 = vector.multi_reduction <add>, %18, %cst_9 [2] : vector<4x8x128xf32> to vector<4x8xf32>
    %20 = vector.shape_cast %19 : vector<4x8xf32> to vector<4x8x1xf32>
    %cst_10 = arith.constant 1.000000e+02 : f32
    %21 = vector.broadcast %cst_10 : f32 to vector<4x8x1xf32>
    %22 = arith.divf %17, %21 : vector<4x8x1xf32>
    %cst_11 = arith.constant 1.000000e+02 : f32
    %23 = vector.broadcast %cst_11 : f32 to vector<4x8x1xf32>
    %24 = arith.divf %20, %23 : vector<4x8x1xf32>
    %25 = arith.mulf %22, %22 : vector<4x8x1xf32>
    %26 = arith.subf %24, %25 : vector<4x8x1xf32>
    %27 = vector.broadcast %22 : vector<4x8x1xf32> to vector<4x8x128xf32>
    %28 = arith.subf %15, %27 : vector<4x8x128xf32>
    %cst_12 = arith.constant 9.99999974E-6 : f32
    %29 = vector.broadcast %cst_12 : f32 to vector<4x8x1xf32>
    %30 = arith.addf %26, %29 : vector<4x8x1xf32>
    %31 = math.rsqrt %30 : vector<4x8x1xf32>
    %32 = vector.broadcast %31 : vector<4x8x1xf32> to vector<4x8x128xf32>
    %33 = arith.mulf %28, %32 : vector<4x8x128xf32>
    %c0_13 = arith.constant 0 : index
    %c0_14 = arith.constant 0 : index
    %34 = vector.load %arg2[%c0_13, %c0_14] : memref<1x128xf32, #tpu.memory_space<vmem>>, vector<1x128xf32>
    %35 = vector.shape_cast %34 : vector<1x128xf32> to vector<1x1x128xf32>
    %36 = vector.broadcast %35 : vector<1x1x128xf32> to vector<4x8x128xf32>
    %37 = arith.mulf %33, %36 : vector<4x8x128xf32>
    %c0_15 = arith.constant 0 : index
    %c0_16 = arith.constant 0 : index
    %38 = vector.load %arg3[%c0_15, %c0_16] : memref<1x128xf32, #tpu.memory_space<vmem>>, vector<1x128xf32>
    %39 = vector.shape_cast %38 : vector<1x128xf32> to vector<1x1x128xf32>
    %40 = vector.broadcast %39 : vector<1x1x128xf32> to vector<4x8x128xf32>
    %41 = arith.addf %37, %40 : vector<4x8x128xf32>
    %42 = vector.shape_cast %41 : vector<4x8x128xf32> to vector<32x128xf32>
    %c0_17 = arith.constant 0 : index
    %c0_18 = arith.constant 0 : index
    %43 = vector.load %arg4[%c0_17, %c0_18] : memref<128x128xf32, #tpu.memory_space<vmem>>, vector<128x128xf32>
    %44 = arith.truncf %43 : vector<128x128xf32> to vector<128x128xbf16>
    %c0_19 = arith.constant 0 : index
    %c0_20 = arith.constant 0 : index
    %45 = vector.load %arg5[%c0_19, %c0_20] : memref<1x128xf32, #tpu.memory_space<vmem>>, vector<1x128xf32>
    %46 = arith.truncf %42 : vector<32x128xf32> to vector<32x128xbf16>
    %cst_21 = arith.constant dense<0.000000e+00> : vector<32x128xf32>
    %47 = tpu.matmul %46, %44, %cst_21 {dimension_numbers = #tpu.dot_dimension_numbers<[1], [0], [0], [1], [0, 0, 1, 1], [], []>} : vector<32x128xbf16>, vector<128x128xbf16>, vector<32x128xf32> -> vector<32x128xf32>
    %48 = vector.broadcast %45 : vector<1x128xf32> to vector<32x128xf32>
    %49 = arith.addf %47, %48 : vector<32x128xf32>
    %cst_22 = arith.constant 0.000000e+00 : f32
    %50 = vector.broadcast %cst_22 : f32 to vector<32x128xf32>
    %51 = arith.maximumf %49, %50 : vector<32x128xf32>
    %52 = arith.truncf %51 : vector<32x128xf32> to vector<32x128xbf16>
    %cst_23 = arith.constant dense<0.000000e+00> : vector<32x128xf32>
    %53 = tpu.matmul %52, %44, %cst_23 {dimension_numbers = #tpu.dot_dimension_numbers<[1], [0], [0], [1], [0, 0, 1, 1], [], []>} : vector<32x128xbf16>, vector<128x128xbf16>, vector<32x128xf32> -> vector<32x128xf32>
    %54 = vector.broadcast %45 : vector<1x128xf32> to vector<32x128xf32>
    %55 = arith.addf %53, %54 : vector<32x128xf32>
    %cst_24 = arith.constant 0.000000e+00 : f32
    %56 = vector.broadcast %cst_24 : f32 to vector<32x128xf32>
    %57 = arith.maximumf %55, %56 : vector<32x128xf32>
    %58 = arith.truncf %57 : vector<32x128xf32> to vector<32x128xbf16>
    %cst_25 = arith.constant dense<0.000000e+00> : vector<32x128xf32>
    %59 = tpu.matmul %58, %44, %cst_25 {dimension_numbers = #tpu.dot_dimension_numbers<[1], [0], [0], [1], [0, 0, 1, 1], [], []>} : vector<32x128xbf16>, vector<128x128xbf16>, vector<32x128xf32> -> vector<32x128xf32>
    %60 = vector.broadcast %45 : vector<1x128xf32> to vector<32x128xf32>
    %61 = arith.addf %59, %60 : vector<32x128xf32>
    %cst_26 = arith.constant 0.000000e+00 : f32
    %62 = vector.broadcast %cst_26 : f32 to vector<32x128xf32>
    %63 = arith.maximumf %61, %62 : vector<32x128xf32>
    %64 = arith.addf %63, %42 : vector<32x128xf32>
    %65 = vector.shape_cast %64 : vector<32x128xf32> to vector<4x8x128xf32>
    %cst_27 = arith.constant dense<0xFF800000> : vector<4x8xf32>
    %66 = vector.multi_reduction <maximumf>, %65, %cst_27 [2] : vector<4x8x128xf32> to vector<4x8xf32>
    %67 = vector.shape_cast %66 : vector<4x8xf32> to vector<4x8x1xf32>
    %cst_28 = arith.constant dense<0xFF800000> : vector<4x1xf32>
    %68 = vector.multi_reduction <maximumf>, %67, %cst_28 [1] : vector<4x8x1xf32> to vector<4x1xf32>
    %69 = vector.shape_cast %68 : vector<4x1xf32> to vector<4x1x1xf32>
    %cst_29 = arith.constant 0.000000e+00 : f32
    %70 = vector.broadcast %cst_29 : f32 to vector<4x1x1xf32>
    %71 = arith.maximumf %69, %70 : vector<4x1x1xf32>
    %c0_30 = arith.constant 0 : index
    %c0_31 = arith.constant 0 : index
    %c0_32 = arith.constant 0 : index
    %72 = vector.load %arg7[%c0_30, %c0_31, %c0_32] : memref<4x1x1xf32, #tpu.memory_space<vmem>>, vector<4x1x1xf32>
    tpu.vector_store %arg7[%c0_30, %c0_31, %c0_32], %71 {strides = array<i32>} : memref<4x1x1xf32, #tpu.memory_space<vmem>>, vector<4x1x1xf32>,
    return
  }
  func.func @transform_0(%arg0: i32) -> (i32, i32, i32) {
    %c0_i32 = arith.constant 0 : i32
    %c0_i32_0 = arith.constant 0 : i32
    %c0_i32_1 = arith.constant 0 : i32
    return %arg0, %c0_i32, %c0_i32_0 : i32, i32, i32
  }
  func.func @transform_1(%arg0: i32) -> (i32, i32) {
    %c0_i32 = arith.constant 0 : i32
    %c0_i32_0 = arith.constant 0 : i32
    %c0_i32_1 = arith.constant 0 : i32
    return %c0_i32, %c0_i32_0 : i32, i32
  }
  func.func @transform_2(%arg0: i32) -> (i32, i32) {
    %c0_i32 = arith.constant 0 : i32
    %c0_i32_0 = arith.constant 0 : i32
    %c0_i32_1 = arith.constant 0 : i32
    return %c0_i32, %c0_i32_0 : i32, i32
  }
  func.func @transform_3(%arg0: i32) -> (i32, i32) {
    %c0_i32 = arith.constant 0 : i32
    %c0_i32_0 = arith.constant 0 : i32
    %c0_i32_1 = arith.constant 0 : i32
    return %c0_i32, %c0_i32_0 : i32, i32
  }
  func.func @transform_4(%arg0: i32) -> (i32, i32) {
    %c0_i32 = arith.constant 0 : i32
    %c0_i32_0 = arith.constant 0 : i32
    %c0_i32_1 = arith.constant 0 : i32
    return %c0_i32, %c0_i32_0 : i32, i32
  }
  func.func @transform_5(%arg0: i32) -> (i32, i32, i32) {
    %c0_i32 = arith.constant 0 : i32
    %c0_i32_0 = arith.constant 0 : i32
    %c0_i32_1 = arith.constant 0 : i32
    return %arg0, %c0_i32, %c0_i32_0 : i32, i32, i32
  }
  func.func @transform_6(%arg0: i32) -> (i32, i32, i32) {
    %c0_i32 = arith.constant 0 : i32
    %c0_i32_0 = arith.constant 0 : i32
    %c0_i32_1 = arith.constant 0 : i32
    return %arg0, %c0_i32, %c0_i32_0 : i32, i32, i32
  }
}

</mosaic_0001>

<llo_original>
// kernel: transformer_forward.3
$region0: #{transformer_forward.3}
  #allocation0 [shape = 'u32[]', space=smem, size = 0x4, offset = 0x4, fixed_abs, tag = 'smem constant byte address 0x4 - core index']
  #allocation1 [shape = 'u32[72,128]{1,0:T(1,128)}', space=vmem, size = 0x9000, scoped, tag = 'internal scratch']
  %s0 = inlined_call_operand.vmem [shape: f32[8,8,128], index: 0, kind: input, shape index: {}]
  %s1 = inlined_call_operand.vmem [shape: f32[1,128], index: 1, kind: input, shape index: {}]
  %s2 = inlined_call_operand.vmem [shape: f32[1,128], index: 2, kind: input, shape index: {}]
  %s3 = inlined_call_operand.vmem [shape: f32[128,128], index: 3, kind: input, shape index: {}]
  %s4 = inlined_call_operand.vmem [shape: f32[1,128], index: 4, kind: input, shape index: {}]
  %s5 = inlined_call_operand.vmem [shape: f32[8,8,8], index: 5, kind: output, shape index: {0}]
  %s6 = inlined_call_operand.vmem [shape: f32[8,1,1], index: 6, kind: output, shape index: {1}]
  %7 = xla_tuple %s5, %s6
  %s8 = sld [smem:[#allocation0]]
  $region61: #{transformer_forward.3} parent=0
    _
  %s10 = ssub.s32 1, %s8
  %s11 = scalar_select 0, %s10, %s8
  loop: start=0, step=1, limit=4
  $region2: #{transformer_forward.3} parent=0 // loop_pre_header
    _
  $region3: #{transformer_forward.3} parent=0 // loop_header
    %s13 = sphi 0, %s17
    %p14 = scmp.ge.s32.totalorder %s13, 4
    %s23 = sphi 0, %s25
    %s26 = sphi 0, %s23
    %s27 = sphi 0, %s26
    %s43 = sphi 0, %s27
    %s47 = sphi 0, %s47
    %s49 = sphi 0, %s47
    %s50 = sphi 0, %s49
    %s64 = sphi 0, %s50
    %s68 = sphi 0, %s68
    %s70 = sphi 0, %s68
    %s71 = sphi 0, %s70
    %s85 = sphi 0, %s71
    %s89 = sphi 0, %s89
    %s91 = sphi 0, %s89
    %s92 = sphi 0, %s91
    %s106 = sphi 0, %s92
    %s110 = sphi 0, %s110
    %s112 = sphi 0, %s110
    %s113 = sphi 0, %s112
    %s127 = sphi 0, %s113
    %s133 = sphi 0, %s135
    %s136 = sphi 0, %s133
    %s137 = sphi 0, %s136
    %s153 = sphi 0, %s137
    %s159 = sphi 0, %s161
    %s162 = sphi 0, %s159
    %s163 = sphi 0, %s162
    %s179 = sphi 0, %s163
  $region4: #{transformer_forward.3} parent=0 // loop_header_branch
    %16 = sbr.rel (%p14) target = $region8
  $region5: #{transformer_forward.3} parent=0 // loop_body
    %s18 = ssub.s32 %s13, 1
    %s19 = ssub.s32 %s13, 2
    %s20 = sadd.s32 %s13, 1
    %s21 = ssub.s32 %s13, %s20
    %p22 = scmp.eq.s32.totalorder %s21, 0
    %s24 = sadd.s32 %s23, 1
    %s25 = scalar_select %p22, %s23, %s24
    %p28 = pneg %p22
    %p29 = scmp.eq.s32.totalorder %s13, 1
    %p30 = por %p28, %p29
    %p31 = scmp.ne.s32.totalorder %s23, %s26
    %p32 = scmp.eq.s32.totalorder %s13, 0
    %p33 = por %p31, %p32
    %p34 = scmp.ne.s32.totalorder %s23, %s26
    %p35 = scmp.eq.s32.totalorder %s18, 1
    %p36 = por %p34, %p35
    %p37 = scmp.ne.s32.totalorder %s26, %s27
    %p38 = scmp.eq.s32.totalorder %s18, 0
    %p39 = por %p37, %p38
    %p40 = scmp.ne.s32.totalorder %s26, %s27
    %p41 = scmp.eq.s32.totalorder %s19, 1
    %p42 = por %p40, %p41
    %p44 = scmp.ne.s32.totalorder %s27, %s43
    %p45 = scmp.eq.s32.totalorder %s19, 0
    %p46 = por %p44, %p45
    %s48 = sadd.s32 %s47, 1
    %p51 = scmp.eq.s32.totalorder %s13, 1
    %p52 = scmp.ne.s32.totalorder %s47, %s49
    %p53 = scmp.eq.s32.totalorder %s13, 0
    %p54 = por %p52, %p53
    %p55 = scmp.ne.s32.totalorder %s47, %s49
    %p56 = scmp.eq.s32.totalorder %s18, 1
    %p57 = por %p55, %p56
    %p58 = scmp.ne.s32.totalorder %s49, %s50
    %p59 = scmp.eq.s32.totalorder %s18, 0
    %p60 = por %p58, %p59
    %p61 = scmp.ne.s32.totalorder %s49, %s50
    %p62 = scmp.eq.s32.totalorder %s19, 1
    %p63 = por %p61, %p62
    %p65 = scmp.ne.s32.totalorder %s50, %s64
    %p66 = scmp.eq.s32.totalorder %s19, 0
    %p67 = por %p65, %p66
    %s69 = sadd.s32 %s68, 1
    %p72 = scmp.eq.s32.totalorder %s13, 1
    %p73 = scmp.ne.s32.totalorder %s68, %s70
    %p74 = scmp.eq.s32.totalorder %s13, 0
    %p75 = por %p73, %p74
    %p76 = scmp.ne.s32.totalorder %s68, %s70
    %p77 = scmp.eq.s32.totalorder %s18, 1
    %p78 = por %p76, %p77
    %p79 = scmp.ne.s32.totalorder %s70, %s71
    %p80 = scmp.eq.s32.totalorder %s18, 0
    %p81 = por %p79, %p80
    %p82 = scmp.ne.s32.totalorder %s70, %s71
    %p83 = scmp.eq.s32.totalorder %s19, 1
    %p84 = por %p82, %p83
    %p86 = scmp.ne.s32.totalorder %s71, %s85
    %p87 = scmp.eq.s32.totalorder %s19, 0
    %p88 = por %p86, %p87
    %s90 = sadd.s32 %s89, 1
    %p93 = scmp.eq.s32.totalorder %s13, 1
    %p94 = scmp.ne.s32.totalorder %s89, %s91
    %p95 = scmp.eq.s32.totalorder %s13, 0
    %p96 = por %p94, %p95
    %p97 = scmp.ne.s32.totalorder %s89, %s91
    %p98 = scmp.eq.s32.totalorder %s18, 1
    %p99 = por %p97, %p98
    %p100 = scmp.ne.s32.totalorder %s91, %s92
    %p101 = scmp.eq.s32.totalorder %s18, 0
    %p102 = por %p100, %p101
    %p103 = scmp.ne.s32.totalorder %s91, %s92
    %p104 = scmp.eq.s32.totalorder %s19, 1
    %p105 = por %p103, %p104
    %p107 = scmp.ne.s32.totalorder %s92, %s106
    %p108 = scmp.eq.s32.totalorder %s19, 0
    %p109 = por %p107, %p108
    %s111 = sadd.s32 %s110, 1
    %p114 = scmp.eq.s32.totalorder %s13, 1
    %p115 = scmp.ne.s32.totalorder %s110, %s112
    %p116 = scmp.eq.s32.totalorder %s13, 0
    %p117 = por %p115, %p116
    %p118 = scmp.ne.s32.totalorder %s110, %s112
    %p119 = scmp.eq.s32.totalorder %s18, 1
    %p120 = por %p118, %p119
    %p121 = scmp.ne.s32.totalorder %s112, %s113
    %p122 = scmp.eq.s32.totalorder %s18, 0
    %p123 = por %p121, %p122
    %p124 = scmp.ne.s32.totalorder %s112, %s113
    %p125 = scmp.eq.s32.totalorder %s19, 1
    %p126 = por %p124, %p125
    %p128 = scmp.ne.s32.totalorder %s113, %s127
    %p129 = scmp.eq.s32.totalorder %s19, 0
    %p130 = por %p128, %p129
    %s131 = ssub.s32 %s13, %s20
    %p132 = scmp.eq.s32.totalorder %s131, 0
    %s134 = sadd.s32 %s133, 1
    %s135 = scalar_select %p132, %s133, %s134
    %p138 = pneg %p132
    %p139 = scmp.eq.s32.totalorder %s13, 1
    %p140 = por %p138, %p139
    %p141 = scmp.ne.s32.totalorder %s133, %s136
    %p142 = scmp.eq.s32.totalorder %s13, 0
    %p143 = por %p141, %p142
    %p144 = scmp.ne.s32.totalorder %s133, %s136
    %p145 = scmp.eq.s32.totalorder %s18, 1
    %p146 = por %p144, %p145
    %p147 = scmp.ne.s32.totalorder %s136, %s137
    %p148 = scmp.eq.s32.totalorder %s18, 0
    %p149 = por %p147, %p148
    %p150 = scmp.ne.s32.totalorder %s136, %s137
    %p151 = scmp.eq.s32.totalorder %s19, 1
    %p152 = por %p150, %p151
    %p154 = scmp.ne.s32.totalorder %s137, %s153
    %p155 = scmp.eq.s32.totalorder %s19, 0
    %p156 = por %p154, %p155
    %s157 = ssub.s32 %s13, %s20
    %p158 = scmp.eq.s32.totalorder %s157, 0
    %s160 = sadd.s32 %s159, 1
    %s161 = scalar_select %p158, %s159, %s160
    %p164 = pneg %p158
    %p165 = scmp.eq.s32.totalorder %s13, 1
    %p166 = por %p164, %p165
    %p167 = scmp.ne.s32.totalorder %s159, %s162
    %p168 = scmp.eq.s32.totalorder %s13, 0
    %p169 = por %p167, %p168
    %p170 = scmp.ne.s32.totalorder %s159, %s162
    %p171 = scmp.eq.s32.totalorder %s18, 1
    %p172 = por %p170, %p171
    %p173 = scmp.ne.s32.totalorder %s162, %s163
    %p174 = scmp.eq.s32.totalorder %s18, 0
    %p175 = por %p173, %p174
    %p176 = scmp.ne.s32.totalorder %s162, %s163
    %p177 = scmp.eq.s32.totalorder %s19, 1
    %p178 = por %p176, %p177
    %p180 = scmp.ne.s32.totalorder %s163, %s179
    %p181 = scmp.eq.s32.totalorder %s19, 0
    %p182 = por %p180, %p181
    %p183 = scmp.le.s32.totalorder 1, %s13
    %p184 = scmp.lt.s32.totalorder %s13, 3
    %p185 = pnand %p183, %p184
    %p186 = pneg %p185
    // Predicated region
    $region9: #{transformer_forward.3} parent=5 // pred_check
      _
    $region10: #{transformer_forward.3} parent=5 // pred_check_branch
      %188 = sbr.rel (%p185) target = $region12
    $region11: #{transformer_forward.3} parent=5 // pred_region
      %s189 = ssub.s32 %s13, 1
      // Predicated region
      $region13: #{transformer_forward.3} parent=11 // pred_check
        %p190 = pneg %p60
      $region14: #{transformer_forward.3} parent=11 // pred_check_branch
        %192 = sbr.rel (%p190) target = $region16
      $region15: #{transformer_forward.3} parent=11 // pred_region
        _
      $region16: #{transformer_forward.3} parent=11 // pred_fallthru
        _
      // Predicated region
      $region17: #{transformer_forward.3} parent=11 // pred_check
        %p193 = pneg %p81
      $region18: #{transformer_forward.3} parent=11 // pred_check_branch
        %195 = sbr.rel (%p193) target = $region20
      $region19: #{transformer_forward.3} parent=11 // pred_region
        _
      $region20: #{transformer_forward.3} parent=11 // pred_fallthru
        _
      // Predicated region
      $region21: #{transformer_forward.3} parent=11 // pred_check
        %p196 = pneg %p102
      $region22: #{transformer_forward.3} parent=11 // pred_check_branch
        %198 = sbr.rel (%p196) target = $region24
      $region23: #{transformer_forward.3} parent=11 // pred_region
        _
      $region24: #{transformer_forward.3} parent=11 // pred_fallthru
        _
      // Predicated region
      $region25: #{transformer_forward.3} parent=11 // pred_check
        %p199 = pneg %p123
      $region26: #{transformer_forward.3} parent=11 // pred_check_branch
        %201 = sbr.rel (%p199) target = $region28
      $region27: #{transformer_forward.3} parent=11 // pred_region
        _
      $region28: #{transformer_forward.3} parent=11 // pred_fallthru
        _
    $region12: #{transformer_forward.3} parent=5 // pred_fallthru
      _
    %p202 = scmp.lt.s32.totalorder %s13, 2
    // Predicated region
    $region29: #{transformer_forward.3} parent=5 // pred_check
      %p203 = pneg %p202
    $region30: #{transformer_forward.3} parent=5 // pred_check_branch
      %205 = sbr.rel (%p203) target = $region32
    $region31: #{transformer_forward.3} parent=5 // pred_region
      // Predicated region
      $region33: #{transformer_forward.3} parent=31 // pred_check
        %p206 = pneg %p33
      $region34: #{transformer_forward.3} parent=31 // pred_check_branch
        %208 = sbr.rel (%p206) target = $region36
      $region35: #{transformer_forward.3} parent=31 // pred_region
        %s209 = smul.u32 4, %s13
        %p210 = scmp.lt.s32.totalorder %s209, 7
        %s211 = scalar_select %p210, %s209, 7
        %s212 = smul.addr %s211, 8
        %s213 = scalar_lea.vmem %s0, %s212
        %s214 = smul.u32 4, %s13
      $region36: #{transformer_forward.3} parent=31 // pred_fallthru
        _
    $region32: #{transformer_forward.3} parent=5 // pred_fallthru
      _
    %p215 = scmp.le.s32.totalorder 1, %s13
    %p216 = scmp.lt.s32.totalorder %s13, 3
    %p217 = pnand %p215, %p216
    %p218 = pneg %p217
    // Predicated region
    $region37: #{transformer_forward.3} parent=5 // pred_check
      _
    $region38: #{transformer_forward.3} parent=5 // pred_check_branch
      %220 = sbr.rel (%p217) target = $region40
    $region39: #{transformer_forward.3} parent=5 // pred_region
      %s221 = ssub.s32 %s13, 1
      %s222 = smul.u32 4, %s18
      %p223 = scmp.lt.s32.totalorder %s222, 7
      %s224 = scalar_select %p223, %s222, 7
      %s225 = smul.addr %s224, 8
      %s226 = scalar_lea.vmem %s0, %s225
      %p227 = pneg %p39
      %p228 = pneg %p36
      %p229 = pneg %p60
      %p230 = pneg %p57
      %p231 = pneg %p81
      %p232 = pneg %p78
      %p233 = pneg %p102
      %p234 = pneg %p99
      %p235 = pneg %p123
      %p236 = pneg %p120
      %p237 = pneg %p149
      %p238 = pneg %p146
      %s239 = smul.u32 4, %s18
      %p240 = scmp.lt.s32.totalorder %s239, 7
      %s241 = scalar_select %p240, %s239, 7
      %s242 = smul.addr %s241, 8
      %s243 = scalar_lea.vmem %s5, %s242
      %p244 = pneg %p175
      %p245 = pneg %p172
      %s246 = smul.u32 4, %s18
      %p247 = scmp.lt.s32.totalorder %s246, 7
      %s248 = scalar_select %p247, %s246, 7
      %s249 = scalar_lea.vmem %s6, %s248
      %s250 = smul.u32 4, %s18
      %p251 = scmp.lt.s32.totalorder %s250, 7
      %s252 = scalar_select %p251, %s250, 7
      %s253 = smul.addr %s252, 8
      %s254 = scalar_lea.vmem %s0, %s253
      %s255 = smul.u32 4, %s18
      %s256 = smul.u32 4, %s18
      %p257 = scmp.lt.s32.totalorder %s256, 7
      %s258 = scalar_select %p257, %s256, 7
      %s259 = smul.addr %s258, 8
      %s260 = scalar_lea.vmem %s5, %s259
      %s261 = smul.u32 4, %s18
      %s262 = smul.u32 4, %s18
      %p263 = scmp.lt.s32.totalorder %s262, 7
      %s264 = scalar_select %p263, %s262, 7
      %s265 = scalar_lea.vmem %s6, %s264
      %s266 = smul.u32 4, %s18
      %v268 = vld [vmem:[%s254] sm:$0xff]
      %v269 = vld [vmem:[%s254 + $0x8] sm:$0xff]
      %v270 = vld [vmem:[%s254 + $0x10] sm:$0xff]
      %v271 = vld [vmem:[%s254 + $0x18] sm:$0xff]
      %v272 = vpack.c.bf16 %v268, %v268
      %v273 = vpack.c.bf16 %v269, %v269
      %v274 = vpack.c.bf16 %v270, %v270
      %v275 = vpack.c.bf16 %v271, %v271
      %276 = vmatpush.bf16.xpose.msra.mxu0 0
      %277 = vmatpush.bf16.xpose.msra.mxu0 0
      %278 = vmatpush.bf16.xpose.msra.mxu0 0
      %279 = vmatpush.bf16.xpose.msra.mxu0 0
      %280 = vmatpush.bf16.xpose.msra.mxu0 0
      %281 = vmatpush.bf16.xpose.msra.mxu0 0
      %282 = vmatpush.bf16.xpose.msra.mxu0 0
      %283 = vmatpush.bf16.xpose.msra.mxu0 %v272
      %284 = vmatmul.bf16.gmra.mxu0 %v272
      %v285 = vpop.f32.mrf.mxu0
      %v286 = vadd.f32 0.0, %v285
      %v287 = vpop.f32.mrf.mxu0
      %288 = vdwg.mxu0
      %289 = vmatpush.bf16.xpose.msra.mxu0 0
      %290 = vmatpush.bf16.xpose.msra.mxu0 0
      %291 = vmatpush.bf16.xpose.msra.mxu0 0
      %292 = vmatpush.bf16.xpose.msra.mxu0 0
      %293 = vmatpush.bf16.xpose.msra.mxu0 0
      %294 = vmatpush.bf16.xpose.msra.mxu0 0
      %295 = vmatpush.bf16.xpose.msra.mxu0 0
      %296 = vmatpush.bf16.xpose.msra.mxu0 %v273
      %297 = vmatmul.bf16.gmra.mxu0 %v273
      %v298 = vpop.f32.mrf.mxu0
      %v299 = vadd.f32 0.0, %v298
      %v300 = vpop.f32.mrf.mxu0
      %301 = vdwg.mxu0
      %302 = vmatpush.bf16.xpose.msra.mxu0 0
      %303 = vmatpush.bf16.xpose.msra.mxu0 0
      %304 = vmatpush.bf16.xpose.msra.mxu0 0
      %305 = vmatpush.bf16.xpose.msra.mxu0 0
      %306 = vmatpush.bf16.xpose.msra.mxu0 0
      %307 = vmatpush.bf16.xpose.msra.mxu0 0
      %308 = vmatpush.bf16.xpose.msra.mxu0 0
      %309 = vmatpush.bf16.xpose.msra.mxu0 %v274
      %310 = vmatmul.bf16.gmra.mxu0 %v274
      %v311 = vpop.f32.mrf.mxu0
      %v312 = vadd.f32 0.0, %v311
      %v313 = vpop.f32.mrf.mxu0
      %314 = vdwg.mxu0
      %315 = vmatpush.bf16.xpose.msra.mxu0 0
      %316 = vmatpush.bf16.xpose.msra.mxu0 0
      %317 = vmatpush.bf16.xpose.msra.mxu0 0
      %318 = vmatpush.bf16.xpose.msra.mxu0 0
      %319 = vmatpush.bf16.xpose.msra.mxu0 0
      %320 = vmatpush.bf16.xpose.msra.mxu0 0
      %321 = vmatpush.bf16.xpose.msra.mxu0 0
      %322 = vmatpush.bf16.xpose.msra.mxu0 %v275
      %323 = vmatmul.bf16.gmra.mxu0 %v275
      %v324 = vpop.f32.mrf.mxu0
      %v325 = vadd.f32 0.0, %v324
      %v326 = vpop.f32.mrf.mxu0
      %327 = vdwg.mxu0
      %vm328 = vcmask 64512
      %v329 = vsel %vm328, %v286, -inf
      %v330 = vrot.slane %v329, 4
      %v331 = vmax.f32 %v329, %v330
      %v332 = vrot.slane %v331, 2
      %v333 = vmax.f32 %v331, %v332
      %v334 = vrot.slane %v333, 1
      %v335 = vmax.f32 %v333, %v334
      %v336 = vsel %vm328, %v299, -inf
      %v337 = vrot.slane %v336, 4
      %v338 = vmax.f32 %v336, %v337
      %v339 = vrot.slane %v338, 2
      %v340 = vmax.f32 %v338, %v339
      %v341 = vrot.slane %v340, 1
      %v342 = vmax.f32 %v340, %v341
      %v343 = vsel %vm328, %v312, -inf
      %v344 = vrot.slane %v343, 4
      %v345 = vmax.f32 %v343, %v344
      %v346 = vrot.slane %v345, 2
      %v347 = vmax.f32 %v345, %v346
      %v348 = vrot.slane %v347, 1
      %v349 = vmax.f32 %v347, %v348
      %v350 = vsel %vm328, %v325, -inf
      %v351 = vrot.slane %v350, 4
      %v352 = vmax.f32 %v350, %v351
      %v353 = vrot.slane %v352, 2
      %v354 = vmax.f32 %v352, %v353
      %v355 = vrot.slane %v354, 1
      %v356 = vmax.f32 %v354, %v355
      %v357 = vsub.f32 %v286, %v335
      %v358 = vsub.f32 %v299, %v342
      %v359 = vsub.f32 %v312, %v349
      %v360 = vsub.f32 %v325, %v356
      %v361 = vmul.f32 %v357, 1.442695
      %v362 = vpow.pop %v361
      %v363 = vmul.f32 %v358, 1.442695
      %v364 = vpow.pop %v363
      %v365 = vmul.f32 %v359, 1.442695
      %v366 = vpow.pop %v365
      %v367 = vmul.f32 %v360, 1.442695
      %v368 = vpow.pop %v367
      %v369 = vsel %vm328, %v362, 0.0
      %v370 = vrot.slane %v369, 4
      %v371 = vadd.f32 %v369, %v370
      %v372 = vrot.slane %v371, 2
      %v373 = vadd.f32 %v371, %v372
      %v374 = vrot.slane %v373, 1
      %v375 = vadd.f32 %v373, %v374
      %v376 = vsel %vm328, %v364, 0.0
      %v377 = vrot.slane %v376, 4
      %v378 = vadd.f32 %v376, %v377
      %v379 = vrot.slane %v378, 2
      %v380 = vadd.f32 %v378, %v379
      %v381 = vrot.slane %v380, 1
      %v382 = vadd.f32 %v380, %v381
      %v383 = vsel %vm328, %v366, 0.0
      %v384 = vrot.slane %v383, 4
      %v385 = vadd.f32 %v383, %v384
      %v386 = vrot.slane %v385, 2
      %v387 = vadd.f32 %v385, %v386
      %v388 = vrot.slane %v387, 1
      %v389 = vadd.f32 %v387, %v388
      %v390 = vsel %vm328, %v368, 0.0
      %v391 = vrot.slane %v390, 4
      %v392 = vadd.f32 %v390, %v391
      %v393 = vrot.slane %v392, 2
      %v394 = vadd.f32 %v392, %v393
      %v395 = vrot.slane %v394, 1
      %v396 = vadd.f32 %v394, %v395
      %v397 = vrcp.pop %v375
      %v398 = vrcp.pop %v382
      %v399 = vrcp.pop %v389
      %v400 = vrcp.pop %v396
      %v401 = vmul.f32 %v362, %v397
      %v402 = vmul.f32 %v364, %v398
      %v403 = vmul.f32 %v366, %v399
      %v404 = vmul.f32 %v368, %v400
      %405 = vst.msk [vmem:[%s260] sm:$0xff] %vm328, %v401
      %406 = vst.msk [vmem:[%s260 + $0x8] sm:$0xff] %vm328, %v402
      %407 = vst.msk [vmem:[%s260 + $0x10] sm:$0xff] %vm328, %v403
      %408 = vst.msk [vmem:[%s260 + $0x18] sm:$0xff] %vm328, %v404
      %v409 = vpack.c.bf16 %v401, %v401
      %v410 = vpack.c.bf16 %v402, %v402
      %v411 = vpack.c.bf16 %v403, %v403
      %v412 = vpack.c.bf16 %v404, %v404
      %v414 = vsel %vm328, %v409, 0
      %vm416 = vcmask 1043456
      %v418 = vsel %vm416, %v272, 0
      %420 = vmatpush.bf16.msra.mxu0 0
      %421 = vmatpush.bf16.msra.mxu0 0
      %422 = vmatpush.bf16.msra.mxu0 0
      %423 = vmatpush.bf16.msra.mxu0 0
      %424 = vmatpush.bf16.msra.mxu0 0
      %425 = vmatpush.bf16.msra.mxu0 0
      %426 = vmatpush.bf16.msra.mxu0 0
      %427 = vmatpush.bf16.msra.mxu0 %v418
      %428 = vmatmul.bf16.gmra.mxu0 %v414
      %v429 = vpop.f32.mrf.mxu0
      %v430 = vadd.f32 0.0, %v429
      %v431 = vpop.f32.mrf.mxu0
      %432 = vdwg.mxu0
      %v434 = vsel %vm328, %v410, 0
      %v437 = vsel %vm416, %v273, 0
      %439 = vmatpush.bf16.msra.mxu0 0
      %440 = vmatpush.bf16.msra.mxu0 0
      %441 = vmatpush.bf16.msra.mxu0 0
      %442 = vmatpush.bf16.msra.mxu0 0
      %443 = vmatpush.bf16.msra.mxu0 0
      %444 = vmatpush.bf16.msra.mxu0 0
      %445 = vmatpush.bf16.msra.mxu0 0
      %446 = vmatpush.bf16.msra.mxu0 %v437
      %447 = vmatmul.bf16.gmra.mxu0 %v434
      %v448 = vpop.f32.mrf.mxu0
      %v449 = vadd.f32 0.0, %v448
      %v450 = vpop.f32.mrf.mxu0
      %451 = vdwg.mxu0
      %v453 = vsel %vm328, %v411, 0
      %v456 = vsel %vm416, %v274, 0
      %458 = vmatpush.bf16.msra.mxu0 0
      %459 = vmatpush.bf16.msra.mxu0 0
      %460 = vmatpush.bf16.msra.mxu0 0
      %461 = vmatpush.bf16.msra.mxu0 0
      %462 = vmatpush.bf16.msra.mxu0 0
      %463 = vmatpush.bf16.msra.mxu0 0
      %464 = vmatpush.bf16.msra.mxu0 0
      %465 = vmatpush.bf16.msra.mxu0 %v456
      %466 = vmatmul.bf16.gmra.mxu0 %v453
      %v467 = vpop.f32.mrf.mxu0
      %v468 = vadd.f32 0.0, %v467
      %v469 = vpop.f32.mrf.mxu0
      %470 = vdwg.mxu0
      %v472 = vsel %vm328, %v412, 0
      %v475 = vsel %vm416, %v275, 0
      %477 = vmatpush.bf16.msra.mxu0 0
      %478 = vmatpush.bf16.msra.mxu0 0
      %479 = vmatpush.bf16.msra.mxu0 0
      %480 = vmatpush.bf16.msra.mxu0 0
      %481 = vmatpush.bf16.msra.mxu0 0
      %482 = vmatpush.bf16.msra.mxu0 0
      %483 = vmatpush.bf16.msra.mxu0 0
      %484 = vmatpush.bf16.msra.mxu0 %v475
      %485 = vmatmul.bf16.gmra.mxu0 %v472
      %v486 = vpop.f32.mrf.mxu0
      %v487 = vadd.f32 0.0, %v486
      %v488 = vpop.f32.mrf.mxu0
      %489 = vdwg.mxu0
      %490 = vadd.xlane.f32.xlu0 %v430
      %v491 = vpop.xlane.xlu0 %490
      %492 = vadd.xlane.f32.xlu0 %v449
      %v493 = vpop.xlane.xlu0 %492
      %494 = vadd.xlane.f32.xlu0 %v468
      %v495 = vpop.xlane.xlu0 %494
      %496 = vadd.xlane.f32.xlu0 %v487
      %v497 = vpop.xlane.xlu0 %496
      %v498 = vmul.f32 %v430, %v430
      %v499 = vmul.f32 %v449, %v449
      %v500 = vmul.f32 %v468, %v468
      %v501 = vmul.f32 %v487, %v487
      %502 = vadd.xlane.f32.xlu0 %v498
      %v503 = vpop.xlane.xlu0 %502
      %504 = vadd.xlane.f32.xlu0 %v499
      %v505 = vpop.xlane.xlu0 %504
      %506 = vadd.xlane.f32.xlu0 %v500
      %v507 = vpop.xlane.xlu0 %506
      %508 = vadd.xlane.f32.xlu0 %v501
      %v509 = vpop.xlane.xlu0 %508
      %v510 = vrcp.pop 100.0
      %v511 = vmul.f32 100.0, %v510
      %v512 = vsub.f32 1.0, %v511
      %v513 = vmul.f32 %v510, %v512
      %v514 = vadd.f32 %v510, %v513
      %vm515 = vweird.f32 %v510
      %v516 = vsel %vm515, %v510, %v514
      %v517 = vmul.f32 %v491, %v516
      %v518 = vmul.f32 %v493, %v516
      %v519 = vmul.f32 %v495, %v516
      %v520 = vmul.f32 %v497, %v516
      %v521 = vmul.f32 %v503, %v516
      %v522 = vmul.f32 %v505, %v516
      %v523 = vmul.f32 %v507, %v516
      %v524 = vmul.f32 %v509, %v516
      %v525 = vmul.f32 %v517, %v517
      %v526 = vmul.f32 %v518, %v518
      %v527 = vmul.f32 %v519, %v519
      %v528 = vmul.f32 %v520, %v520
      %v529 = vsub.f32 %v521, %v525
      %v530 = vsub.f32 %v522, %v526
      %v531 = vsub.f32 %v523, %v527
      %v532 = vsub.f32 %v524, %v528
      %v533 = vsub.f32 %v430, %v517
      %v534 = vsub.f32 %v449, %v518
      %v535 = vsub.f32 %v468, %v519
      %v536 = vsub.f32 %v487, %v520
      %v537 = vadd.f32 %v529, 1e-05
      %v538 = vadd.f32 %v530, 1e-05
      %v539 = vadd.f32 %v531, 1e-05
      %v540 = vadd.f32 %v532, 1e-05
      %v541 = vrsqrt.pop %v537
      %v542 = vmul.f32 %v541, %v537
      %v543 = vmul.f32 %v542, %v541
      %v544 = vmul.f32 0.5, %v543
      %v545 = vsub.f32 1.5, %v544
      %v546 = vmul.f32 %v541, %v545
      %vm547 = vweird.f32 %v537
      %vm548 = vweird.f32 %v541
      %vm549 = vmor %vm547, %vm548
      %v550 = vsel %vm549, %v541, %v546
      %v551 = vrsqrt.pop %v538
      %v552 = vmul.f32 %v551, %v538
      %v553 = vmul.f32 %v552, %v551
      %v554 = vmul.f32 0.5, %v553
      %v555 = vsub.f32 1.5, %v554
      %v556 = vmul.f32 %v551, %v555
      %vm557 = vweird.f32 %v538
      %vm558 = vweird.f32 %v551
      %vm559 = vmor %vm557, %vm558
      %v560 = vsel %vm559, %v551, %v556
      %v561 = vrsqrt.pop %v539
      %v562 = vmul.f32 %v561, %v539
      %v563 = vmul.f32 %v562, %v561
      %v564 = vmul.f32 0.5, %v563
      %v565 = vsub.f32 1.5, %v564
      %v566 = vmul.f32 %v561, %v565
      %vm567 = vweird.f32 %v539
      %vm568 = vweird.f32 %v561
      %vm569 = vmor %vm567, %vm568
      %v570 = vsel %vm569, %v561, %v566
      %v571 = vrsqrt.pop %v540
      %v572 = vmul.f32 %v571, %v540
      %v573 = vmul.f32 %v572, %v571
      %v574 = vmul.f32 0.5, %v573
      %v575 = vsub.f32 1.5, %v574
      %v576 = vmul.f32 %v571, %v575
      %vm577 = vweird.f32 %v540
      %vm578 = vweird.f32 %v571
      %vm579 = vmor %vm577, %vm578
      %v580 = vsel %vm579, %v571, %v576
      %v581 = vmul.f32 %v533, %v550
      %v582 = vmul.f32 %v534, %v560
      %v583 = vmul.f32 %v535, %v570
      %v584 = vmul.f32 %v536, %v580
      %v585 = vld [vmem:[%s1] sm:$0x1]
      %v587 = vperm.slane %v585, 0
      %v589 = vmul.f32 %v581, %v587
      %v590 = vmul.f32 %v582, %v587
      %v591 = vmul.f32 %v583, %v587
      %v592 = vmul.f32 %v584, %v587
      %v593 = vld [vmem:[%s2] sm:$0x1]
      %v595 = vperm.slane %v593, 0
      %v597 = vadd.f32 %v589, %v595
      %v598 = vadd.f32 %v590, %v595
      %v599 = vadd.f32 %v591, %v595
      %v600 = vadd.f32 %v592, %v595
      %v601 = vld [vmem:[%s3] sm:$0xff]
      %v602 = vld [vmem:[%s3 + $0x8] sm:$0xff]
      %v603 = vld [vmem:[%s3 + $0x10] sm:$0xff]
      %v604 = vld [vmem:[%s3 + $0x18] sm:$0xff]
      %v605 = vld [vmem:[%s3 + $0x20] sm:$0xff]
      %v606 = vld [vmem:[%s3 + $0x28] sm:$0xff]
      %v607 = vld [vmem:[%s3 + $0x30] sm:$0xff]
      %v608 = vld [vmem:[%s3 + $0x38] sm:$0xff]
      %v609 = vld [vmem:[%s3 + $0x40] sm:$0xff]
      %v610 = vld [vmem:[%s3 + $0x48] sm:$0xff]
      %v611 = vld [vmem:[%s3 + $0x50] sm:$0xff]
      %v612 = vld [vmem:[%s3 + $0x58] sm:$0xff]
      %v613 = vld [vmem:[%s3 + $0x60] sm:$0xff]
      %v614 = vld [vmem:[%s3 + $0x68] sm:$0xff]
      %v615 = vld [vmem:[%s3 + $0x70] sm:$0xff]
      %v616 = vld [vmem:[%s3 + $0x78] sm:$0xff]
      %v617 = vpack.c.bf16 %v602, %v601
      %v618 = vpack.c.bf16 %v604, %v603
      %v619 = vpack.c.bf16 %v606, %v605
      %v620 = vpack.c.bf16 %v608, %v607
      %v621 = vpack.c.bf16 %v610, %v609
      %v622 = vpack.c.bf16 %v612, %v611
      %v623 = vpack.c.bf16 %v614, %v613
      %v624 = vpack.c.bf16 %v616, %v615
      %v625 = vld [vmem:[%s4] sm:$0x1]
      %v626 = vpack.c.bf16 %v598, %v597
      %v627 = vpack.c.bf16 %v600, %v599
      %v629 = vperm.slane %v625, 0
      %631 = vmatpush.bf16.msra.mxu0 %v624
      %632 = vmatpush.bf16.msra.mxu0 %v623
      %633 = vmatpush.bf16.msra.mxu0 %v622
      %634 = vmatpush.bf16.msra.mxu0 %v621
      %635 = vmatpush.bf16.msra.mxu0 %v620
      %636 = vmatpush.bf16.msra.mxu0 %v619
      %637 = vmatpush.bf16.msra.mxu0 %v618
      %638 = vmatpush.bf16.msra.mxu0 %v617
      %639 = vmatmul.bf16.gmra.mxu0 %v626
      %v640 = vpop.f32.mrf.mxu0
      %v641 = vadd.f32 %v629, %v640
      %v642 = vpop.f32.mrf.mxu0
      %v643 = vadd.f32 %v629, %v642
      %644 = vmatmul.bf16.gmra.mxu0 %v627
      %v645 = vpop.f32.mrf.mxu0
      %v646 = vadd.f32 %v629, %v645
      %v647 = vpop.f32.mrf.mxu0
      %v648 = vadd.f32 %v629, %v647
      %649 = vdwg.mxu0
      %v650 = vmax.f32 %v641, 0.0
      %v651 = vmax.f32 %v643, 0.0
      %v652 = vmax.f32 %v646, 0.0
      %v653 = vmax.f32 %v648, 0.0
      %v654 = vpack.c.bf16 %v651, %v650
      %v655 = vpack.c.bf16 %v653, %v652
      %656 = vmatpush.bf16.msra.mxu0 %v624
      %657 = vmatpush.bf16.msra.mxu0 %v623
      %658 = vmatpush.bf16.msra.mxu0 %v622
      %659 = vmatpush.bf16.msra.mxu0 %v621
      %660 = vmatpush.bf16.msra.mxu0 %v620
      %661 = vmatpush.bf16.msra.mxu0 %v619
      %662 = vmatpush.bf16.msra.mxu0 %v618
      %663 = vmatpush.bf16.msra.mxu0 %v617
      %664 = vmatmul.bf16.gmra.mxu0 %v654
      %v665 = vpop.f32.mrf.mxu0
      %v666 = vadd.f32 %v629, %v665
      %v667 = vpop.f32.mrf.mxu0
      %v668 = vadd.f32 %v629, %v667
      %669 = vmatmul.bf16.gmra.mxu0 %v655
      %v670 = vpop.f32.mrf.mxu0
      %v671 = vadd.f32 %v629, %v670
      %v672 = vpop.f32.mrf.mxu0
      %v673 = vadd.f32 %v629, %v672
      %674 = vdwg.mxu0
      %v675 = vmax.f32 %v666, 0.0
      %v676 = vmax.f32 %v668, 0.0
      %v677 = vmax.f32 %v671, 0.0
      %v678 = vmax.f32 %v673, 0.0
      %v679 = vpack.c.bf16 %v676, %v675
      %v680 = vpack.c.bf16 %v678, %v677
      %681 = vmatpush.bf16.msra.mxu0 %v624
      %682 = vmatpush.bf16.msra.mxu0 %v623
      %683 = vmatpush.bf16.msra.mxu0 %v622
      %684 = vmatpush.bf16.msra.mxu0 %v621
      %685 = vmatpush.bf16.msra.mxu0 %v620
      %686 = vmatpush.bf16.msra.mxu0 %v619
      %687 = vmatpush.bf16.msra.mxu0 %v618
      %688 = vmatpush.bf16.msra.mxu0 %v617
      %689 = vmatmul.bf16.gmra.mxu0 %v679
      %v690 = vpop.f32.mrf.mxu0
      %v691 = vadd.f32 %v629, %v690
      %v692 = vpop.f32.mrf.mxu0
      %v693 = vadd.f32 %v629, %v692
      %694 = vmatmul.bf16.gmra.mxu0 %v680
      %v695 = vpop.f32.mrf.mxu0
      %v696 = vadd.f32 %v629, %v695
      %v697 = vpop.f32.mrf.mxu0
      %v698 = vadd.f32 %v629, %v697
      %699 = vdwg.mxu0
      %v700 = vmax.f32 %v691, 0.0
      %v701 = vmax.f32 %v693, 0.0
      %v702 = vmax.f32 %v696, 0.0
      %v703 = vmax.f32 %v698, 0.0
      %v704 = vadd.f32 %v700, %v597
      %v705 = vadd.f32 %v701, %v598
      %v706 = vadd.f32 %v702, %v599
      %v707 = vadd.f32 %v703, %v600
      %708 = vmax.xlane.f32.xlu0 %v704
      %v709 = vpop.xlane.xlu0 %708
      %710 = vmax.xlane.f32.xlu0 %v705
      %v711 = vpop.xlane.xlu0 %710
      %712 = vmax.xlane.f32.xlu0 %v706
      %v713 = vpop.xlane.xlu0 %712
      %714 = vmax.xlane.f32.xlu0 %v707
      %v715 = vpop.xlane.xlu0 %714
      %v716 = vrot.slane %v709, 4
      %v717 = vmax.f32 %v709, %v716
      %v718 = vrot.slane %v717, 2
      %v719 = vmax.f32 %v717, %v718
      %v720 = vrot.slane %v719, 1
      %v721 = vmax.f32 %v719, %v720
      %v722 = vrot.slane %v711, 4
      %v723 = vmax.f32 %v711, %v722
      %v724 = vrot.slane %v723, 2
      %v725 = vmax.f32 %v723, %v724
      %v726 = vrot.slane %v725, 1
      %v727 = vmax.f32 %v725, %v726
      %v728 = vrot.slane %v713, 4
      %v729 = vmax.f32 %v713, %v728
      %v730 = vrot.slane %v729, 2
      %v731 = vmax.f32 %v729, %v730
      %v732 = vrot.slane %v731, 1
      %v733 = vmax.f32 %v731, %v732
      %v734 = vrot.slane %v715, 4
      %v735 = vmax.f32 %v715, %v734
      %v736 = vrot.slane %v735, 2
      %v737 = vmax.f32 %v735, %v736
      %v738 = vrot.slane %v737, 1
      %v739 = vmax.f32 %v737, %v738
      %v740 = vmax.f32 %v721, 0.0
      %v741 = vmax.f32 %v727, 0.0
      %v742 = vmax.f32 %v733, 0.0
      %v743 = vmax.f32 %v739, 0.0
      %vm744 = vcmask 0
      %745 = vst.msk [vmem:[%s265] sm:$0x1] %vm744, %v740
      %746 = vst.msk [vmem:[%s265 + $0x1] sm:$0x1] %vm744, %v741
      %747 = vst.msk [vmem:[%s265 + $0x2] sm:$0x1] %vm744, %v742
      %748 = vst.msk [vmem:[%s265 + $0x3] sm:$0x1] %vm744, %v743
      %s749 = smul.u32 4, %s18
      %p750 = scmp.lt.s32.totalorder %s749, 7
      %s751 = scalar_select %p750, %s749, 7
      %s752 = smul.addr %s751, 8
      %s753 = scalar_lea.vmem %s5, %s752
      %s754 = smul.u32 4, %s18
      %p755 = scmp.lt.s32.totalorder %s754, 7
      %s756 = scalar_select %p755, %s754, 7
      %s757 = scalar_lea.vmem %s6, %s756
      // Predicated region
      $region41: #{transformer_forward.3} parent=39 // pred_check
        %p758 = pneg %p146
      $region42: #{transformer_forward.3} parent=39 // pred_check_branch
        %760 = sbr.rel (%p758) target = $region44
      $region43: #{transformer_forward.3} parent=39 // pred_region
        %s761 = smul.u32 4, %s18
      $region44: #{transformer_forward.3} parent=39 // pred_fallthru
        _
      // Predicated region
      $region45: #{transformer_forward.3} parent=39 // pred_check
        %p762 = pneg %p172
      $region46: #{transformer_forward.3} parent=39 // pred_check_branch
        %764 = sbr.rel (%p762) target = $region48
      $region47: #{transformer_forward.3} parent=39 // pred_region
        %s765 = smul.u32 4, %s18
      $region48: #{transformer_forward.3} parent=39 // pred_fallthru
        _
    $region40: #{transformer_forward.3} parent=5 // pred_fallthru
      _
    %p766 = scmp.le.s32.totalorder 2, %s13
    // Predicated region
    $region49: #{transformer_forward.3} parent=5 // pred_check
      %p767 = pneg %p766
    $region50: #{transformer_forward.3} parent=5 // pred_check_branch
      %769 = sbr.rel (%p767) target = $region52
    $region51: #{transformer_forward.3} parent=5 // pred_region
      %s770 = ssub.s32 %s13, 2
      // Predicated region
      $region53: #{transformer_forward.3} parent=51 // pred_check
        %p771 = pneg %p152
      $region54: #{transformer_forward.3} parent=51 // pred_check_branch
        %773 = sbr.rel (%p771) target = $region56
      $region55: #{transformer_forward.3} parent=51 // pred_region
        %s774 = smul.u32 4, %s19
        %p775 = scmp.lt.s32.totalorder %s774, 7
        %s776 = scalar_select %p775, %s774, 7
        %s777 = smul.addr %s776, 8
        %s778 = scalar_lea.vmem %s5, %s777
      $region56: #{transformer_forward.3} parent=51 // pred_fallthru
        _
      // Predicated region
      $region57: #{transformer_forward.3} parent=51 // pred_check
        %p779 = pneg %p178
      $region58: #{transformer_forward.3} parent=51 // pred_check_branch
        %781 = sbr.rel (%p779) target = $region60
      $region59: #{transformer_forward.3} parent=51 // pred_region
        %s782 = smul.u32 4, %s19
        %p783 = scmp.lt.s32.totalorder %s782, 7
        %s784 = scalar_select %p783, %s782, 7
        %s785 = scalar_lea.vmem %s6, %s784
      $region60: #{transformer_forward.3} parent=51 // pred_fallthru
        _
    $region52: #{transformer_forward.3} parent=5 // pred_fallthru
      _
  $region6: #{transformer_forward.3} parent=0 // loop_footer
    %s17 = sadd.s32 1, %s13
  $region7: #{transformer_forward.3} parent=0 // loop_footer_branch
    %12 = sbr.rel target = $region3
  $region8: #{transformer_forward.3} parent=0 // loop_exit
    _

// kernel: transformer_forward.2
$region0: #{transformer_forward.2}
  #allocation0 [shape = 'u32[]', space=smem, size = 0x4, offset = 0x4, fixed_abs, tag = 'smem constant byte address 0x4 - core index']
  #allocation1 [shape = 'u32[72,128]{1,0:T(1,128)}', space=vmem, size = 0x9000, scoped, tag = 'internal scratch']
  %s0 = inlined_call_operand.vmem [shape: f32[8,8,768], index: 0, kind: input, shape index: {}]
  %s1 = inlined_call_operand.hbm [shape: f32[256,768], index: 1, kind: input, shape index: {}]
  %s2 = inlined_call_operand.vmem [shape: f32[1,256], index: 2, kind: input, shape index: {}]
  %s3 = inlined_call_operand.vmem [shape: f32[8,8,256], index: 3, kind: output, shape index: {}]
  %s4 = sld [smem:[#allocation0]]
  $region26: #{transformer_forward.2} parent=0
    _
  %s6 = ssub.s32 1, %s4
  %s7 = scalar_select 0, %s6, %s4
  $region1: #{transformer_forward.2} parent=0
    #allocation2 [shape = 'u8[786432]{0}', space=vmem, size = 0xc0000, scoped, tag = 'input window, operand 1, single buffered']
    #allocation3 [shape = 's32[1]{0}', space=sflag, size = 0x4, scoped, tag = 'scoped memory for transformer_forward.2']
    %8 = vsyncpa [#allocation3], 0
    // Predicated region
    $region2: #{transformer_forward.2} parent=1 // pred_check
      _
    $region3: #{transformer_forward.2} parent=1 // pred_check_branch
      %10 = sbr.rel (0) target = $region5
    $region4: #{transformer_forward.2} parent=1 // pred_region
      _
    $region5: #{transformer_forward.2} parent=1 // pred_fallthru
      _
    // Predicated region
    $region6: #{transformer_forward.2} parent=1 // pred_check
      _
    $region7: #{transformer_forward.2} parent=1 // pred_check_branch
      %12 = sbr.rel (0) target = $region9
    $region8: #{transformer_forward.2} parent=1 // pred_region
      %14 = vsyncadd [#allocation3], 0
      %s15 = sshll.u32 %s1, 4
      %s16 = int_to_ptr.hbm [resolvable:$true] %s15
      %s17 = sshll.u32 [#allocation2], 4
      %s18 = int_to_ptr.vmem [resolvable:$true] %s17
      %23 = dma.hbm_to_vmem [thread:$0]  %s16, 24576, %s18, [#allocation3], 768, 768, 48
    $region9: #{transformer_forward.2} parent=1 // pred_fallthru
      _
    // Predicated region
    $region10: #{transformer_forward.2} parent=1 // pred_check
      _
    $region11: #{transformer_forward.2} parent=1 // pred_check_branch
      %25 = sbr.rel (0) target = $region13
    $region12: #{transformer_forward.2} parent=1 // pred_region
      _
    $region13: #{transformer_forward.2} parent=1 // pred_fallthru
      _
    // Predicated region
    $region14: #{transformer_forward.2} parent=1 // pred_check
      _
    $region15: #{transformer_forward.2} parent=1 // pred_check_branch
      %27 = sbr.rel (0) target = $region17
    $region16: #{transformer_forward.2} parent=1 // pred_region
      %29 = dma.done [#allocation3], 24576
    $region17: #{transformer_forward.2} parent=1 // pred_fallthru
      _
    %v30 = vld [vmem:[#allocation2] sm:$0xff]
    %v31 = vld [vmem:[#allocation2 + $0x8] sm:$0xff]
    %v32 = vld [vmem:[#allocation2 + $0x10] sm:$0xff]
    %v33 = vld [vmem:[#allocation2 + $0x18] sm:$0xff]
    %v34 = vld [vmem:[#allocation2 + $0x20] sm:$0xff]
    %v35 = vld [vmem:[#allocation2 + $0x28] sm:$0xff]
    %v36 = vld [vmem:[#allocation2 + $0x30] sm:$0xff]
    %v37 = vld [vmem:[#allocation2 + $0x38] sm:$0xff]
    %v38 = vld [vmem:[#allocation2 + $0x40] sm:$0xff]
    %v39 = vld [vmem:[#allocation2 + $0x48] sm:$0xff]
    %v40 = vld [vmem:[#allocation2 + $0x50] sm:$0xff]
    %v41 = vld [vmem:[#allocation2 + $0x58] sm:$0xff]
    %v42 = vld [vmem:[#allocation2 + $0x60] sm:$0xff]
    %v43 = vld [vmem:[#allocation2 + $0x68] sm:$0xff]
    %v44 = vld [vmem:[#allocation2 + $0x70] sm:$0xff]
    %v45 = vld [vmem:[#allocation2 + $0x78] sm:$0xff]
    %v46 = vld [vmem:[#allocation2 + $0x80] sm:$0xff]
    %v47 = vld [vmem:[#allocation2 + $0x88] sm:$0xff]
    %v48 = vld [vmem:[#allocation2 + $0x90] sm:$0xff]
    %v49 = vld [vmem:[#allocation2 + $0x98] sm:$0xff]
    %v50 = vld [vmem:[#allocation2 + $0xa0] sm:$0xff]
    %v51 = vld [vmem:[#allocation2 + $0xa8] sm:$0xff]
    %v52 = vld [vmem:[#allocation2 + $0xb0] sm:$0xff]
    %v53 = vld [vmem:[#allocation2 + $0xb8] sm:$0xff]
    %v54 = vld [vmem:[#allocation2 + $0xc0] sm:$0xff]
    %v55 = vld [vmem:[#allocation2 + $0xc8] sm:$0xff]
    %v56 = vld [vmem:[#allocation2 + $0xd0] sm:$0xff]
    %v57 = vld [vmem:[#allocation2 + $0xd8] sm:$0xff]
    %v58 = vld [vmem:[#allocation2 + $0xe0] sm:$0xff]
    %v59 = vld [vmem:[#allocation2 + $0xe8] sm:$0xff]
    %v60 = vld [vmem:[#allocation2 + $0xf0] sm:$0xff]
    %v61 = vld [vmem:[#allocation2 + $0xf8] sm:$0xff]
    %v62 = vld [vmem:[#allocation2 + $0x100] sm:$0xff]
    %v63 = vld [vmem:[#allocation2 + $0x108] sm:$0xff]
    %v64 = vld [vmem:[#allocation2 + $0x110] sm:$0xff]
    %v65 = vld [vmem:[#allocation2 + $0x118] sm:$0xff]
    %v66 = vld [vmem:[#allocation2 + $0x120] sm:$0xff]
    %v67 = vld [vmem:[#allocation2 + $0x128] sm:$0xff]
    %v68 = vld [vmem:[#allocation2 + $0x130] sm:$0xff]
    %v69 = vld [vmem:[#allocation2 + $0x138] sm:$0xff]
    %v70 = vld [vmem:[#allocation2 + $0x140] sm:$0xff]
    %v71 = vld [vmem:[#allocation2 + $0x148] sm:$0xff]
    %v72 = vld [vmem:[#allocation2 + $0x150] sm:$0xff]
    %v73 = vld [vmem:[#allocation2 + $0x158] sm:$0xff]
    %v74 = vld [vmem:[#allocation2 + $0x160] sm:$0xff]
    %v75 = vld [vmem:[#allocation2 + $0x168] sm:$0xff]
    %v76 = vld [vmem:[#allocation2 + $0x170] sm:$0xff]
    %v77 = vld [vmem:[#allocation2 + $0x178] sm:$0xff]
    %v78 = vld [vmem:[#allocation2 + $0x180] sm:$0xff]
    %v79 = vld [vmem:[#allocation2 + $0x188] sm:$0xff]
    %v80 = vld [vmem:[#allocation2 + $0x190] sm:$0xff]
    %v81 = vld [vmem:[#allocation2 + $0x198] sm:$0xff]
    %v82 = vld [vmem:[#allocation2 + $0x1a0] sm:$0xff]
    %v83 = vld [vmem:[#allocation2 + $0x1a8] sm:$0xff]
    %v84 = vld [vmem:[#allocation2 + $0x1b0] sm:$0xff]
    %v85 = vld [vmem:[#allocation2 + $0x1b8] sm:$0xff]
    %v86 = vld [vmem:[#allocation2 + $0x1c0] sm:$0xff]
    %v87 = vld [vmem:[#allocation2 + $0x1c8] sm:$0xff]
    %v88 = vld [vmem:[#allocation2 + $0x1d0] sm:$0xff]
    %v89 = vld [vmem:[#allocation2 + $0x1d8] sm:$0xff]
    %v90 = vld [vmem:[#allocation2 + $0x1e0] sm:$0xff]
    %v91 = vld [vmem:[#allocation2 + $0x1e8] sm:$0xff]
    %v92 = vld [vmem:[#allocation2 + $0x1f0] sm:$0xff]
    %v93 = vld [vmem:[#allocation2 + $0x1f8] sm:$0xff]
    %v94 = vld [vmem:[#allocation2 + $0x200] sm:$0xff]
    %v95 = vld [vmem:[#allocation2 + $0x208] sm:$0xff]
    %v96 = vld [vmem:[#allocation2 + $0x210] sm:$0xff]
    %v97 = vld [vmem:[#allocation2 + $0x218] sm:$0xff]
    %v98 = vld [vmem:[#allocation2 + $0x220] sm:$0xff]
    %v99 = vld [vmem:[#allocation2 + $0x228] sm:$0xff]
    %v100 = vld [vmem:[#allocation2 + $0x230] sm:$0xff]
    %v101 = vld [vmem:[#allocation2 + $0x238] sm:$0xff]
    %v102 = vld [vmem:[#allocation2 + $0x240] sm:$0xff]
    %v103 = vld [vmem:[#allocation2 + $0x248] sm:$0xff]
    %v104 = vld [vmem:[#allocation2 + $0x250] sm:$0xff]
    %v105 = vld [vmem:[#allocation2 + $0x258] sm:$0xff]
    %v106 = vld [vmem:[#allocation2 + $0x260] sm:$0xff]
    %v107 = vld [vmem:[#allocation2 + $0x268] sm:$0xff]
    %v108 = vld [vmem:[#allocation2 + $0x270] sm:$0xff]
    %v109 = vld [vmem:[#allocation2 + $0x278] sm:$0xff]
    %v110 = vld [vmem:[#allocation2 + $0x280] sm:$0xff]
    %v111 = vld [vmem:[#allocation2 + $0x288] sm:$0xff]
    %v112 = vld [vmem:[#allocation2 + $0x290] sm:$0xff]
    %v113 = vld [vmem:[#allocation2 + $0x298] sm:$0xff]
    %v114 = vld [vmem:[#allocation2 + $0x2a0] sm:$0xff]
    %v115 = vld [vmem:[#allocation2 + $0x2a8] sm:$0xff]
    %v116 = vld [vmem:[#allocation2 + $0x2b0] sm:$0xff]
    %v117 = vld [vmem:[#allocation2 + $0x2b8] sm:$0xff]
    %v118 = vld [vmem:[#allocation2 + $0x2c0] sm:$0xff]
    %v119 = vld [vmem:[#allocation2 + $0x2c8] sm:$0xff]
    %v120 = vld [vmem:[#allocation2 + $0x2d0] sm:$0xff]
    %v121 = vld [vmem:[#allocation2 + $0x2d8] sm:$0xff]
    %v122 = vld [vmem:[#allocation2 + $0x2e0] sm:$0xff]
    %v123 = vld [vmem:[#allocation2 + $0x2e8] sm:$0xff]
    %v124 = vld [vmem:[#allocation2 + $0x2f0] sm:$0xff]
    %v125 = vld [vmem:[#allocation2 + $0x2f8] sm:$0xff]
    %v126 = vld [vmem:[#allocation2 + $0x300] sm:$0xff]
    %v127 = vld [vmem:[#allocation2 + $0x308] sm:$0xff]
    %v128 = vld [vmem:[#allocation2 + $0x310] sm:$0xff]
    %v129 = vld [vmem:[#allocation2 + $0x318] sm:$0xff]
    %v130 = vld [vmem:[#allocation2 + $0x320] sm:$0xff]
    %v131 = vld [vmem:[#allocation2 + $0x328] sm:$0xff]
    %v132 = vld [vmem:[#allocation2 + $0x330] sm:$0xff]
    %v133 = vld [vmem:[#allocation2 + $0x338] sm:$0xff]
    %v134 = vld [vmem:[#allocation2 + $0x340] sm:$0xff]
    %v135 = vld [vmem:[#allocation2 + $0x348] sm:$0xff]
    %v136 = vld [vmem:[#allocation2 + $0x350] sm:$0xff]
    %v137 = vld [vmem:[#allocation2 + $0x358] sm:$0xff]
    %v138 = vld [vmem:[#allocation2 + $0x360] sm:$0xff]
    %v139 = vld [vmem:[#allocation2 + $0x368] sm:$0xff]
    %v140 = vld [vmem:[#allocation2 + $0x370] sm:$0xff]
    %v141 = vld [vmem:[#allocation2 + $0x378] sm:$0xff]
    %v142 = vld [vmem:[#allocation2 + $0x380] sm:$0xff]
    %v143 = vld [vmem:[#allocation2 + $0x388] sm:$0xff]
    %v144 = vld [vmem:[#allocation2 + $0x390] sm:$0xff]
    %v145 = vld [vmem:[#allocation2 + $0x398] sm:$0xff]
    %v146 = vld [vmem:[#allocation2 + $0x3a0] sm:$0xff]
    %v147 = vld [vmem:[#allocation2 + $0x3a8] sm:$0xff]
    %v148 = vld [vmem:[#allocation2 + $0x3b0] sm:$0xff]
    %v149 = vld [vmem:[#allocation2 + $0x3b8] sm:$0xff]
    %v150 = vld [vmem:[#allocation2 + $0x3c0] sm:$0xff]
    %v151 = vld [vmem:[#allocation2 + $0x3c8] sm:$0xff]
    %v152 = vld [vmem:[#allocation2 + $0x3d0] sm:$0xff]
    %v153 = vld [vmem:[#allocation2 + $0x3d8] sm:$0xff]
    %v154 = vld [vmem:[#allocation2 + $0x3e0] sm:$0xff]
    %v155 = vld [vmem:[#allocation2 + $0x3e8] sm:$0xff]
    %v156 = vld [vmem:[#allocation2 + $0x3f0] sm:$0xff]
    %v157 = vld [vmem:[#allocation2 + $0x3f8] sm:$0xff]
    %v158 = vld [vmem:[#allocation2 + $0x400] sm:$0xff]
    %v159 = vld [vmem:[#allocation2 + $0x408] sm:$0xff]
    %v160 = vld [vmem:[#allocation2 + $0x410] sm:$0xff]
    %v161 = vld [vmem:[#allocation2 + $0x418] sm:$0xff]
    %v162 = vld [vmem:[#allocation2 + $0x420] sm:$0xff]
    %v163 = vld [vmem:[#allocation2 + $0x428] sm:$0xff]
    %v164 = vld [vmem:[#allocation2 + $0x430] sm:$0xff]
    %v165 = vld [vmem:[#allocation2 + $0x438] sm:$0xff]
    %v166 = vld [vmem:[#allocation2 + $0x440] sm:$0xff]
    %v167 = vld [vmem:[#allocation2 + $0x448] sm:$0xff]
    %v168 = vld [vmem:[#allocation2 + $0x450] sm:$0xff]
    %v169 = vld [vmem:[#allocation2 + $0x458] sm:$0xff]
    %v170 = vld [vmem:[#allocation2 + $0x460] sm:$0xff]
    %v171 = vld [vmem:[#allocation2 + $0x468] sm:$0xff]
    %v172 = vld [vmem:[#allocation2 + $0x470] sm:$0xff]
    %v173 = vld [vmem:[#allocation2 + $0x478] sm:$0xff]
    %v174 = vld [vmem:[#allocation2 + $0x480] sm:$0xff]
    %v175 = vld [vmem:[#allocation2 + $0x488] sm:$0xff]
    %v176 = vld [vmem:[#allocation2 + $0x490] sm:$0xff]
    %v177 = vld [vmem:[#allocation2 + $0x498] sm:$0xff]
    %v178 = vld [vmem:[#allocation2 + $0x4a0] sm:$0xff]
    %v179 = vld [vmem:[#allocation2 + $0x4a8] sm:$0xff]
    %v180 = vld [vmem:[#allocation2 + $0x4b0] sm:$0xff]
    %v181 = vld [vmem:[#allocation2 + $0x4b8] sm:$0xff]
    %v182 = vld [vmem:[#allocation2 + $0x4c0] sm:$0xff]
    %v183 = vld [vmem:[#allocation2 + $0x4c8] sm:$0xff]
    %v184 = vld [vmem:[#allocation2 + $0x4d0] sm:$0xff]
    %v185 = vld [vmem:[#allocation2 + $0x4d8] sm:$0xff]
    %v186 = vld [vmem:[#allocation2 + $0x4e0] sm:$0xff]
    %v187 = vld [vmem:[#allocation2 + $0x4e8] sm:$0xff]
    %v188 = vld [vmem:[#allocation2 + $0x4f0] sm:$0xff]
    %v189 = vld [vmem:[#allocation2 + $0x4f8] sm:$0xff]
    %v190 = vld [vmem:[#allocation2 + $0x500] sm:$0xff]
    %v191 = vld [vmem:[#allocation2 + $0x508] sm:$0xff]
    %v192 = vld [vmem:[#allocation2 + $0x510] sm:$0xff]
    %v193 = vld [vmem:[#allocation2 + $0x518] sm:$0xff]
    %v194 = vld [vmem:[#allocation2 + $0x520] sm:$0xff]
    %v195 = vld [vmem:[#allocation2 + $0x528] sm:$0xff]
    %v196 = vld [vmem:[#allocation2 + $0x530] sm:$0xff]
    %v197 = vld [vmem:[#allocation2 + $0x538] sm:$0xff]
    %v198 = vld [vmem:[#allocation2 + $0x540] sm:$0xff]
    %v199 = vld [vmem:[#allocation2 + $0x548] sm:$0xff]
    %v200 = vld [vmem:[#allocation2 + $0x550] sm:$0xff]
    %v201 = vld [vmem:[#allocation2 + $0x558] sm:$0xff]
    %v202 = vld [vmem:[#allocation2 + $0x560] sm:$0xff]
    %v203 = vld [vmem:[#allocation2 + $0x568] sm:$0xff]
    %v204 = vld [vmem:[#allocation2 + $0x570] sm:$0xff]
    %v205 = vld [vmem:[#allocation2 + $0x578] sm:$0xff]
    %v206 = vld [vmem:[#allocation2 + $0x580] sm:$0xff]
    %v207 = vld [vmem:[#allocation2 + $0x588] sm:$0xff]
    %v208 = vld [vmem:[#allocation2 + $0x590] sm:$0xff]
    %v209 = vld [vmem:[#allocation2 + $0x598] sm:$0xff]
    %v210 = vld [vmem:[#allocation2 + $0x5a0] sm:$0xff]
    %v211 = vld [vmem:[#allocation2 + $0x5a8] sm:$0xff]
    %v212 = vld [vmem:[#allocation2 + $0x5b0] sm:$0xff]
    %v213 = vld [vmem:[#allocation2 + $0x5b8] sm:$0xff]
    %v214 = vld [vmem:[#allocation2 + $0x5c0] sm:$0xff]
    %v215 = vld [vmem:[#allocation2 + $0x5c8] sm:$0xff]
    %v216 = vld [vmem:[#allocation2 + $0x5d0] sm:$0xff]
    %v217 = vld [vmem:[#allocation2 + $0x5d8] sm:$0xff]
    %v218 = vld [vmem:[#allocation2 + $0x5e0] sm:$0xff]
    %v219 = vld [vmem:[#allocation2 + $0x5e8] sm:$0xff]
    %v220 = vld [vmem:[#allocation2 + $0x5f0] sm:$0xff]
    %v221 = vld [vmem:[#allocation2 + $0x5f8] sm:$0xff]
    %v222 = vld [vmem:[%s2] sm:$0x3]
    %v223 = vld [vmem:[%s0] sm:$0xff]
    %v224 = vld [vmem:[%s0 + $0x8] sm:$0xff]
    %v225 = vld [vmem:[%s0 + $0x10] sm:$0xff]
    %v226 = vld [vmem:[%s0 + $0x18] sm:$0xff]
    %v227 = vld [vmem:[%s0 + $0x20] sm:$0xff]
    %v228 = vld [vmem:[%s0 + $0x28] sm:$0xff]
    %229 = vmatpush.msra.mxu0 %v120
    %230 = vmatpush.msra.mxu0 %v114
    %231 = vmatpush.msra.mxu0 %v108
    %232 = vmatpush.msra.mxu0 %v102
    %233 = vmatpush.msra.mxu0 %v96
    %234 = vmatpush.msra.mxu0 %v90
    %235 = vmatpush.msra.mxu0 %v84
    %236 = vmatpush.msra.mxu0 %v78
    %237 = vmatpush.msra.mxu0 %v72
    %238 = vmatpush.msra.mxu0 %v66
    %239 = vmatpush.msra.mxu0 %v60
    %240 = vmatpush.msra.mxu0 %v54
    %241 = vmatpush.msra.mxu0 %v48
    %242 = vmatpush.msra.mxu0 %v42
    %243 = vmatpush.msra.mxu0 %v36
    %244 = vmatpush.msra.mxu0 %v30
    %245 = vmatmul.f32.gmra.mxu0 0.0
    %v246 = vpop.f32.mrf.mxu0
    %v247 = vadd.f32 0.0, %v246
    %248 = vdwg.mxu0
    %249 = vmatpush.msra.mxu0 %v216
    %250 = vmatpush.msra.mxu0 %v210
    %251 = vmatpush.msra.mxu0 %v204
    %252 = vmatpush.msra.mxu0 %v198
    %253 = vmatpush.msra.mxu0 %v192
    %254 = vmatpush.msra.mxu0 %v186
    %255 = vmatpush.msra.mxu0 %v180
    %256 = vmatpush.msra.mxu0 %v174
    %257 = vmatpush.msra.mxu0 %v168
    %258 = vmatpush.msra.mxu0 %v162
    %259 = vmatpush.msra.mxu0 %v156
    %260 = vmatpush.msra.mxu0 %v150
    %261 = vmatpush.msra.mxu0 %v144
    %262 = vmatpush.msra.mxu0 %v138
    %263 = vmatpush.msra.mxu0 %v132
    %264 = vmatpush.msra.mxu0 %v126
    %265 = vmatmul.f32.gmra.mxu0 0.0
    %v266 = vpop.f32.mrf.mxu0
    %v267 = vadd.f32 %v247, %v266
    %268 = vdwg.mxu0
    %269 = vmatpush.msra.mxu0 %v121
    %270 = vmatpush.msra.mxu0 %v115
    %271 = vmatpush.msra.mxu0 %v109
    %272 = vmatpush.msra.mxu0 %v103
    %273 = vmatpush.msra.mxu0 %v97
    %274 = vmatpush.msra.mxu0 %v91
    %275 = vmatpush.msra.mxu0 %v85
    %276 = vmatpush.msra.mxu0 %v79
    %277 = vmatpush.msra.mxu0 %v73
    %278 = vmatpush.msra.mxu0 %v67
    %279 = vmatpush.msra.mxu0 %v61
    %280 = vmatpush.msra.mxu0 %v55
    %281 = vmatpush.msra.mxu0 %v49
    %282 = vmatpush.msra.mxu0 %v43
    %283 = vmatpush.msra.mxu0 %v37
    %284 = vmatpush.msra.mxu0 %v31
    %285 = vmatmul.f32.gmra.mxu0 0.0
    %v286 = vpop.f32.mrf.mxu0
    %v287 = vadd.f32 0.0, %v286
    %288 = vdwg.mxu0
    %289 = vmatpush.msra.mxu0 %v217
    %290 = vmatpush.msra.mxu0 %v211
    %291 = vmatpush.msra.mxu0 %v205
    %292 = vmatpush.msra.mxu0 %v199
    %293 = vmatpush.msra.mxu0 %v193
    %294 = vmatpush.msra.mxu0 %v187
    %295 = vmatpush.msra.mxu0 %v181
    %296 = vmatpush.msra.mxu0 %v175
    %297 = vmatpush.msra.mxu0 %v169
    %298 = vmatpush.msra.mxu0 %v163
    %299 = vmatpush.msra.mxu0 %v157
    %300 = vmatpush.msra.mxu0 %v151
    %301 = vmatpush.msra.mxu0 %v145
    %302 = vmatpush.msra.mxu0 %v139
    %303 = vmatpush.msra.mxu0 %v133
    %304 = vmatpush.msra.mxu0 %v127
    %305 = vmatmul.f32.gmra.mxu0 0.0
    %v306 = vpop.f32.mrf.mxu0
    %v307 = vadd.f32 %v287, %v306
    %308 = vdwg.mxu0
    %309 = vmatpush.msra.mxu0 %v122
    %310 = vmatpush.msra.mxu0 %v116
    %311 = vmatpush.msra.mxu0 %v110
    %312 = vmatpush.msra.mxu0 %v104
    %313 = vmatpush.msra.mxu0 %v98
    %314 = vmatpush.msra.mxu0 %v92
    %315 = vmatpush.msra.mxu0 %v86
    %316 = vmatpush.msra.mxu0 %v80
    %317 = vmatpush.msra.mxu0 %v74
    %318 = vmatpush.msra.mxu0 %v68
    %319 = vmatpush.msra.mxu0 %v62
    %320 = vmatpush.msra.mxu0 %v56
    %321 = vmatpush.msra.mxu0 %v50
    %322 = vmatpush.msra.mxu0 %v44
    %323 = vmatpush.msra.mxu0 %v38
    %324 = vmatpush.msra.mxu0 %v32
    %325 = vmatmul.f32.gmra.mxu0 0.0
    %v326 = vpop.f32.mrf.mxu0
    %v327 = vadd.f32 0.0, %v326
    %328 = vdwg.mxu0
    %329 = vmatpush.msra.mxu0 %v218
    %330 = vmatpush.msra.mxu0 %v212
    %331 = vmatpush.msra.mxu0 %v206
    %332 = vmatpush.msra.mxu0 %v200
    %333 = vmatpush.msra.mxu0 %v194
    %334 = vmatpush.msra.mxu0 %v188
    %335 = vmatpush.msra.mxu0 %v182
    %336 = vmatpush.msra.mxu0 %v176
    %337 = vmatpush.msra.mxu0 %v170
    %338 = vmatpush.msra.mxu0 %v164
    %339 = vmatpush.msra.mxu0 %v158
    %340 = vmatpush.msra.mxu0 %v152
    %341 = vmatpush.msra.mxu0 %v146
    %342 = vmatpush.msra.mxu0 %v140
    %343 = vmatpush.msra.mxu0 %v134
    %344 = vmatpush.msra.mxu0 %v128
    %345 = vmatmul.f32.gmra.mxu0 0.0
    %v346 = vpop.f32.mrf.mxu0
    %v347 = vadd.f32 %v327, %v346
    %348 = vdwg.mxu0
    %349 = vmatpush.msra.mxu0 %v123
    %350 = vmatpush.msra.mxu0 %v117
    %351 = vmatpush.msra.mxu0 %v111
    %352 = vmatpush.msra.mxu0 %v105
    %353 = vmatpush.msra.mxu0 %v99
    %354 = vmatpush.msra.mxu0 %v93
    %355 = vmatpush.msra.mxu0 %v87
    %356 = vmatpush.msra.mxu0 %v81
    %357 = vmatpush.msra.mxu0 %v75
    %358 = vmatpush.msra.mxu0 %v69
    %359 = vmatpush.msra.mxu0 %v63
    %360 = vmatpush.msra.mxu0 %v57
    %361 = vmatpush.msra.mxu0 %v51
    %362 = vmatpush.msra.mxu0 %v45
    %363 = vmatpush.msra.mxu0 %v39
    %364 = vmatpush.msra.mxu0 %v33
    %365 = vmatmul.f32.gmra.mxu0 0.0
    %v366 = vpop.f32.mrf.mxu0
    %v367 = vadd.f32 0.0, %v366
    %368 = vdwg.mxu0
    %369 = vmatpush.msra.mxu0 %v219
    %370 = vmatpush.msra.mxu0 %v213
    %371 = vmatpush.msra.mxu0 %v207
    %372 = vmatpush.msra.mxu0 %v201
    %373 = vmatpush.msra.mxu0 %v195
    %374 = vmatpush.msra.mxu0 %v189
    %375 = vmatpush.msra.mxu0 %v183
    %376 = vmatpush.msra.mxu0 %v177
    %377 = vmatpush.msra.mxu0 %v171
    %378 = vmatpush.msra.mxu0 %v165
    %379 = vmatpush.msra.mxu0 %v159
    %380 = vmatpush.msra.mxu0 %v153
    %381 = vmatpush.msra.mxu0 %v147
    %382 = vmatpush.msra.mxu0 %v141
    %383 = vmatpush.msra.mxu0 %v135
    %384 = vmatpush.msra.mxu0 %v129
    %385 = vmatmul.f32.gmra.mxu0 0.0
    %v386 = vpop.f32.mrf.mxu0
    %v387 = vadd.f32 %v367, %v386
    %388 = vdwg.mxu0
    %389 = vmatpush.msra.mxu0 %v124
    %390 = vmatpush.msra.mxu0 %v118
    %391 = vmatpush.msra.mxu0 %v112
    %392 = vmatpush.msra.mxu0 %v106
    %393 = vmatpush.msra.mxu0 %v100
    %394 = vmatpush.msra.mxu0 %v94
    %395 = vmatpush.msra.mxu0 %v88
    %396 = vmatpush.msra.mxu0 %v82
    %397 = vmatpush.msra.mxu0 %v76
    %398 = vmatpush.msra.mxu0 %v70
    %399 = vmatpush.msra.mxu0 %v64
    %400 = vmatpush.msra.mxu0 %v58
    %401 = vmatpush.msra.mxu0 %v52
    %402 = vmatpush.msra.mxu0 %v46
    %403 = vmatpush.msra.mxu0 %v40
    %404 = vmatpush.msra.mxu0 %v34
    %405 = vmatmul.f32.gmra.mxu0 0.0
    %v406 = vpop.f32.mrf.mxu0
    %v407 = vadd.f32 0.0, %v406
    %408 = vdwg.mxu0
    %409 = vmatpush.msra.mxu0 %v220
    %410 = vmatpush.msra.mxu0 %v214
    %411 = vmatpush.msra.mxu0 %v208
    %412 = vmatpush.msra.mxu0 %v202
    %413 = vmatpush.msra.mxu0 %v196
    %414 = vmatpush.msra.mxu0 %v190
    %415 = vmatpush.msra.mxu0 %v184
    %416 = vmatpush.msra.mxu0 %v178
    %417 = vmatpush.msra.mxu0 %v172
    %418 = vmatpush.msra.mxu0 %v166
    %419 = vmatpush.msra.mxu0 %v160
    %420 = vmatpush.msra.mxu0 %v154
    %421 = vmatpush.msra.mxu0 %v148
    %422 = vmatpush.msra.mxu0 %v142
    %423 = vmatpush.msra.mxu0 %v136
    %424 = vmatpush.msra.mxu0 %v130
    %425 = vmatmul.f32.gmra.mxu0 0.0
    %v426 = vpop.f32.mrf.mxu0
    %v427 = vadd.f32 %v407, %v426
    %428 = vdwg.mxu0
    %429 = vmatpush.msra.mxu0 %v125
    %430 = vmatpush.msra.mxu0 %v119
    %431 = vmatpush.msra.mxu0 %v113
    %432 = vmatpush.msra.mxu0 %v107
    %433 = vmatpush.msra.mxu0 %v101
    %434 = vmatpush.msra.mxu0 %v95
    %435 = vmatpush.msra.mxu0 %v89
    %436 = vmatpush.msra.mxu0 %v83
    %437 = vmatpush.msra.mxu0 %v77
    %438 = vmatpush.msra.mxu0 %v71
    %439 = vmatpush.msra.mxu0 %v65
    %440 = vmatpush.msra.mxu0 %v59
    %441 = vmatpush.msra.mxu0 %v53
    %442 = vmatpush.msra.mxu0 %v47
    %443 = vmatpush.msra.mxu0 %v41
    %444 = vmatpush.msra.mxu0 %v35
    %445 = vmatmul.f32.gmra.mxu0 0.0
    %v446 = vpop.f32.mrf.mxu0
    %v447 = vadd.f32 0.0, %v446
    %448 = vdwg.mxu0
    %449 = vmatpush.msra.mxu0 %v221
    %450 = vmatpush.msra.mxu0 %v215
    %451 = vmatpush.msra.mxu0 %v209
    %452 = vmatpush.msra.mxu0 %v203
    %453 = vmatpush.msra.mxu0 %v197
    %454 = vmatpush.msra.mxu0 %v191
    %455 = vmatpush.msra.mxu0 %v185
    %456 = vmatpush.msra.mxu0 %v179
    %457 = vmatpush.msra.mxu0 %v173
    %458 = vmatpush.msra.mxu0 %v167
    %459 = vmatpush.msra.mxu0 %v161
    %460 = vmatpush.msra.mxu0 %v155
    %461 = vmatpush.msra.mxu0 %v149
    %462 = vmatpush.msra.mxu0 %v143
    %463 = vmatpush.msra.mxu0 %v137
    %464 = vmatpush.msra.mxu0 %v131
    %465 = vmatmul.f32.gmra.mxu0 0.0
    %v466 = vpop.f32.mrf.mxu0
    %v467 = vadd.f32 %v447, %v466
    %468 = vdwg.mxu0
    %v469 = vadd.f32 %v223, %v267
    %v470 = vadd.f32 %v224, %v307
    %v471 = vadd.f32 %v225, %v347
    %v472 = vadd.f32 %v226, %v387
    %v473 = vxor.u32 %v469, 2147483648
    %v474 = vxor.u32 %v470, 2147483648
    %v475 = vxor.u32 %v471, 2147483648
    %v476 = vxor.u32 %v472, 2147483648
    %v477 = vmul.f32 %v473, 1.442695
    %v478 = vpow.pop %v477
    %v479 = vmul.f32 %v474, 1.442695
    %v480 = vpow.pop %v479
    %v481 = vmul.f32 %v475, 1.442695
    %v482 = vpow.pop %v481
    %v483 = vmul.f32 %v476, 1.442695
    %v484 = vpow.pop %v483
    %v485 = vadd.f32 %v478, 1.0
    %v486 = vadd.f32 %v480, 1.0
    %v487 = vadd.f32 %v482, 1.0
    %v488 = vadd.f32 %v484, 1.0
    %v489 = vrcp.pop %v485
    %v490 = vmul.f32 %v485, %v489
    %v491 = vsub.f32 1.0, %v490
    %v492 = vmul.f32 %v489, %v491
    %v493 = vadd.f32 %v489, %v492
    %vm494 = vweird.f32 %v485
    %vm495 = vweird.f32 %v489
    %vm496 = vmor %vm494, %vm495
    %v497 = vsel %vm496, %v489, %v493
    %v498 = vand.u32 2147483647, %v485
    %vm499 = vcmp.eq.f32.partialorder %v498, 8.507059e+37
    %v500 = vand.u32 %v485, 2147483648
    %v501 = vor.u32 1.1754944e-38, %v500
    %v502 = vsel %vm499, %v501, %v497
    %v503 = vmul.f32 1.0, %v502
    %v504 = vrcp.pop %v486
    %v505 = vmul.f32 %v486, %v504
    %v506 = vsub.f32 1.0, %v505
    %v507 = vmul.f32 %v504, %v506
    %v508 = vadd.f32 %v504, %v507
    %vm509 = vweird.f32 %v486
    %vm510 = vweird.f32 %v504
    %vm511 = vmor %vm509, %vm510
    %v512 = vsel %vm511, %v504, %v508
    %v513 = vand.u32 2147483647, %v486
    %vm514 = vcmp.eq.f32.partialorder %v513, 8.507059e+37
    %v515 = vand.u32 %v486, 2147483648
    %v516 = vor.u32 1.1754944e-38, %v515
    %v517 = vsel %vm514, %v516, %v512
    %v518 = vmul.f32 1.0, %v517
    %v519 = vrcp.pop %v487
    %v520 = vmul.f32 %v487, %v519
    %v521 = vsub.f32 1.0, %v520
    %v522 = vmul.f32 %v519, %v521
    %v523 = vadd.f32 %v519, %v522
    %vm524 = vweird.f32 %v487
    %vm525 = vweird.f32 %v519
    %vm526 = vmor %vm524, %vm525
    %v527 = vsel %vm526, %v519, %v523
    %v528 = vand.u32 2147483647, %v487
    %vm529 = vcmp.eq.f32.partialorder %v528, 8.507059e+37
    %v530 = vand.u32 %v487, 2147483648
    %v531 = vor.u32 1.1754944e-38, %v530
    %v532 = vsel %vm529, %v531, %v527
    %v533 = vmul.f32 1.0, %v532
    %v534 = vrcp.pop %v488
    %v535 = vmul.f32 %v488, %v534
    %v536 = vsub.f32 1.0, %v535
    %v537 = vmul.f32 %v534, %v536
    %v538 = vadd.f32 %v534, %v537
    %vm539 = vweird.f32 %v488
    %vm540 = vweird.f32 %v534
    %vm541 = vmor %vm539, %vm540
    %v542 = vsel %vm541, %v534, %v538
    %v543 = vand.u32 2147483647, %v488
    %vm544 = vcmp.eq.f32.partialorder %v543, 8.507059e+37
    %v545 = vand.u32 %v488, 2147483648
    %v546 = vor.u32 1.1754944e-38, %v545
    %v547 = vsel %vm544, %v546, %v542
    %v548 = vmul.f32 1.0, %v547
    %v550 = vperm.slane %v222, 0
    %v551 = vperm.slane %v222, 1
    %v554 = vadd.f32 %v427, %v550
    %v555 = vadd.f32 %v467, %v551
    %v556 = vmul.f32 %v503, %v554
    %v557 = vmul.f32 %v518, %v555
    %v558 = vadd.f32 %v227, %v556
    %v559 = vadd.f32 %v228, %v557
    %v560 = vtanh.pop %v558
    %v561 = vtanh.pop %v559
    %v562 = vsub.f32 1.0, %v533
    %v563 = vsub.f32 1.0, %v548
    %v564 = vmul.f32 %v562, %v560
    %v565 = vmul.f32 %v563, %v561
    %v566 = vmul.f32 %v533, 0.0
    %v567 = vmul.f32 %v548, 0.0
    %v568 = vadd.f32 %v564, %v566
    %v569 = vadd.f32 %v565, %v567
    %570 = vst [vmem:[%s3] sm:$0xff] %v568
    %571 = vst [vmem:[%s3 + $0x8] sm:$0xff] %v569
    %s572 = scalar_lea.vmem %s0, 48
    %v573 = vld [vmem:[%s572] sm:$0xff]
    %v574 = vld [vmem:[%s572 + $0x8] sm:$0xff]
    %v575 = vld [vmem:[%s572 + $0x10] sm:$0xff]
    %v576 = vld [vmem:[%s572 + $0x18] sm:$0xff]
    %v577 = vld [vmem:[%s572 + $0x20] sm:$0xff]
    %v578 = vld [vmem:[%s572 + $0x28] sm:$0xff]
    %579 = vmatpush.msra.mxu0 %v120
    %580 = vmatpush.msra.mxu0 %v114
    %581 = vmatpush.msra.mxu0 %v108
    %582 = vmatpush.msra.mxu0 %v102
    %583 = vmatpush.msra.mxu0 %v96
    %584 = vmatpush.msra.mxu0 %v90
    %585 = vmatpush.msra.mxu0 %v84
    %586 = vmatpush.msra.mxu0 %v78
    %587 = vmatpush.msra.mxu0 %v72
    %588 = vmatpush.msra.mxu0 %v66
    %589 = vmatpush.msra.mxu0 %v60
    %590 = vmatpush.msra.mxu0 %v54
    %591 = vmatpush.msra.mxu0 %v48
    %592 = vmatpush.msra.mxu0 %v42
    %593 = vmatpush.msra.mxu0 %v36
    %594 = vmatpush.msra.mxu0 %v30
    %595 = vmatmul.f32.gmra.mxu0 %v568
    %v596 = vpop.f32.mrf.mxu0
    %v597 = vadd.f32 0.0, %v596
    %598 = vdwg.mxu0
    %599 = vmatpush.msra.mxu0 %v216
    %600 = vmatpush.msra.mxu0 %v210
    %601 = vmatpush.msra.mxu0 %v204
    %602 = vmatpush.msra.mxu0 %v198
    %603 = vmatpush.msra.mxu0 %v192
    %604 = vmatpush.msra.mxu0 %v186
    %605 = vmatpush.msra.mxu0 %v180
    %606 = vmatpush.msra.mxu0 %v174
    %607 = vmatpush.msra.mxu0 %v168
    %608 = vmatpush.msra.mxu0 %v162
    %609 = vmatpush.msra.mxu0 %v156
    %610 = vmatpush.msra.mxu0 %v150
    %611 = vmatpush.msra.mxu0 %v144
    %612 = vmatpush.msra.mxu0 %v138
    %613 = vmatpush.msra.mxu0 %v132
    %614 = vmatpush.msra.mxu0 %v126
    %615 = vmatmul.f32.gmra.mxu0 %v569
    %v616 = vpop.f32.mrf.mxu0
    %v617 = vadd.f32 %v597, %v616
    %618 = vdwg.mxu0
    %619 = vmatpush.msra.mxu0 %v121
    %620 = vmatpush.msra.mxu0 %v115
    %621 = vmatpush.msra.mxu0 %v109
    %622 = vmatpush.msra.mxu0 %v103
    %623 = vmatpush.msra.mxu0 %v97
    %624 = vmatpush.msra.mxu0 %v91
    %625 = vmatpush.msra.mxu0 %v85
    %626 = vmatpush.msra.mxu0 %v79
    %627 = vmatpush.msra.mxu0 %v73
    %628 = vmatpush.msra.mxu0 %v67
    %629 = vmatpush.msra.mxu0 %v61
    %630 = vmatpush.msra.mxu0 %v55
    %631 = vmatpush.msra.mxu0 %v49
    %632 = vmatpush.msra.mxu0 %v43
    %633 = vmatpush.msra.mxu0 %v37
    %634 = vmatpush.msra.mxu0 %v31
    %635 = vmatmul.f32.gmra.mxu0 %v568
    %v636 = vpop.f32.mrf.mxu0
    %v637 = vadd.f32 0.0, %v636
    %638 = vdwg.mxu0
    %639 = vmatpush.msra.mxu0 %v217
    %640 = vmatpush.msra.mxu0 %v211
    %641 = vmatpush.msra.mxu0 %v205
    %642 = vmatpush.msra.mxu0 %v199
    %643 = vmatpush.msra.mxu0 %v193
    %644 = vmatpush.msra.mxu0 %v187
    %645 = vmatpush.msra.mxu0 %v181
    %646 = vmatpush.msra.mxu0 %v175
    %647 = vmatpush.msra.mxu0 %v169
    %648 = vmatpush.msra.mxu0 %v163
    %649 = vmatpush.msra.mxu0 %v157
    %650 = vmatpush.msra.mxu0 %v151
    %651 = vmatpush.msra.mxu0 %v145
    %652 = vmatpush.msra.mxu0 %v139
    %653 = vmatpush.msra.mxu0 %v133
    %654 = vmatpush.msra.mxu0 %v127
    %655 = vmatmul.f32.gmra.mxu0 %v569
    %v656 = vpop.f32.mrf.mxu0
    %v657 = vadd.f32 %v637, %v656
    %658 = vdwg.mxu0
    %659 = vmatpush.msra.mxu0 %v122
    %660 = vmatpush.msra.mxu0 %v116
    %661 = vmatpush.msra.mxu0 %v110
    %662 = vmatpush.msra.mxu0 %v104
    %663 = vmatpush.msra.mxu0 %v98
    %664 = vmatpush.msra.mxu0 %v92
    %665 = vmatpush.msra.mxu0 %v86
    %666 = vmatpush.msra.mxu0 %v80
    %667 = vmatpush.msra.mxu0 %v74
    %668 = vmatpush.msra.mxu0 %v68
    %669 = vmatpush.msra.mxu0 %v62
    %670 = vmatpush.msra.mxu0 %v56
    %671 = vmatpush.msra.mxu0 %v50
    %672 = vmatpush.msra.mxu0 %v44
    %673 = vmatpush.msra.mxu0 %v38
    %674 = vmatpush.msra.mxu0 %v32
    %675 = vmatmul.f32.gmra.mxu0 %v568
    %v676 = vpop.f32.mrf.mxu0
    %v677 = vadd.f32 0.0, %v676
    %678 = vdwg.mxu0
    %679 = vmatpush.msra.mxu0 %v218
    %680 = vmatpush.msra.mxu0 %v212
    %681 = vmatpush.msra.mxu0 %v206
    %682 = vmatpush.msra.mxu0 %v200
    %683 = vmatpush.msra.mxu0 %v194
    %684 = vmatpush.msra.mxu0 %v188
    %685 = vmatpush.msra.mxu0 %v182
    %686 = vmatpush.msra.mxu0 %v176
    %687 = vmatpush.msra.mxu0 %v170
    %688 = vmatpush.msra.mxu0 %v164
    %689 = vmatpush.msra.mxu0 %v158
    %690 = vmatpush.msra.mxu0 %v152
    %691 = vmatpush.msra.mxu0 %v146
    %692 = vmatpush.msra.mxu0 %v140
    %693 = vmatpush.msra.mxu0 %v134
    %694 = vmatpush.msra.mxu0 %v128
    %695 = vmatmul.f32.gmra.mxu0 %v569
    %v696 = vpop.f32.mrf.mxu0
    %v697 = vadd.f32 %v677, %v696
    %698 = vdwg.mxu0
    %699 = vmatpush.msra.mxu0 %v123
    %700 = vmatpush.msra.mxu0 %v117
    %701 = vmatpush.msra.mxu0 %v111
    %702 = vmatpush.msra.mxu0 %v105
    %703 = vmatpush.msra.mxu0 %v99
    %704 = vmatpush.msra.mxu0 %v93
    %705 = vmatpush.msra.mxu0 %v87
    %706 = vmatpush.msra.mxu0 %v81
    %707 = vmatpush.msra.mxu0 %v75
    %708 = vmatpush.msra.mxu0 %v69
    %709 = vmatpush.msra.mxu0 %v63
    %710 = vmatpush.msra.mxu0 %v57
    %711 = vmatpush.msra.mxu0 %v51
    %712 = vmatpush.msra.mxu0 %v45
    %713 = vmatpush.msra.mxu0 %v39
    %714 = vmatpush.msra.mxu0 %v33
    %715 = vmatmul.f32.gmra.mxu0 %v568
    %v716 = vpop.f32.mrf.mxu0
    %v717 = vadd.f32 0.0, %v716
    %718 = vdwg.mxu0
    %719 = vmatpush.msra.mxu0 %v219
    %720 = vmatpush.msra.mxu0 %v213
    %721 = vmatpush.msra.mxu0 %v207
    %722 = vmatpush.msra.mxu0 %v201
    %723 = vmatpush.msra.mxu0 %v195
    %724 = vmatpush.msra.mxu0 %v189
    %725 = vmatpush.msra.mxu0 %v183
    %726 = vmatpush.msra.mxu0 %v177
    %727 = vmatpush.msra.mxu0 %v171
    %728 = vmatpush.msra.mxu0 %v165
    %729 = vmatpush.msra.mxu0 %v159
    %730 = vmatpush.msra.mxu0 %v153
    %731 = vmatpush.msra.mxu0 %v147
    %732 = vmatpush.msra.mxu0 %v141
    %733 = vmatpush.msra.mxu0 %v135
    %734 = vmatpush.msra.mxu0 %v129
    %735 = vmatmul.f32.gmra.mxu0 %v569
    %v736 = vpop.f32.mrf.mxu0
    %v737 = vadd.f32 %v717, %v736
    %738 = vdwg.mxu0
    %739 = vmatpush.msra.mxu0 %v124
    %740 = vmatpush.msra.mxu0 %v118
    %741 = vmatpush.msra.mxu0 %v112
    %742 = vmatpush.msra.mxu0 %v106
    %743 = vmatpush.msra.mxu0 %v100
    %744 = vmatpush.msra.mxu0 %v94
    %745 = vmatpush.msra.mxu0 %v88
    %746 = vmatpush.msra.mxu0 %v82
    %747 = vmatpush.msra.mxu0 %v76
    %748 = vmatpush.msra.mxu0 %v70
    %749 = vmatpush.msra.mxu0 %v64
    %750 = vmatpush.msra.mxu0 %v58
    %751 = vmatpush.msra.mxu0 %v52
    %752 = vmatpush.msra.mxu0 %v46
    %753 = vmatpush.msra.mxu0 %v40
    %754 = vmatpush.msra.mxu0 %v34
    %755 = vmatmul.f32.gmra.mxu0 %v568
    %v756 = vpop.f32.mrf.mxu0
    %v757 = vadd.f32 0.0, %v756
    %758 = vdwg.mxu0
    %759 = vmatpush.msra.mxu0 %v220
    %760 = vmatpush.msra.mxu0 %v214
    %761 = vmatpush.msra.mxu0 %v208
    %762 = vmatpush.msra.mxu0 %v202
    %763 = vmatpush.msra.mxu0 %v196
    %764 = vmatpush.msra.mxu0 %v190
    %765 = vmatpush.msra.mxu0 %v184
    %766 = vmatpush.msra.mxu0 %v178
    %767 = vmatpush.msra.mxu0 %v172
    %768 = vmatpush.msra.mxu0 %v166
    %769 = vmatpush.msra.mxu0 %v160
    %770 = vmatpush.msra.mxu0 %v154
    %771 = vmatpush.msra.mxu0 %v148
    %772 = vmatpush.msra.mxu0 %v142
    %773 = vmatpush.msra.mxu0 %v136
    %774 = vmatpush.msra.mxu0 %v130
    %775 = vmatmul.f32.gmra.mxu0 %v569
    %v776 = vpop.f32.mrf.mxu0
    %v777 = vadd.f32 %v757, %v776
    %778 = vdwg.mxu0
    %779 = vmatpush.msra.mxu0 %v125
    %780 = vmatpush.msra.mxu0 %v119
    %781 = vmatpush.msra.mxu0 %v113
    %782 = vmatpush.msra.mxu0 %v107
    %783 = vmatpush.msra.mxu0 %v101
    %784 = vmatpush.msra.mxu0 %v95
    %785 = vmatpush.msra.mxu0 %v89
    %786 = vmatpush.msra.mxu0 %v83
    %787 = vmatpush.msra.mxu0 %v77
    %788 = vmatpush.msra.mxu0 %v71
    %789 = vmatpush.msra.mxu0 %v65
    %790 = vmatpush.msra.mxu0 %v59
    %791 = vmatpush.msra.mxu0 %v53
    %792 = vmatpush.msra.mxu0 %v47
    %793 = vmatpush.msra.mxu0 %v41
    %794 = vmatpush.msra.mxu0 %v35
    %795 = vmatmul.f32.gmra.mxu0 %v568
    %v796 = vpop.f32.mrf.mxu0
    %v797 = vadd.f32 0.0, %v796
    %798 = vdwg.mxu0
    %799 = vmatpush.msra.mxu0 %v221
    %800 = vmatpush.msra.mxu0 %v215
    %801 = vmatpush.msra.mxu0 %v209
    %802 = vmatpush.msra.mxu0 %v203
    %803 = vmatpush.msra.mxu0 %v197
    %804 = vmatpush.msra.mxu0 %v191
    %805 = vmatpush.msra.mxu0 %v185
    %806 = vmatpush.msra.mxu0 %v179
    %807 = vmatpush.msra.mxu0 %v173
    %808 = vmatpush.msra.mxu0 %v167
    %809 = vmatpush.msra.mxu0 %v161
    %810 = vmatpush.msra.mxu0 %v155
    %811 = vmatpush.msra.mxu0 %v149
    %812 = vmatpush.msra.mxu0 %v143
    %813 = vmatpush.msra.mxu0 %v137
    %814 = vmatpush.msra.mxu0 %v131
    %815 = vmatmul.f32.gmra.mxu0 %v569
    %v816 = vpop.f32.mrf.mxu0
    %v817 = vadd.f32 %v797, %v816
    %818 = vdwg.mxu0
    %v819 = vadd.f32 %v573, %v617
    %v820 = vadd.f32 %v574, %v657
    %v821 = vadd.f32 %v575, %v697
    %v822 = vadd.f32 %v576, %v737
    %v823 = vxor.u32 %v819, 2147483648
    %v824 = vxor.u32 %v820, 2147483648
    %v825 = vxor.u32 %v821, 2147483648
    %v826 = vxor.u32 %v822, 2147483648
    %v827 = vmul.f32 %v823, 1.442695
    %v828 = vpow.pop %v827
    %v829 = vmul.f32 %v824, 1.442695
    %v830 = vpow.pop %v829
    %v831 = vmul.f32 %v825, 1.442695
    %v832 = vpow.pop %v831
    %v833 = vmul.f32 %v826, 1.442695
    %v834 = vpow.pop %v833
    %v835 = vadd.f32 %v828, 1.0
    %v836 = vadd.f32 %v830, 1.0
    %v837 = vadd.f32 %v832, 1.0
    %v838 = vadd.f32 %v834, 1.0
    %v839 = vrcp.pop %v835
    %v840 = vmul.f32 %v835, %v839
    %v841 = vsub.f32 1.0, %v840
    %v842 = vmul.f32 %v839, %v841
    %v843 = vadd.f32 %v839, %v842
    %vm844 = vweird.f32 %v835
    %vm845 = vweird.f32 %v839
    %vm846 = vmor %vm844, %vm845
    %v847 = vsel %vm846, %v839, %v843
    %v848 = vand.u32 2147483647, %v835
    %vm849 = vcmp.eq.f32.partialorder %v848, 8.507059e+37
    %v850 = vand.u32 %v835, 2147483648
    %v851 = vor.u32 1.1754944e-38, %v850
    %v852 = vsel %vm849, %v851, %v847
    %v853 = vmul.f32 1.0, %v852
    %v854 = vrcp.pop %v836
    %v855 = vmul.f32 %v836, %v854
    %v856 = vsub.f32 1.0, %v855
    %v857 = vmul.f32 %v854, %v856
    %v858 = vadd.f32 %v854, %v857
    %vm859 = vweird.f32 %v836
    %vm860 = vweird.f32 %v854
    %vm861 = vmor %vm859, %vm860
    %v862 = vsel %vm861, %v854, %v858
    %v863 = vand.u32 2147483647, %v836
    %vm864 = vcmp.eq.f32.partialorder %v863, 8.507059e+37
    %v865 = vand.u32 %v836, 2147483648
    %v866 = vor.u32 1.1754944e-38, %v865
    %v867 = vsel %vm864, %v866, %v862
    %v868 = vmul.f32 1.0, %v867
    %v869 = vrcp.pop %v837
    %v870 = vmul.f32 %v837, %v869
    %v871 = vsub.f32 1.0, %v870
    %v872 = vmul.f32 %v869, %v871
    %v873 = vadd.f32 %v869, %v872
    %vm874 = vweird.f32 %v837
    %vm875 = vweird.f32 %v869
    %vm876 = vmor %vm874, %vm875
    %v877 = vsel %vm876, %v869, %v873
    %v878 = vand.u32 2147483647, %v837
    %vm879 = vcmp.eq.f32.partialorder %v878, 8.507059e+37
    %v880 = vand.u32 %v837, 2147483648
    %v881 = vor.u32 1.1754944e-38, %v880
    %v882 = vsel %vm879, %v881, %v877
    %v883 = vmul.f32 1.0, %v882
    %v884 = vrcp.pop %v838
    %v885 = vmul.f32 %v838, %v884
    %v886 = vsub.f32 1.0, %v885
    %v887 = vmul.f32 %v884, %v886
    %v888 = vadd.f32 %v884, %v887
    %vm889 = vweird.f32 %v838
    %vm890 = vweird.f32 %v884
    %vm891 = vmor %vm889, %vm890
    %v892 = vsel %vm891, %v884, %v888
    %v893 = vand.u32 2147483647, %v838
    %vm894 = vcmp.eq.f32.partialorder %v893, 8.507059e+37
    %v895 = vand.u32 %v838, 2147483648
    %v896 = vor.u32 1.1754944e-38, %v895
    %v897 = vsel %vm894, %v896, %v892
    %v898 = vmul.f32 1.0, %v897
    %v899 = vadd.f32 %v777, %v550
    %v900 = vadd.f32 %v817, %v551
    %v901 = vmul.f32 %v853, %v899
    %v902 = vmul.f32 %v868, %v900
    %v903 = vadd.f32 %v577, %v901
    %v904 = vadd.f32 %v578, %v902
    %v905 = vtanh.pop %v903
    %v906 = vtanh.pop %v904
    %v907 = vsub.f32 1.0, %v883
    %v908 = vsub.f32 1.0, %v898
    %v909 = vmul.f32 %v907, %v905
    %v910 = vmul.f32 %v908, %v906
    %v911 = vmul.f32 %v883, %v568
    %v912 = vmul.f32 %v898, %v569
    %v913 = vadd.f32 %v909, %v911
    %v914 = vadd.f32 %v910, %v912
    %s915 = scalar_lea.vmem %s3, 16
    %916 = vst [vmem:[%s915] sm:$0xff] %v913
    %917 = vst [vmem:[%s915 + $0x8] sm:$0xff] %v914
    %s918 = scalar_lea.vmem %s0, 96
    %v919 = vld [vmem:[%s918] sm:$0xff]
    %v920 = vld [vmem:[%s918 + $0x8] sm:$0xff]
    %v921 = vld [vmem:[%s918 + $0x10] sm:$0xff]
    %v922 = vld [vmem:[%s918 + $0x18] sm:$0xff]
    %v923 = vld [vmem:[%s918 + $0x20] sm:$0xff]
    %v924 = vld [vmem:[%s918 + $0x28] sm:$0xff]
    %925 = vmatpush.msra.mxu0 %v120
    %926 = vmatpush.msra.mxu0 %v114
    %927 = vmatpush.msra.mxu0 %v108
    %928 = vmatpush.msra.mxu0 %v102
    %929 = vmatpush.msra.mxu0 %v96
    %930 = vmatpush.msra.mxu0 %v90
    %931 = vmatpush.msra.mxu0 %v84
    %932 = vmatpush.msra.mxu0 %v78
    %933 = vmatpush.msra.mxu0 %v72
    %934 = vmatpush.msra.mxu0 %v66
    %935 = vmatpush.msra.mxu0 %v60
    %936 = vmatpush.msra.mxu0 %v54
    %937 = vmatpush.msra.mxu0 %v48
    %938 = vmatpush.msra.mxu0 %v42
    %939 = vmatpush.msra.mxu0 %v36
    %940 = vmatpush.msra.mxu0 %v30
    %941 = vmatmul.f32.gmra.mxu0 %v913
    %v942 = vpop.f32.mrf.mxu0
    %v943 = vadd.f32 0.0, %v942
    %944 = vdwg.mxu0
    %945 = vmatpush.msra.mxu0 %v216
    %946 = vmatpush.msra.mxu0 %v210
    %947 = vmatpush.msra.mxu0 %v204
    %948 = vmatpush.msra.mxu0 %v198
    %949 = vmatpush.msra.mxu0 %v192
    %950 = vmatpush.msra.mxu0 %v186
    %951 = vmatpush.msra.mxu0 %v180
    %952 = vmatpush.msra.mxu0 %v174
    %953 = vmatpush.msra.mxu0 %v168
    %954 = vmatpush.msra.mxu0 %v162
    %955 = vmatpush.msra.mxu0 %v156
    %956 = vmatpush.msra.mxu0 %v150
    %957 = vmatpush.msra.mxu0 %v144
    %958 = vmatpush.msra.mxu0 %v138
    %959 = vmatpush.msra.mxu0 %v132
    %960 = vmatpush.msra.mxu0 %v126
    %961 = vmatmul.f32.gmra.mxu0 %v914
    %v962 = vpop.f32.mrf.mxu0
    %v963 = vadd.f32 %v943, %v962
    %964 = vdwg.mxu0
    %965 = vmatpush.msra.mxu0 %v121
    %966 = vmatpush.msra.mxu0 %v115
    %967 = vmatpush.msra.mxu0 %v109
    %968 = vmatpush.msra.mxu0 %v103
    %969 = vmatpush.msra.mxu0 %v97
    %970 = vmatpush.msra.mxu0 %v91
    %971 = vmatpush.msra.mxu0 %v85
    %972 = vmatpush.msra.mxu0 %v79
    %973 = vmatpush.msra.mxu0 %v73
    %974 = vmatpush.msra.mxu0 %v67
    %975 = vmatpush.msra.mxu0 %v61
    %976 = vmatpush.msra.mxu0 %v55
    %977 = vmatpush.msra.mxu0 %v49
    %978 = vmatpush.msra.mxu0 %v43
    %979 = vmatpush.msra.mxu0 %v37
    %980 = vmatpush.msra.mxu0 %v31
    %981 = vmatmul.f32.gmra.mxu0 %v913
    %v982 = vpop.f32.mrf.mxu0
    %v983 = vadd.f32 0.0, %v982
    %984 = vdwg.mxu0
    %985 = vmatpush.msra.mxu0 %v217
    %986 = vmatpush.msra.mxu0 %v211
    %987 = vmatpush.msra.mxu0 %v205
    %988 = vmatpush.msra.mxu0 %v199
    %989 = vmatpush.msra.mxu0 %v193
    %990 = vmatpush.msra.mxu0 %v187
    %991 = vmatpush.msra.mxu0 %v181
    %992 = vmatpush.msra.mxu0 %v175
    %993 = vmatpush.msra.mxu0 %v169
    %994 = vmatpush.msra.mxu0 %v163
    %995 = vmatpush.msra.mxu0 %v157
    %996 = vmatpush.msra.mxu0 %v151
    %997 = vmatpush.msra.mxu0 %v145
    %998 = vmatpush.msra.mxu0 %v139
    %999 = vmatpush.msra.mxu0 %v133
    %1000 = vmatpush.msra.mxu0 %v127
    %1001 = vmatmul.f32.gmra.mxu0 %v914
    %v1002 = vpop.f32.mrf.mxu0
    %v1003 = vadd.f32 %v983, %v1002
    %1004 = vdwg.mxu0
    %1005 = vmatpush.msra.mxu0 %v122
    %1006 = vmatpush.msra.mxu0 %v116
    %1007 = vmatpush.msra.mxu0 %v110
    %1008 = vmatpush.msra.mxu0 %v104
    %1009 = vmatpush.msra.mxu0 %v98
    %1010 = vmatpush.msra.mxu0 %v92
    %1011 = vmatpush.msra.mxu0 %v86
    %1012 = vmatpush.msra.mxu0 %v80
    %1013 = vmatpush.msra.mxu0 %v74
    %1014 = vmatpush.msra.mxu0 %v68
    %1015 = vmatpush.msra.mxu0 %v62
    %1016 = vmatpush.msra.mxu0 %v56
    %1017 = vmatpush.msra.mxu0 %v50
    %1018 = vmatpush.msra.mxu0 %v44
    %1019 = vmatpush.msra.mxu0 %v38
    %1020 = vmatpush.msra.mxu0 %v32
    %1021 = vmatmul.f32.gmra.mxu0 %v913
    %v1022 = vpop.f32.mrf.mxu0
    %v1023 = vadd.f32 0.0, %v1022
    %1024 = vdwg.mxu0
    %1025 = vmatpush.msra.mxu0 %v218
    %1026 = vmatpush.msra.mxu0 %v212
    %1027 = vmatpush.msra.mxu0 %v206
    %1028 = vmatpush.msra.mxu0 %v200
    %1029 = vmatpush.msra.mxu0 %v194
    %1030 = vmatpush.msra.mxu0 %v188
    %1031 = vmatpush.msra.mxu0 %v182
    %1032 = vmatpush.msra.mxu0 %v176
    %1033 = vmatpush.msra.mxu0 %v170
    %1034 = vmatpush.msra.mxu0 %v164
    %1035 = vmatpush.msra.mxu0 %v158
    %1036 = vmatpush.msra.mxu0 %v152
    %1037 = vmatpush.msra.mxu0 %v146
    %1038 = vmatpush.msra.mxu0 %v140
    %1039 = vmatpush.msra.mxu0 %v134
    %1040 = vmatpush.msra.mxu0 %v128
    %1041 = vmatmul.f32.gmra.mxu0 %v914
    %v1042 = vpop.f32.mrf.mxu0
    %v1043 = vadd.f32 %v1023, %v1042
    %1044 = vdwg.mxu0
    %1045 = vmatpush.msra.mxu0 %v123
    %1046 = vmatpush.msra.mxu0 %v117
    %1047 = vmatpush.msra.mxu0 %v111
    %1048 = vmatpush.msra.mxu0 %v105
    %1049 = vmatpush.msra.mxu0 %v99
    %1050 = vmatpush.msra.mxu0 %v93
    %1051 = vmatpush.msra.mxu0 %v87
    %1052 = vmatpush.msra.mxu0 %v81
    %1053 = vmatpush.msra.mxu0 %v75
    %1054 = vmatpush.msra.mxu0 %v69
    %1055 = vmatpush.msra.mxu0 %v63
    %1056 = vmatpush.msra.mxu0 %v57
    %1057 = vmatpush.msra.mxu0 %v51
    %1058 = vmatpush.msra.mxu0 %v45
    %1059 = vmatpush.msra.mxu0 %v39
    %1060 = vmatpush.msra.mxu0 %v33
    %1061 = vmatmul.f32.gmra.mxu0 %v913
    %v1062 = vpop.f32.mrf.mxu0
    %v1063 = vadd.f32 0.0, %v1062
    %1064 = vdwg.mxu0
    %1065 = vmatpush.msra.mxu0 %v219
    %1066 = vmatpush.msra.mxu0 %v213
    %1067 = vmatpush.msra.mxu0 %v207
    %1068 = vmatpush.msra.mxu0 %v201
    %1069 = vmatpush.msra.mxu0 %v195
    %1070 = vmatpush.msra.mxu0 %v189
    %1071 = vmatpush.msra.mxu0 %v183
    %1072 = vmatpush.msra.mxu0 %v177
    %1073 = vmatpush.msra.mxu0 %v171
    %1074 = vmatpush.msra.mxu0 %v165
    %1075 = vmatpush.msra.mxu0 %v159
    %1076 = vmatpush.msra.mxu0 %v153
    %1077 = vmatpush.msra.mxu0 %v147
    %1078 = vmatpush.msra.mxu0 %v141
    %1079 = vmatpush.msra.mxu0 %v135
    %1080 = vmatpush.msra.mxu0 %v129
    %1081 = vmatmul.f32.gmra.mxu0 %v914
    %v1082 = vpop.f32.mrf.mxu0
    %v1083 = vadd.f32 %v1063, %v1082
    %1084 = vdwg.mxu0
    %1085 = vmatpush.msra.mxu0 %v124
    %1086 = vmatpush.msra.mxu0 %v118
    %1087 = vmatpush.msra.mxu0 %v112
    %1088 = vmatpush.msra.mxu0 %v106
    %1089 = vmatpush.msra.mxu0 %v100
    %1090 = vmatpush.msra.mxu0 %v94
    %1091 = vmatpush.msra.mxu0 %v88
    %1092 = vmatpush.msra.mxu0 %v82
    %1093 = vmatpush.msra.mxu0 %v76
    %1094 = vmatpush.msra.mxu0 %v70
    %1095 = vmatpush.msra.mxu0 %v64
    %1096 = vmatpush.msra.mxu0 %v58
    %1097 = vmatpush.msra.mxu0 %v52
    %1098 = vmatpush.msra.mxu0 %v46
    %1099 = vmatpush.msra.mxu0 %v40
    %1100 = vmatpush.msra.mxu0 %v34
    %1101 = vmatmul.f32.gmra.mxu0 %v913
    %v1102 = vpop.f32.mrf.mxu0
    %v1103 = vadd.f32 0.0, %v1102
    %1104 = vdwg.mxu0
    %1105 = vmatpush.msra.mxu0 %v220
    %1106 = vmatpush.msra.mxu0 %v214
    %1107 = vmatpush.msra.mxu0 %v208
    %1108 = vmatpush.msra.mxu0 %v202
    %1109 = vmatpush.msra.mxu0 %v196
    %1110 = vmatpush.msra.mxu0 %v190
    %1111 = vmatpush.msra.mxu0 %v184
    %1112 = vmatpush.msra.mxu0 %v178
    %1113 = vmatpush.msra.mxu0 %v172
    %1114 = vmatpush.msra.mxu0 %v166
    %1115 = vmatpush.msra.mxu0 %v160
    %1116 = vmatpush.msra.mxu0 %v154
    %1117 = vmatpush.msra.mxu0 %v148
    %1118 = vmatpush.msra.mxu0 %v142
    %1119 = vmatpush.msra.mxu0 %v136
    %1120 = vmatpush.msra.mxu0 %v130
    %1121 = vmatmul.f32.gmra.mxu0 %v914
    %v1122 = vpop.f32.mrf.mxu0
    %v1123 = vadd.f32 %v1103, %v1122
    %1124 = vdwg.mxu0
    %1125 = vmatpush.msra.mxu0 %v125
    %1126 = vmatpush.msra.mxu0 %v119
    %1127 = vmatpush.msra.mxu0 %v113
    %1128 = vmatpush.msra.mxu0 %v107
    %1129 = vmatpush.msra.mxu0 %v101
    %1130 = vmatpush.msra.mxu0 %v95
    %1131 = vmatpush.msra.mxu0 %v89
    %1132 = vmatpush.msra.mxu0 %v83
    %1133 = vmatpush.msra.mxu0 %v77
    %1134 = vmatpush.msra.mxu0 %v71
    %1135 = vmatpush.msra.mxu0 %v65
    %1136 = vmatpush.msra.mxu0 %v59
    %1137 = vmatpush.msra.mxu0 %v53
    %1138 = vmatpush.msra.mxu0 %v47
    %1139 = vmatpush.msra.mxu0 %v41
    %1140 = vmatpush.msra.mxu0 %v35
    %1141 = vmatmul.f32.gmra.mxu0 %v913
    %v1142 = vpop.f32.mrf.mxu0
    %v1143 = vadd.f32 0.0, %v1142
    %1144 = vdwg.mxu0
    %1145 = vmatpush.msra.mxu0 %v221
    %1146 = vmatpush.msra.mxu0 %v215
    %1147 = vmatpush.msra.mxu0 %v209
    %1148 = vmatpush.msra.mxu0 %v203
    %1149 = vmatpush.msra.mxu0 %v197
    %1150 = vmatpush.msra.mxu0 %v191
    %1151 = vmatpush.msra.mxu0 %v185
    %1152 = vmatpush.msra.mxu0 %v179
    %1153 = vmatpush.msra.mxu0 %v173
    %1154 = vmatpush.msra.mxu0 %v167
    %1155 = vmatpush.msra.mxu0 %v161
    %1156 = vmatpush.msra.mxu0 %v155
    %1157 = vmatpush.msra.mxu0 %v149
    %1158 = vmatpush.msra.mxu0 %v143
    %1159 = vmatpush.msra.mxu0 %v137
    %1160 = vmatpush.msra.mxu0 %v131
    %1161 = vmatmul.f32.gmra.mxu0 %v914
    %v1162 = vpop.f32.mrf.mxu0
    %v1163 = vadd.f32 %v1143, %v1162
    %1164 = vdwg.mxu0
    %v1165 = vadd.f32 %v919, %v963
    %v1166 = vadd.f32 %v920, %v1003
    %v1167 = vadd.f32 %v921, %v1043
    %v1168 = vadd.f32 %v922, %v1083
    %v1169 = vxor.u32 %v1165, 2147483648
    %v1170 = vxor.u32 %v1166, 2147483648
    %v1171 = vxor.u32 %v1167, 2147483648
    %v1172 = vxor.u32 %v1168, 2147483648
    %v1173 = vmul.f32 %v1169, 1.442695
    %v1174 = vpow.pop %v1173
    %v1175 = vmul.f32 %v1170, 1.442695
    %v1176 = vpow.pop %v1175
    %v1177 = vmul.f32 %v1171, 1.442695
    %v1178 = vpow.pop %v1177
    %v1179 = vmul.f32 %v1172, 1.442695
    %v1180 = vpow.pop %v1179
    %v1181 = vadd.f32 %v1174, 1.0
    %v1182 = vadd.f32 %v1176, 1.0
    %v1183 = vadd.f32 %v1178, 1.0
    %v1184 = vadd.f32 %v1180, 1.0
    %v1185 = vrcp.pop %v1181
    %v1186 = vmul.f32 %v1181, %v1185
    %v1187 = vsub.f32 1.0, %v1186
    %v1188 = vmul.f32 %v1185, %v1187
    %v1189 = vadd.f32 %v1185, %v1188
    %vm1190 = vweird.f32 %v1181
    %vm1191 = vweird.f32 %v1185
    %vm1192 = vmor %vm1190, %vm1191
    %v1193 = vsel %vm1192, %v1185, %v1189
    %v1194 = vand.u32 2147483647, %v1181
    %vm1195 = vcmp.eq.f32.partialorder %v1194, 8.507059e+37
    %v1196 = vand.u32 %v1181, 2147483648
    %v1197 = vor.u32 1.1754944e-38, %v1196
    %v1198 = vsel %vm1195, %v1197, %v1193
    %v1199 = vmul.f32 1.0, %v1198
    %v1200 = vrcp.pop %v1182
    %v1201 = vmul.f32 %v1182, %v1200
    %v1202 = vsub.f32 1.0, %v1201
    %v1203 = vmul.f32 %v1200, %v1202
    %v1204 = vadd.f32 %v1200, %v1203
    %vm1205 = vweird.f32 %v1182
    %vm1206 = vweird.f32 %v1200
    %vm1207 = vmor %vm1205, %vm1206
    %v1208 = vsel %vm1207, %v1200, %v1204
    %v1209 = vand.u32 2147483647, %v1182
    %vm1210 = vcmp.eq.f32.partialorder %v1209, 8.507059e+37
    %v1211 = vand.u32 %v1182, 2147483648
    %v1212 = vor.u32 1.1754944e-38, %v1211
    %v1213 = vsel %vm1210, %v1212, %v1208
    %v1214 = vmul.f32 1.0, %v1213
    %v1215 = vrcp.pop %v1183
    %v1216 = vmul.f32 %v1183, %v1215
    %v1217 = vsub.f32 1.0, %v1216
    %v1218 = vmul.f32 %v1215, %v1217
    %v1219 = vadd.f32 %v1215, %v1218
    %vm1220 = vweird.f32 %v1183
    %vm1221 = vweird.f32 %v1215
    %vm1222 = vmor %vm1220, %vm1221
    %v1223 = vsel %vm1222, %v1215, %v1219
    %v1224 = vand.u32 2147483647, %v1183
    %vm1225 = vcmp.eq.f32.partialorder %v1224, 8.507059e+37
    %v1226 = vand.u32 %v1183, 2147483648
    %v1227 = vor.u32 1.1754944e-38, %v1226
    %v1228 = vsel %vm1225, %v1227, %v1223
    %v1229 = vmul.f32 1.0, %v1228
    %v1230 = vrcp.pop %v1184
    %v1231 = vmul.f32 %v1184, %v1230
    %v1232 = vsub.f32 1.0, %v1231
    %v1233 = vmul.f32 %v1230, %v1232
    %v1234 = vadd.f32 %v1230, %v1233
    %vm1235 = vweird.f32 %v1184
    %vm1236 = vweird.f32 %v1230
    %vm1237 = vmor %vm1235, %vm1236
    %v1238 = vsel %vm1237, %v1230, %v1234
    %v1239 = vand.u32 2147483647, %v1184
    %vm1240 = vcmp.eq.f32.partialorder %v1239, 8.507059e+37
    %v1241 = vand.u32 %v1184, 2147483648
    %v1242 = vor.u32 1.1754944e-38, %v1241
    %v1243 = vsel %vm1240, %v1242, %v1238
    %v1244 = vmul.f32 1.0, %v1243
    %v1245 = vadd.f32 %v1123, %v550
    %v1246 = vadd.f32 %v1163, %v551
    %v1247 = vmul.f32 %v1199, %v1245
    %v1248 = vmul.f32 %v1214, %v1246
    %v1249 = vadd.f32 %v923, %v1247
    %v1250 = vadd.f32 %v924, %v1248
    %v1251 = vtanh.pop %v1249
    %v1252 = vtanh.pop %v1250
    %v1253 = vsub.f32 1.0, %v1229
    %v1254 = vsub.f32 1.0, %v1244
    %v1255 = vmul.f32 %v1253, %v1251
    %v1256 = vmul.f32 %v1254, %v1252
    %v1257 = vmul.f32 %v1229, %v913
    %v1258 = vmul.f32 %v1244, %v914
    %v1259 = vadd.f32 %v1255, %v1257
    %v1260 = vadd.f32 %v1256, %v1258
    %s1261 = scalar_lea.vmem %s3, 32
    %1262 = vst [vmem:[%s1261] sm:$0xff] %v1259
    %1263 = vst [vmem:[%s1261 + $0x8] sm:$0xff] %v1260
    %s1264 = scalar_lea.vmem %s0, 144
    %v1265 = vld [vmem:[%s1264] sm:$0xff]
    %v1266 = vld [vmem:[%s1264 + $0x8] sm:$0xff]
    %v1267 = vld [vmem:[%s1264 + $0x10] sm:$0xff]
    %v1268 = vld [vmem:[%s1264 + $0x18] sm:$0xff]
    %v1269 = vld [vmem:[%s1264 + $0x20] sm:$0xff]
    %v1270 = vld [vmem:[%s1264 + $0x28] sm:$0xff]
    %1271 = vmatpush.msra.mxu0 %v120
    %1272 = vmatpush.msra.mxu0 %v114
    %1273 = vmatpush.msra.mxu0 %v108
    %1274 = vmatpush.msra.mxu0 %v102
    %1275 = vmatpush.msra.mxu0 %v96
    %1276 = vmatpush.msra.mxu0 %v90
    %1277 = vmatpush.msra.mxu0 %v84
    %1278 = vmatpush.msra.mxu0 %v78
    %1279 = vmatpush.msra.mxu0 %v72
    %1280 = vmatpush.msra.mxu0 %v66
    %1281 = vmatpush.msra.mxu0 %v60
    %1282 = vmatpush.msra.mxu0 %v54
    %1283 = vmatpush.msra.mxu0 %v48
    %1284 = vmatpush.msra.mxu0 %v42
    %1285 = vmatpush.msra.mxu0 %v36
    %1286 = vmatpush.msra.mxu0 %v30
    %1287 = vmatmul.f32.gmra.mxu0 %v1259
    %v1288 = vpop.f32.mrf.mxu0
    %v1289 = vadd.f32 0.0, %v1288
    %1290 = vdwg.mxu0
    %1291 = vmatpush.msra.mxu0 %v216
    %1292 = vmatpush.msra.mxu0 %v210
    %1293 = vmatpush.msra.mxu0 %v204
    %1294 = vmatpush.msra.mxu0 %v198
    %1295 = vmatpush.msra.mxu0 %v192
    %1296 = vmatpush.msra.mxu0 %v186
    %1297 = vmatpush.msra.mxu0 %v180
    %1298 = vmatpush.msra.mxu0 %v174
    %1299 = vmatpush.msra.mxu0 %v168
    %1300 = vmatpush.msra.mxu0 %v162
    %1301 = vmatpush.msra.mxu0 %v156
    %1302 = vmatpush.msra.mxu0 %v150
    %1303 = vmatpush.msra.mxu0 %v144
    %1304 = vmatpush.msra.mxu0 %v138
    %1305 = vmatpush.msra.mxu0 %v132
    %1306 = vmatpush.msra.mxu0 %v126
    %1307 = vmatmul.f32.gmra.mxu0 %v1260
    %v1308 = vpop.f32.mrf.mxu0
    %v1309 = vadd.f32 %v1289, %v1308
    %1310 = vdwg.mxu0
    %1311 = vmatpush.msra.mxu0 %v121
    %1312 = vmatpush.msra.mxu0 %v115
    %1313 = vmatpush.msra.mxu0 %v109
    %1314 = vmatpush.msra.mxu0 %v103
    %1315 = vmatpush.msra.mxu0 %v97
    %1316 = vmatpush.msra.mxu0 %v91
    %1317 = vmatpush.msra.mxu0 %v85
    %1318 = vmatpush.msra.mxu0 %v79
    %1319 = vmatpush.msra.mxu0 %v73
    %1320 = vmatpush.msra.mxu0 %v67
    %1321 = vmatpush.msra.mxu0 %v61
    %1322 = vmatpush.msra.mxu0 %v55
    %1323 = vmatpush.msra.mxu0 %v49
    %1324 = vmatpush.msra.mxu0 %v43
    %1325 = vmatpush.msra.mxu0 %v37
    %1326 = vmatpush.msra.mxu0 %v31
    %1327 = vmatmul.f32.gmra.mxu0 %v1259
    %v1328 = vpop.f32.mrf.mxu0
    %v1329 = vadd.f32 0.0, %v1328
    %1330 = vdwg.mxu0
    %1331 = vmatpush.msra.mxu0 %v217
    %1332 = vmatpush.msra.mxu0 %v211
    %1333 = vmatpush.msra.mxu0 %v205
    %1334 = vmatpush.msra.mxu0 %v199
    %1335 = vmatpush.msra.mxu0 %v193
    %1336 = vmatpush.msra.mxu0 %v187
    %1337 = vmatpush.msra.mxu0 %v181
    %1338 = vmatpush.msra.mxu0 %v175
    %1339 = vmatpush.msra.mxu0 %v169
    %1340 = vmatpush.msra.mxu0 %v163
    %1341 = vmatpush.msra.mxu0 %v157
    %1342 = vmatpush.msra.mxu0 %v151
    %1343 = vmatpush.msra.mxu0 %v145
    %1344 = vmatpush.msra.mxu0 %v139
    %1345 = vmatpush.msra.mxu0 %v133
    %1346 = vmatpush.msra.mxu0 %v127
    %1347 = vmatmul.f32.gmra.mxu0 %v1260
    %v1348 = vpop.f32.mrf.mxu0
    %v1349 = vadd.f32 %v1329, %v1348
    %1350 = vdwg.mxu0
    %1351 = vmatpush.msra.mxu0 %v122
    %1352 = vmatpush.msra.mxu0 %v116
    %1353 = vmatpush.msra.mxu0 %v110
    %1354 = vmatpush.msra.mxu0 %v104
    %1355 = vmatpush.msra.mxu0 %v98
    %1356 = vmatpush.msra.mxu0 %v92
    %1357 = vmatpush.msra.mxu0 %v86
    %1358 = vmatpush.msra.mxu0 %v80
    %1359 = vmatpush.msra.mxu0 %v74
    %1360 = vmatpush.msra.mxu0 %v68
    %1361 = vmatpush.msra.mxu0 %v62
    %1362 = vmatpush.msra.mxu0 %v56
    %1363 = vmatpush.msra.mxu0 %v50
    %1364 = vmatpush.msra.mxu0 %v44
    %1365 = vmatpush.msra.mxu0 %v38
    %1366 = vmatpush.msra.mxu0 %v32
    %1367 = vmatmul.f32.gmra.mxu0 %v1259
    %v1368 = vpop.f32.mrf.mxu0
    %v1369 = vadd.f32 0.0, %v1368
    %1370 = vdwg.mxu0
    %1371 = vmatpush.msra.mxu0 %v218
    %1372 = vmatpush.msra.mxu0 %v212
    %1373 = vmatpush.msra.mxu0 %v206
    %1374 = vmatpush.msra.mxu0 %v200
    %1375 = vmatpush.msra.mxu0 %v194
    %1376 = vmatpush.msra.mxu0 %v188
    %1377 = vmatpush.msra.mxu0 %v182
    %1378 = vmatpush.msra.mxu0 %v176
    %1379 = vmatpush.msra.mxu0 %v170
    %1380 = vmatpush.msra.mxu0 %v164
    %1381 = vmatpush.msra.mxu0 %v158
    %1382 = vmatpush.msra.mxu0 %v152
    %1383 = vmatpush.msra.mxu0 %v146
    %1384 = vmatpush.msra.mxu0 %v140
    %1385 = vmatpush.msra.mxu0 %v134
    %1386 = vmatpush.msra.mxu0 %v128
    %1387 = vmatmul.f32.gmra.mxu0 %v1260
    %v1388 = vpop.f32.mrf.mxu0
    %v1389 = vadd.f32 %v1369, %v1388
    %1390 = vdwg.mxu0
    %1391 = vmatpush.msra.mxu0 %v123
    %1392 = vmatpush.msra.mxu0 %v117
    %1393 = vmatpush.msra.mxu0 %v111
    %1394 = vmatpush.msra.mxu0 %v105
    %1395 = vmatpush.msra.mxu0 %v99
    %1396 = vmatpush.msra.mxu0 %v93
    %1397 = vmatpush.msra.mxu0 %v87
    %1398 = vmatpush.msra.mxu0 %v81
    %1399 = vmatpush.msra.mxu0 %v75
    %1400 = vmatpush.msra.mxu0 %v69
    %1401 = vmatpush.msra.mxu0 %v63
    %1402 = vmatpush.msra.mxu0 %v57
    %1403 = vmatpush.msra.mxu0 %v51
    %1404 = vmatpush.msra.mxu0 %v45
    %1405 = vmatpush.msra.mxu0 %v39
    %1406 = vmatpush.msra.mxu0 %v33
    %1407 = vmatmul.f32.gmra.mxu0 %v1259
    %v1408 = vpop.f32.mrf.mxu0
    %v1409 = vadd.f32 0.0, %v1408
    %1410 = vdwg.mxu0
    %1411 = vmatpush.msra.mxu0 %v219
    %1412 = vmatpush.msra.mxu0 %v213
    %1413 = vmatpush.msra.mxu0 %v207
    %1414 = vmatpush.msra.mxu0 %v201
    %1415 = vmatpush.msra.mxu0 %v195
    %1416 = vmatpush.msra.mxu0 %v189
    %1417 = vmatpush.msra.mxu0 %v183
    %1418 = vmatpush.msra.mxu0 %v177
    %1419 = vmatpush.msra.mxu0 %v171
    %1420 = vmatpush.msra.mxu0 %v165
    %1421 = vmatpush.msra.mxu0 %v159
    %1422 = vmatpush.msra.mxu0 %v153
    %1423 = vmatpush.msra.mxu0 %v147
    %1424 = vmatpush.msra.mxu0 %v141
    %1425 = vmatpush.msra.mxu0 %v135
    %1426 = vmatpush.msra.mxu0 %v129
    %1427 = vmatmul.f32.gmra.mxu0 %v1260
    %v1428 = vpop.f32.mrf.mxu0
    %v1429 = vadd.f32 %v1409, %v1428
    %1430 = vdwg.mxu0
    %1431 = vmatpush.msra.mxu0 %v124
    %1432 = vmatpush.msra.mxu0 %v118
    %1433 = vmatpush.msra.mxu0 %v112
    %1434 = vmatpush.msra.mxu0 %v106
    %1435 = vmatpush.msra.mxu0 %v100
    %1436 = vmatpush.msra.mxu0 %v94
    %1437 = vmatpush.msra.mxu0 %v88
    %1438 = vmatpush.msra.mxu0 %v82
    %1439 = vmatpush.msra.mxu0 %v76
    %1440 = vmatpush.msra.mxu0 %v70
    %1441 = vmatpush.msra.mxu0 %v64
    %1442 = vmatpush.msra.mxu0 %v58
    %1443 = vmatpush.msra.mxu0 %v52
    %1444 = vmatpush.msra.mxu0 %v46
    %1445 = vmatpush.msra.mxu0 %v40
    %1446 = vmatpush.msra.mxu0 %v34
    %1447 = vmatmul.f32.gmra.mxu0 %v1259
    %v1448 = vpop.f32.mrf.mxu0
    %v1449 = vadd.f32 0.0, %v1448
    %1450 = vdwg.mxu0
    %1451 = vmatpush.msra.mxu0 %v220
    %1452 = vmatpush.msra.mxu0 %v214
    %1453 = vmatpush.msra.mxu0 %v208
    %1454 = vmatpush.msra.mxu0 %v202
    %1455 = vmatpush.msra.mxu0 %v196
    %1456 = vmatpush.msra.mxu0 %v190
    %1457 = vmatpush.msra.mxu0 %v184
    %1458 = vmatpush.msra.mxu0 %v178
    %1459 = vmatpush.msra.mxu0 %v172
    %1460 = vmatpush.msra.mxu0 %v166
    %1461 = vmatpush.msra.mxu0 %v160
    %1462 = vmatpush.msra.mxu0 %v154
    %1463 = vmatpush.msra.mxu0 %v148
    %1464 = vmatpush.msra.mxu0 %v142
    %1465 = vmatpush.msra.mxu0 %v136
    %1466 = vmatpush.msra.mxu0 %v130
    %1467 = vmatmul.f32.gmra.mxu0 %v1260
    %v1468 = vpop.f32.mrf.mxu0
    %v1469 = vadd.f32 %v1449, %v1468
    %1470 = vdwg.mxu0
    %1471 = vmatpush.msra.mxu0 %v125
    %1472 = vmatpush.msra.mxu0 %v119
    %1473 = vmatpush.msra.mxu0 %v113
    %1474 = vmatpush.msra.mxu0 %v107
    %1475 = vmatpush.msra.mxu0 %v101
    %1476 = vmatpush.msra.mxu0 %v95
    %1477 = vmatpush.msra.mxu0 %v89
    %1478 = vmatpush.msra.mxu0 %v83
    %1479 = vmatpush.msra.mxu0 %v77
    %1480 = vmatpush.msra.mxu0 %v71
    %1481 = vmatpush.msra.mxu0 %v65
    %1482 = vmatpush.msra.mxu0 %v59
    %1483 = vmatpush.msra.mxu0 %v53
    %1484 = vmatpush.msra.mxu0 %v47
    %1485 = vmatpush.msra.mxu0 %v41
    %1486 = vmatpush.msra.mxu0 %v35
    %1487 = vmatmul.f32.gmra.mxu0 %v1259
    %v1488 = vpop.f32.mrf.mxu0
    %v1489 = vadd.f32 0.0, %v1488
    %1490 = vdwg.mxu0
    %1491 = vmatpush.msra.mxu0 %v221
    %1492 = vmatpush.msra.mxu0 %v215
    %1493 = vmatpush.msra.mxu0 %v209
    %1494 = vmatpush.msra.mxu0 %v203
    %1495 = vmatpush.msra.mxu0 %v197
    %1496 = vmatpush.msra.mxu0 %v191
    %1497 = vmatpush.msra.mxu0 %v185
    %1498 = vmatpush.msra.mxu0 %v179
    %1499 = vmatpush.msra.mxu0 %v173
    %1500 = vmatpush.msra.mxu0 %v167
    %1501 = vmatpush.msra.mxu0 %v161
    %1502 = vmatpush.msra.mxu0 %v155
    %1503 = vmatpush.msra.mxu0 %v149
    %1504 = vmatpush.msra.mxu0 %v143
    %1505 = vmatpush.msra.mxu0 %v137
    %1506 = vmatpush.msra.mxu0 %v131
    %1507 = vmatmul.f32.gmra.mxu0 %v1260
    %v1508 = vpop.f32.mrf.mxu0
    %v1509 = vadd.f32 %v1489, %v1508
    %1510 = vdwg.mxu0
    %v1511 = vadd.f32 %v1265, %v1309
    %v1512 = vadd.f32 %v1266, %v1349
    %v1513 = vadd.f32 %v1267, %v1389
    %v1514 = vadd.f32 %v1268, %v1429
    %v1515 = vxor.u32 %v1511, 2147483648
    %v1516 = vxor.u32 %v1512, 2147483648
    %v1517 = vxor.u32 %v1513, 2147483648
    %v1518 = vxor.u32 %v1514, 2147483648
    %v1519 = vmul.f32 %v1515, 1.442695
    %v1520 = vpow.pop %v1519
    %v1521 = vmul.f32 %v1516, 1.442695
    %v1522 = vpow.pop %v1521
    %v1523 = vmul.f32 %v1517, 1.442695
    %v1524 = vpow.pop %v1523
    %v1525 = vmul.f32 %v1518, 1.442695
    %v1526 = vpow.pop %v1525
    %v1527 = vadd.f32 %v1520, 1.0
    %v1528 = vadd.f32 %v1522, 1.0
    %v1529 = vadd.f32 %v1524, 1.0
    %v1530 = vadd.f32 %v1526, 1.0
    %v1531 = vrcp.pop %v1527
    %v1532 = vmul.f32 %v1527, %v1531
    %v1533 = vsub.f32 1.0, %v1532
    %v1534 = vmul.f32 %v1531, %v1533
    %v1535 = vadd.f32 %v1531, %v1534
    %vm1536 = vweird.f32 %v1527
    %vm1537 = vweird.f32 %v1531
    %vm1538 = vmor %vm1536, %vm1537
    %v1539 = vsel %vm1538, %v1531, %v1535
    %v1540 = vand.u32 2147483647, %v1527
    %vm1541 = vcmp.eq.f32.partialorder %v1540, 8.507059e+37
    %v1542 = vand.u32 %v1527, 2147483648
    %v1543 = vor.u32 1.1754944e-38, %v1542
    %v1544 = vsel %vm1541, %v1543, %v1539
    %v1545 = vmul.f32 1.0, %v1544
    %v1546 = vrcp.pop %v1528
    %v1547 = vmul.f32 %v1528, %v1546
    %v1548 = vsub.f32 1.0, %v1547
    %v1549 = vmul.f32 %v1546, %v1548
    %v1550 = vadd.f32 %v1546, %v1549
    %vm1551 = vweird.f32 %v1528
    %vm1552 = vweird.f32 %v1546
    %vm1553 = vmor %vm1551, %vm1552
    %v1554 = vsel %vm1553, %v1546, %v1550
    %v1555 = vand.u32 2147483647, %v1528
    %vm1556 = vcmp.eq.f32.partialorder %v1555, 8.507059e+37
    %v1557 = vand.u32 %v1528, 2147483648
    %v1558 = vor.u32 1.1754944e-38, %v1557
    %v1559 = vsel %vm1556, %v1558, %v1554
    %v1560 = vmul.f32 1.0, %v1559
    %v1561 = vrcp.pop %v1529
    %v1562 = vmul.f32 %v1529, %v1561
    %v1563 = vsub.f32 1.0, %v1562
    %v1564 = vmul.f32 %v1561, %v1563
    %v1565 = vadd.f32 %v1561, %v1564
    %vm1566 = vweird.f32 %v1529
    %vm1567 = vweird.f32 %v1561
    %vm1568 = vmor %vm1566, %vm1567
    %v1569 = vsel %vm1568, %v1561, %v1565
    %v1570 = vand.u32 2147483647, %v1529
    %vm1571 = vcmp.eq.f32.partialorder %v1570, 8.507059e+37
    %v1572 = vand.u32 %v1529, 2147483648
    %v1573 = vor.u32 1.1754944e-38, %v1572
    %v1574 = vsel %vm1571, %v1573, %v1569
    %v1575 = vmul.f32 1.0, %v1574
    %v1576 = vrcp.pop %v1530
    %v1577 = vmul.f32 %v1530, %v1576
    %v1578 = vsub.f32 1.0, %v1577
    %v1579 = vmul.f32 %v1576, %v1578
    %v1580 = vadd.f32 %v1576, %v1579
    %vm1581 = vweird.f32 %v1530
    %vm1582 = vweird.f32 %v1576
    %vm1583 = vmor %vm1581, %vm1582
    %v1584 = vsel %vm1583, %v1576, %v1580
    %v1585 = vand.u32 2147483647, %v1530
    %vm1586 = vcmp.eq.f32.partialorder %v1585, 8.507059e+37
    %v1587 = vand.u32 %v1530, 2147483648
    %v1588 = vor.u32 1.1754944e-38, %v1587
    %v1589 = vsel %vm1586, %v1588, %v1584
    %v1590 = vmul.f32 1.0, %v1589
    %v1591 = vadd.f32 %v1469, %v550
    %v1592 = vadd.f32 %v1509, %v551
    %v1593 = vmul.f32 %v1545, %v1591
    %v1594 = vmul.f32 %v1560, %v1592
    %v1595 = vadd.f32 %v1269, %v1593
    %v1596 = vadd.f32 %v1270, %v1594
    %v1597 = vtanh.pop %v1595
    %v1598 = vtanh.pop %v1596
    %v1599 = vsub.f32 1.0, %v1575
    %v1600 = vsub.f32 1.0, %v1590
    %v1601 = vmul.f32 %v1599, %v1597
    %v1602 = vmul.f32 %v1600, %v1598
    %v1603 = vmul.f32 %v1575, %v1259
    %v1604 = vmul.f32 %v1590, %v1260
    %v1605 = vadd.f32 %v1601, %v1603
    %v1606 = vadd.f32 %v1602, %v1604
    %s1607 = scalar_lea.vmem %s3, 48
    %1608 = vst [vmem:[%s1607] sm:$0xff] %v1605
    %1609 = vst [vmem:[%s1607 + $0x8] sm:$0xff] %v1606
    %s1610 = scalar_lea.vmem %s0, 192
    %v1611 = vld [vmem:[%s1610] sm:$0xff]
    %v1612 = vld [vmem:[%s1610 + $0x8] sm:$0xff]
    %v1613 = vld [vmem:[%s1610 + $0x10] sm:$0xff]
    %v1614 = vld [vmem:[%s1610 + $0x18] sm:$0xff]
    %v1615 = vld [vmem:[%s1610 + $0x20] sm:$0xff]
    %v1616 = vld [vmem:[%s1610 + $0x28] sm:$0xff]
    %1617 = vmatpush.msra.mxu0 %v120
    %1618 = vmatpush.msra.mxu0 %v114
    %1619 = vmatpush.msra.mxu0 %v108
    %1620 = vmatpush.msra.mxu0 %v102
    %1621 = vmatpush.msra.mxu0 %v96
    %1622 = vmatpush.msra.mxu0 %v90
    %1623 = vmatpush.msra.mxu0 %v84
    %1624 = vmatpush.msra.mxu0 %v78
    %1625 = vmatpush.msra.mxu0 %v72
    %1626 = vmatpush.msra.mxu0 %v66
    %1627 = vmatpush.msra.mxu0 %v60
    %1628 = vmatpush.msra.mxu0 %v54
    %1629 = vmatpush.msra.mxu0 %v48
    %1630 = vmatpush.msra.mxu0 %v42
    %1631 = vmatpush.msra.mxu0 %v36
    %1632 = vmatpush.msra.mxu0 %v30
    %1633 = vmatmul.f32.gmra.mxu0 %v1605
    %v1634 = vpop.f32.mrf.mxu0
    %v1635 = vadd.f32 0.0, %v1634
    %1636 = vdwg.mxu0
    %1637 = vmatpush.msra.mxu0 %v216
    %1638 = vmatpush.msra.mxu0 %v210
    %1639 = vmatpush.msra.mxu0 %v204
    %1640 = vmatpush.msra.mxu0 %v198
    %1641 = vmatpush.msra.mxu0 %v192
    %1642 = vmatpush.msra.mxu0 %v186
    %1643 = vmatpush.msra.mxu0 %v180
    %1644 = vmatpush.msra.mxu0 %v174
    %1645 = vmatpush.msra.mxu0 %v168
    %1646 = vmatpush.msra.mxu0 %v162
    %1647 = vmatpush.msra.mxu0 %v156
    %1648 = vmatpush.msra.mxu0 %v150
    %1649 = vmatpush.msra.mxu0 %v144
    %1650 = vmatpush.msra.mxu0 %v138
    %1651 = vmatpush.msra.mxu0 %v132
    %1652 = vmatpush.msra.mxu0 %v126
    %1653 = vmatmul.f32.gmra.mxu0 %v1606
    %v1654 = vpop.f32.mrf.mxu0
    %v1655 = vadd.f32 %v1635, %v1654
    %1656 = vdwg.mxu0
    %1657 = vmatpush.msra.mxu0 %v121
    %1658 = vmatpush.msra.mxu0 %v115
    %1659 = vmatpush.msra.mxu0 %v109
    %1660 = vmatpush.msra.mxu0 %v103
    %1661 = vmatpush.msra.mxu0 %v97
    %1662 = vmatpush.msra.mxu0 %v91
    %1663 = vmatpush.msra.mxu0 %v85
    %1664 = vmatpush.msra.mxu0 %v79
    %1665 = vmatpush.msra.mxu0 %v73
    %1666 = vmatpush.msra.mxu0 %v67
    %1667 = vmatpush.msra.mxu0 %v61
    %1668 = vmatpush.msra.mxu0 %v55
    %1669 = vmatpush.msra.mxu0 %v49
    %1670 = vmatpush.msra.mxu0 %v43
    %1671 = vmatpush.msra.mxu0 %v37
    %1672 = vmatpush.msra.mxu0 %v31
    %1673 = vmatmul.f32.gmra.mxu0 %v1605
    %v1674 = vpop.f32.mrf.mxu0
    %v1675 = vadd.f32 0.0, %v1674
    %1676 = vdwg.mxu0
    %1677 = vmatpush.msra.mxu0 %v217
    %1678 = vmatpush.msra.mxu0 %v211
    %1679 = vmatpush.msra.mxu0 %v205
    %1680 = vmatpush.msra.mxu0 %v199
    %1681 = vmatpush.msra.mxu0 %v193
    %1682 = vmatpush.msra.mxu0 %v187
    %1683 = vmatpush.msra.mxu0 %v181
    %1684 = vmatpush.msra.mxu0 %v175
    %1685 = vmatpush.msra.mxu0 %v169
    %1686 = vmatpush.msra.mxu0 %v163
    %1687 = vmatpush.msra.mxu0 %v157
    %1688 = vmatpush.msra.mxu0 %v151
    %1689 = vmatpush.msra.mxu0 %v145
    %1690 = vmatpush.msra.mxu0 %v139
    %1691 = vmatpush.msra.mxu0 %v133
    %1692 = vmatpush.msra.mxu0 %v127
    %1693 = vmatmul.f32.gmra.mxu0 %v1606
    %v1694 = vpop.f32.mrf.mxu0
    %v1695 = vadd.f32 %v1675, %v1694
    %1696 = vdwg.mxu0
    %1697 = vmatpush.msra.mxu0 %v122
    %1698 = vmatpush.msra.mxu0 %v116
    %1699 = vmatpush.msra.mxu0 %v110
    %1700 = vmatpush.msra.mxu0 %v104
    %1701 = vmatpush.msra.mxu0 %v98
    %1702 = vmatpush.msra.mxu0 %v92
    %1703 = vmatpush.msra.mxu0 %v86
    %1704 = vmatpush.msra.mxu0 %v80
    %1705 = vmatpush.msra.mxu0 %v74
    %1706 = vmatpush.msra.mxu0 %v68
    %1707 = vmatpush.msra.mxu0 %v62
    %1708 = vmatpush.msra.mxu0 %v56
    %1709 = vmatpush.msra.mxu0 %v50
    %1710 = vmatpush.msra.mxu0 %v44
    %1711 = vmatpush.msra.mxu0 %v38
    %1712 = vmatpush.msra.mxu0 %v32
    %1713 = vmatmul.f32.gmra.mxu0 %v1605
    %v1714 = vpop.f32.mrf.mxu0
    %v1715 = vadd.f32 0.0, %v1714
    %1716 = vdwg.mxu0
    %1717 = vmatpush.msra.mxu0 %v218
    %1718 = vmatpush.msra.mxu0 %v212
    %1719 = vmatpush.msra.mxu0 %v206
    %1720 = vmatpush.msra.mxu0 %v200
    %1721 = vmatpush.msra.mxu0 %v194
    %1722 = vmatpush.msra.mxu0 %v188
    %1723 = vmatpush.msra.mxu0 %v182
    %1724 = vmatpush.msra.mxu0 %v176
    %1725 = vmatpush.msra.mxu0 %v170
    %1726 = vmatpush.msra.mxu0 %v164
    %1727 = vmatpush.msra.mxu0 %v158
    %1728 = vmatpush.msra.mxu0 %v152
    %1729 = vmatpush.msra.mxu0 %v146
    %1730 = vmatpush.msra.mxu0 %v140
    %1731 = vmatpush.msra.mxu0 %v134
    %1732 = vmatpush.msra.mxu0 %v128
    %1733 = vmatmul.f32.gmra.mxu0 %v1606
    %v1734 = vpop.f32.mrf.mxu0
    %v1735 = vadd.f32 %v1715, %v1734
    %1736 = vdwg.mxu0
    %1737 = vmatpush.msra.mxu0 %v123
    %1738 = vmatpush.msra.mxu0 %v117
    %1739 = vmatpush.msra.mxu0 %v111
    %1740 = vmatpush.msra.mxu0 %v105
    %1741 = vmatpush.msra.mxu0 %v99
    %1742 = vmatpush.msra.mxu0 %v93
    %1743 = vmatpush.msra.mxu0 %v87
    %1744 = vmatpush.msra.mxu0 %v81
    %1745 = vmatpush.msra.mxu0 %v75
    %1746 = vmatpush.msra.mxu0 %v69
    %1747 = vmatpush.msra.mxu0 %v63
    %1748 = vmatpush.msra.mxu0 %v57
    %1749 = vmatpush.msra.mxu0 %v51
    %1750 = vmatpush.msra.mxu0 %v45
    %1751 = vmatpush.msra.mxu0 %v39
    %1752 = vmatpush.msra.mxu0 %v33
    %1753 = vmatmul.f32.gmra.mxu0 %v1605
    %v1754 = vpop.f32.mrf.mxu0
    %v1755 = vadd.f32 0.0, %v1754
    %1756 = vdwg.mxu0
    %1757 = vmatpush.msra.mxu0 %v219
    %1758 = vmatpush.msra.mxu0 %v213
    %1759 = vmatpush.msra.mxu0 %v207
    %1760 = vmatpush.msra.mxu0 %v201
    %1761 = vmatpush.msra.mxu0 %v195
    %1762 = vmatpush.msra.mxu0 %v189
    %1763 = vmatpush.msra.mxu0 %v183
    %1764 = vmatpush.msra.mxu0 %v177
    %1765 = vmatpush.msra.mxu0 %v171
    %1766 = vmatpush.msra.mxu0 %v165
    %1767 = vmatpush.msra.mxu0 %v159
    %1768 = vmatpush.msra.mxu0 %v153
    %1769 = vmatpush.msra.mxu0 %v147
    %1770 = vmatpush.msra.mxu0 %v141
    %1771 = vmatpush.msra.mxu0 %v135
    %1772 = vmatpush.msra.mxu0 %v129
    %1773 = vmatmul.f32.gmra.mxu0 %v1606
    %v1774 = vpop.f32.mrf.mxu0
    %v1775 = vadd.f32 %v1755, %v1774
    %1776 = vdwg.mxu0
    %1777 = vmatpush.msra.mxu0 %v124
    %1778 = vmatpush.msra.mxu0 %v118
    %1779 = vmatpush.msra.mxu0 %v112
    %1780 = vmatpush.msra.mxu0 %v106
    %1781 = vmatpush.msra.mxu0 %v100
    %1782 = vmatpush.msra.mxu0 %v94
    %1783 = vmatpush.msra.mxu0 %v88
    %1784 = vmatpush.msra.mxu0 %v82
    %1785 = vmatpush.msra.mxu0 %v76
    %1786 = vmatpush.msra.mxu0 %v70
    %1787 = vmatpush.msra.mxu0 %v64
    %1788 = vmatpush.msra.mxu0 %v58
    %1789 = vmatpush.msra.mxu0 %v52
    %1790 = vmatpush.msra.mxu0 %v46
    %1791 = vmatpush.msra.mxu0 %v40
    %1792 = vmatpush.msra.mxu0 %v34
    %1793 = vmatmul.f32.gmra.mxu0 %v1605
    %v1794 = vpop.f32.mrf.mxu0
    %v1795 = vadd.f32 0.0, %v1794
    %1796 = vdwg.mxu0
    %1797 = vmatpush.msra.mxu0 %v220
    %1798 = vmatpush.msra.mxu0 %v214
    %1799 = vmatpush.msra.mxu0 %v208
    %1800 = vmatpush.msra.mxu0 %v202
    %1801 = vmatpush.msra.mxu0 %v196
    %1802 = vmatpush.msra.mxu0 %v190
    %1803 = vmatpush.msra.mxu0 %v184
    %1804 = vmatpush.msra.mxu0 %v178
    %1805 = vmatpush.msra.mxu0 %v172
    %1806 = vmatpush.msra.mxu0 %v166
    %1807 = vmatpush.msra.mxu0 %v160
    %1808 = vmatpush.msra.mxu0 %v154
    %1809 = vmatpush.msra.mxu0 %v148
    %1810 = vmatpush.msra.mxu0 %v142
    %1811 = vmatpush.msra.mxu0 %v136
    %1812 = vmatpush.msra.mxu0 %v130
    %1813 = vmatmul.f32.gmra.mxu0 %v1606
    %v1814 = vpop.f32.mrf.mxu0
    %v1815 = vadd.f32 %v1795, %v1814
    %1816 = vdwg.mxu0
    %1817 = vmatpush.msra.mxu0 %v125
    %1818 = vmatpush.msra.mxu0 %v119
    %1819 = vmatpush.msra.mxu0 %v113
    %1820 = vmatpush.msra.mxu0 %v107
    %1821 = vmatpush.msra.mxu0 %v101
    %1822 = vmatpush.msra.mxu0 %v95
    %1823 = vmatpush.msra.mxu0 %v89
    %1824 = vmatpush.msra.mxu0 %v83
    %1825 = vmatpush.msra.mxu0 %v77
    %1826 = vmatpush.msra.mxu0 %v71
    %1827 = vmatpush.msra.mxu0 %v65
    %1828 = vmatpush.msra.mxu0 %v59
    %1829 = vmatpush.msra.mxu0 %v53
    %1830 = vmatpush.msra.mxu0 %v47
    %1831 = vmatpush.msra.mxu0 %v41
    %1832 = vmatpush.msra.mxu0 %v35
    %1833 = vmatmul.f32.gmra.mxu0 %v1605
    %v1834 = vpop.f32.mrf.mxu0
    %v1835 = vadd.f32 0.0, %v1834
    %1836 = vdwg.mxu0
    %1837 = vmatpush.msra.mxu0 %v221
    %1838 = vmatpush.msra.mxu0 %v215
    %1839 = vmatpush.msra.mxu0 %v209
    %1840 = vmatpush.msra.mxu0 %v203
    %1841 = vmatpush.msra.mxu0 %v197
    %1842 = vmatpush.msra.mxu0 %v191
    %1843 = vmatpush.msra.mxu0 %v185
    %1844 = vmatpush.msra.mxu0 %v179
    %1845 = vmatpush.msra.mxu0 %v173
    %1846 = vmatpush.msra.mxu0 %v167
    %1847 = vmatpush.msra.mxu0 %v161
    %1848 = vmatpush.msra.mxu0 %v155
    %1849 = vmatpush.msra.mxu0 %v149
    %1850 = vmatpush.msra.mxu0 %v143
    %1851 = vmatpush.msra.mxu0 %v137
    %1852 = vmatpush.msra.mxu0 %v131
    %1853 = vmatmul.f32.gmra.mxu0 %v1606
    %v1854 = vpop.f32.mrf.mxu0
    %v1855 = vadd.f32 %v1835, %v1854
    %1856 = vdwg.mxu0
    %v1857 = vadd.f32 %v1611, %v1655
    %v1858 = vadd.f32 %v1612, %v1695
    %v1859 = vadd.f32 %v1613, %v1735
    %v1860 = vadd.f32 %v1614, %v1775
    %v1861 = vxor.u32 %v1857, 2147483648
    %v1862 = vxor.u32 %v1858, 2147483648
    %v1863 = vxor.u32 %v1859, 2147483648
    %v1864 = vxor.u32 %v1860, 2147483648
    %v1865 = vmul.f32 %v1861, 1.442695
    %v1866 = vpow.pop %v1865
    %v1867 = vmul.f32 %v1862, 1.442695
    %v1868 = vpow.pop %v1867
    %v1869 = vmul.f32 %v1863, 1.442695
    %v1870 = vpow.pop %v1869
    %v1871 = vmul.f32 %v1864, 1.442695
    %v1872 = vpow.pop %v1871
    %v1873 = vadd.f32 %v1866, 1.0
    %v1874 = vadd.f32 %v1868, 1.0
    %v1875 = vadd.f32 %v1870, 1.0
    %v1876 = vadd.f32 %v1872, 1.0
    %v1877 = vrcp.pop %v1873
    %v1878 = vmul.f32 %v1873, %v1877
    %v1879 = vsub.f32 1.0, %v1878
    %v1880 = vmul.f32 %v1877, %v1879
    %v1881 = vadd.f32 %v1877, %v1880
    %vm1882 = vweird.f32 %v1873
    %vm1883 = vweird.f32 %v1877
    %vm1884 = vmor %vm1882, %vm1883
    %v1885 = vsel %vm1884, %v1877, %v1881
    %v1886 = vand.u32 2147483647, %v1873
    %vm1887 = vcmp.eq.f32.partialorder %v1886, 8.507059e+37
    %v1888 = vand.u32 %v1873, 2147483648
    %v1889 = vor.u32 1.1754944e-38, %v1888
    %v1890 = vsel %vm1887, %v1889, %v1885
    %v1891 = vmul.f32 1.0, %v1890
    %v1892 = vrcp.pop %v1874
    %v1893 = vmul.f32 %v1874, %v1892
    %v1894 = vsub.f32 1.0, %v1893
    %v1895 = vmul.f32 %v1892, %v1894
    %v1896 = vadd.f32 %v1892, %v1895
    %vm1897 = vweird.f32 %v1874
    %vm1898 = vweird.f32 %v1892
    %vm1899 = vmor %vm1897, %vm1898
    %v1900 = vsel %vm1899, %v1892, %v1896
    %v1901 = vand.u32 2147483647, %v1874
    %vm1902 = vcmp.eq.f32.partialorder %v1901, 8.507059e+37
    %v1903 = vand.u32 %v1874, 2147483648
    %v1904 = vor.u32 1.1754944e-38, %v1903
    %v1905 = vsel %vm1902, %v1904, %v1900
    %v1906 = vmul.f32 1.0, %v1905
    %v1907 = vrcp.pop %v1875
    %v1908 = vmul.f32 %v1875, %v1907
    %v1909 = vsub.f32 1.0, %v1908
    %v1910 = vmul.f32 %v1907, %v1909
    %v1911 = vadd.f32 %v1907, %v1910
    %vm1912 = vweird.f32 %v1875
    %vm1913 = vweird.f32 %v1907
    %vm1914 = vmor %vm1912, %vm1913
    %v1915 = vsel %vm1914, %v1907, %v1911
    %v1916 = vand.u32 2147483647, %v1875
    %vm1917 = vcmp.eq.f32.partialorder %v1916, 8.507059e+37
    %v1918 = vand.u32 %v1875, 2147483648
    %v1919 = vor.u32 1.1754944e-38, %v1918
    %v1920 = vsel %vm1917, %v1919, %v1915
    %v1921 = vmul.f32 1.0, %v1920
    %v1922 = vrcp.pop %v1876
    %v1923 = vmul.f32 %v1876, %v1922
    %v1924 = vsub.f32 1.0, %v1923
    %v1925 = vmul.f32 %v1922, %v1924
    %v1926 = vadd.f32 %v1922, %v1925
    %vm1927 = vweird.f32 %v1876
    %vm1928 = vweird.f32 %v1922
    %vm1929 = vmor %vm1927, %vm1928
    %v1930 = vsel %vm1929, %v1922, %v1926
    %v1931 = vand.u32 2147483647, %v1876
    %vm1932 = vcmp.eq.f32.partialorder %v1931, 8.507059e+37
    %v1933 = vand.u32 %v1876, 2147483648
    %v1934 = vor.u32 1.1754944e-38, %v1933
    %v1935 = vsel %vm1932, %v1934, %v1930
    %v1936 = vmul.f32 1.0, %v1935
    %v1937 = vadd.f32 %v1815, %v550
    %v1938 = vadd.f32 %v1855, %v551
    %v1939 = vmul.f32 %v1891, %v1937
    %v1940 = vmul.f32 %v1906, %v1938
    %v1941 = vadd.f32 %v1615, %v1939
    %v1942 = vadd.f32 %v1616, %v1940
    %v1943 = vtanh.pop %v1941
    %v1944 = vtanh.pop %v1942
    %v1945 = vsub.f32 1.0, %v1921
    %v1946 = vsub.f32 1.0, %v1936
    %v1947 = vmul.f32 %v1945, %v1943
    %v1948 = vmul.f32 %v1946, %v1944
    %v1949 = vmul.f32 %v1921, %v1605
    %v1950 = vmul.f32 %v1936, %v1606
    %v1951 = vadd.f32 %v1947, %v1949
    %v1952 = vadd.f32 %v1948, %v1950
    %s1953 = scalar_lea.vmem %s3, 64
    %1954 = vst [vmem:[%s1953] sm:$0xff] %v1951
    %1955 = vst [vmem:[%s1953 + $0x8] sm:$0xff] %v1952
    %s1956 = scalar_lea.vmem %s0, 240
    %v1957 = vld [vmem:[%s1956] sm:$0xff]
    %v1958 = vld [vmem:[%s1956 + $0x8] sm:$0xff]
    %v1959 = vld [vmem:[%s1956 + $0x10] sm:$0xff]
    %v1960 = vld [vmem:[%s1956 + $0x18] sm:$0xff]
    %v1961 = vld [vmem:[%s1956 + $0x20] sm:$0xff]
    %v1962 = vld [vmem:[%s1956 + $0x28] sm:$0xff]
    %1963 = vmatpush.msra.mxu0 %v120
    %1964 = vmatpush.msra.mxu0 %v114
    %1965 = vmatpush.msra.mxu0 %v108
    %1966 = vmatpush.msra.mxu0 %v102
    %1967 = vmatpush.msra.mxu0 %v96
    %1968 = vmatpush.msra.mxu0 %v90
    %1969 = vmatpush.msra.mxu0 %v84
    %1970 = vmatpush.msra.mxu0 %v78
    %1971 = vmatpush.msra.mxu0 %v72
    %1972 = vmatpush.msra.mxu0 %v66
    %1973 = vmatpush.msra.mxu0 %v60
    %1974 = vmatpush.msra.mxu0 %v54
    %1975 = vmatpush.msra.mxu0 %v48
    %1976 = vmatpush.msra.mxu0 %v42
    %1977 = vmatpush.msra.mxu0 %v36
    %1978 = vmatpush.msra.mxu0 %v30
    %1979 = vmatmul.f32.gmra.mxu0 %v1951
    %v1980 = vpop.f32.mrf.mxu0
    %v1981 = vadd.f32 0.0, %v1980
    %1982 = vdwg.mxu0
    %1983 = vmatpush.msra.mxu0 %v216
    %1984 = vmatpush.msra.mxu0 %v210
    %1985 = vmatpush.msra.mxu0 %v204
    %1986 = vmatpush.msra.mxu0 %v198
    %1987 = vmatpush.msra.mxu0 %v192
    %1988 = vmatpush.msra.mxu0 %v186
    %1989 = vmatpush.msra.mxu0 %v180
    %1990 = vmatpush.msra.mxu0 %v174
    %1991 = vmatpush.msra.mxu0 %v168
    %1992 = vmatpush.msra.mxu0 %v162
    %1993 = vmatpush.msra.mxu0 %v156
    %1994 = vmatpush.msra.mxu0 %v150
    %1995 = vmatpush.msra.mxu0 %v144
    %1996 = vmatpush.msra.mxu0 %v138
    %1997 = vmatpush.msra.mxu0 %v132
    %1998 = vmatpush.msra.mxu0 %v126
    %1999 = vmatmul.f32.gmra.mxu0 %v1952
    %v2000 = vpop.f32.mrf.mxu0
    %v2001 = vadd.f32 %v1981, %v2000
    %2002 = vdwg.mxu0
    %2003 = vmatpush.msra.mxu0 %v121
    %2004 = vmatpush.msra.mxu0 %v115
    %2005 = vmatpush.msra.mxu0 %v109
    %2006 = vmatpush.msra.mxu0 %v103
    %2007 = vmatpush.msra.mxu0 %v97
    %2008 = vmatpush.msra.mxu0 %v91
    %2009 = vmatpush.msra.mxu0 %v85
    %2010 = vmatpush.msra.mxu0 %v79
    %2011 = vmatpush.msra.mxu0 %v73
    %2012 = vmatpush.msra.mxu0 %v67
    %2013 = vmatpush.msra.mxu0 %v61
    %2014 = vmatpush.msra.mxu0 %v55
    %2015 = vmatpush.msra.mxu0 %v49
    %2016 = vmatpush.msra.mxu0 %v43
    %2017 = vmatpush.msra.mxu0 %v37
    %2018 = vmatpush.msra.mxu0 %v31
    %2019 = vmatmul.f32.gmra.mxu0 %v1951
    %v2020 = vpop.f32.mrf.mxu0
    %v2021 = vadd.f32 0.0, %v2020
    %2022 = vdwg.mxu0
    %2023 = vmatpush.msra.mxu0 %v217
    %2024 = vmatpush.msra.mxu0 %v211
    %2025 = vmatpush.msra.mxu0 %v205
    %2026 = vmatpush.msra.mxu0 %v199
    %2027 = vmatpush.msra.mxu0 %v193
    %2028 = vmatpush.msra.mxu0 %v187
    %2029 = vmatpush.msra.mxu0 %v181
    %2030 = vmatpush.msra.mxu0 %v175
    %2031 = vmatpush.msra.mxu0 %v169
    %2032 = vmatpush.msra.mxu0 %v163
    %2033 = vmatpush.msra.mxu0 %v157
    %2034 = vmatpush.msra.mxu0 %v151
    %2035 = vmatpush.msra.mxu0 %v145
    %2036 = vmatpush.msra.mxu0 %v139
    %2037 = vmatpush.msra.mxu0 %v133
    %2038 = vmatpush.msra.mxu0 %v127
    %2039 = vmatmul.f32.gmra.mxu0 %v1952
    %v2040 = vpop.f32.mrf.mxu0
    %v2041 = vadd.f32 %v2021, %v2040
    %2042 = vdwg.mxu0
    %2043 = vmatpush.msra.mxu0 %v122
    %2044 = vmatpush.msra.mxu0 %v116
    %2045 = vmatpush.msra.mxu0 %v110
    %2046 = vmatpush.msra.mxu0 %v104
    %2047 = vmatpush.msra.mxu0 %v98
    %2048 = vmatpush.msra.mxu0 %v92
    %2049 = vmatpush.msra.mxu0 %v86
    %2050 = vmatpush.msra.mxu0 %v80
    %2051 = vmatpush.msra.mxu0 %v74
    %2052 = vmatpush.msra.mxu0 %v68
    %2053 = vmatpush.msra.mxu0 %v62
    %2054 = vmatpush.msra.mxu0 %v56
    %2055 = vmatpush.msra.mxu0 %v50
    %2056 = vmatpush.msra.mxu0 %v44
    %2057 = vmatpush.msra.mxu0 %v38
    %2058 = vmatpush.msra.mxu0 %v32
    %2059 = vmatmul.f32.gmra.mxu0 %v1951
    %v2060 = vpop.f32.mrf.mxu0
    %v2061 = vadd.f32 0.0, %v2060
    %2062 = vdwg.mxu0
    %2063 = vmatpush.msra.mxu0 %v218
    %2064 = vmatpush.msra.mxu0 %v212
    %2065 = vmatpush.msra.mxu0 %v206
    %2066 = vmatpush.msra.mxu0 %v200
    %2067 = vmatpush.msra.mxu0 %v194
    %2068 = vmatpush.msra.mxu0 %v188
    %2069 = vmatpush.msra.mxu0 %v182
    %2070 = vmatpush.msra.mxu0 %v176
    %2071 = vmatpush.msra.mxu0 %v170
    %2072 = vmatpush.msra.mxu0 %v164
    %2073 = vmatpush.msra.mxu0 %v158
    %2074 = vmatpush.msra.mxu0 %v152
    %2075 = vmatpush.msra.mxu0 %v146
    %2076 = vmatpush.msra.mxu0 %v140
    %2077 = vmatpush.msra.mxu0 %v134
    %2078 = vmatpush.msra.mxu0 %v128
    %2079 = vmatmul.f32.gmra.mxu0 %v1952
    %v2080 = vpop.f32.mrf.mxu0
    %v2081 = vadd.f32 %v2061, %v2080
    %2082 = vdwg.mxu0
    %2083 = vmatpush.msra.mxu0 %v123
    %2084 = vmatpush.msra.mxu0 %v117
    %2085 = vmatpush.msra.mxu0 %v111
    %2086 = vmatpush.msra.mxu0 %v105
    %2087 = vmatpush.msra.mxu0 %v99
    %2088 = vmatpush.msra.mxu0 %v93
    %2089 = vmatpush.msra.mxu0 %v87
    %2090 = vmatpush.msra.mxu0 %v81
    %2091 = vmatpush.msra.mxu0 %v75
    %2092 = vmatpush.msra.mxu0 %v69
    %2093 = vmatpush.msra.mxu0 %v63
    %2094 = vmatpush.msra.mxu0 %v57
    %2095 = vmatpush.msra.mxu0 %v51
    %2096 = vmatpush.msra.mxu0 %v45
    %2097 = vmatpush.msra.mxu0 %v39
    %2098 = vmatpush.msra.mxu0 %v33
    %2099 = vmatmul.f32.gmra.mxu0 %v1951
    %v2100 = vpop.f32.mrf.mxu0
    %v2101 = vadd.f32 0.0, %v2100
    %2102 = vdwg.mxu0
    %2103 = vmatpush.msra.mxu0 %v219
    %2104 = vmatpush.msra.mxu0 %v213
    %2105 = vmatpush.msra.mxu0 %v207
    %2106 = vmatpush.msra.mxu0 %v201
    %2107 = vmatpush.msra.mxu0 %v195
    %2108 = vmatpush.msra.mxu0 %v189
    %2109 = vmatpush.msra.mxu0 %v183
    %2110 = vmatpush.msra.mxu0 %v177
    %2111 = vmatpush.msra.mxu0 %v171
    %2112 = vmatpush.msra.mxu0 %v165
    %2113 = vmatpush.msra.mxu0 %v159
    %2114 = vmatpush.msra.mxu0 %v153
    %2115 = vmatpush.msra.mxu0 %v147
    %2116 = vmatpush.msra.mxu0 %v141
    %2117 = vmatpush.msra.mxu0 %v135
    %2118 = vmatpush.msra.mxu0 %v129
    %2119 = vmatmul.f32.gmra.mxu0 %v1952
    %v2120 = vpop.f32.mrf.mxu0
    %v2121 = vadd.f32 %v2101, %v2120
    %2122 = vdwg.mxu0
    %2123 = vmatpush.msra.mxu0 %v124
    %2124 = vmatpush.msra.mxu0 %v118
    %2125 = vmatpush.msra.mxu0 %v112
    %2126 = vmatpush.msra.mxu0 %v106
    %2127 = vmatpush.msra.mxu0 %v100
    %2128 = vmatpush.msra.mxu0 %v94
    %2129 = vmatpush.msra.mxu0 %v88
    %2130 = vmatpush.msra.mxu0 %v82
    %2131 = vmatpush.msra.mxu0 %v76
    %2132 = vmatpush.msra.mxu0 %v70
    %2133 = vmatpush.msra.mxu0 %v64
    %2134 = vmatpush.msra.mxu0 %v58
    %2135 = vmatpush.msra.mxu0 %v52
    %2136 = vmatpush.msra.mxu0 %v46
    %2137 = vmatpush.msra.mxu0 %v40
    %2138 = vmatpush.msra.mxu0 %v34
    %2139 = vmatmul.f32.gmra.mxu0 %v1951
    %v2140 = vpop.f32.mrf.mxu0
    %v2141 = vadd.f32 0.0, %v2140
    %2142 = vdwg.mxu0
    %2143 = vmatpush.msra.mxu0 %v220
    %2144 = vmatpush.msra.mxu0 %v214
    %2145 = vmatpush.msra.mxu0 %v208
    %2146 = vmatpush.msra.mxu0 %v202
    %2147 = vmatpush.msra.mxu0 %v196
    %2148 = vmatpush.msra.mxu0 %v190
    %2149 = vmatpush.msra.mxu0 %v184
    %2150 = vmatpush.msra.mxu0 %v178
    %2151 = vmatpush.msra.mxu0 %v172
    %2152 = vmatpush.msra.mxu0 %v166
    %2153 = vmatpush.msra.mxu0 %v160
    %2154 = vmatpush.msra.mxu0 %v154
    %2155 = vmatpush.msra.mxu0 %v148
    %2156 = vmatpush.msra.mxu0 %v142
    %2157 = vmatpush.msra.mxu0 %v136
    %2158 = vmatpush.msra.mxu0 %v130
    %2159 = vmatmul.f32.gmra.mxu0 %v1952
    %v2160 = vpop.f32.mrf.mxu0
    %v2161 = vadd.f32 %v2141, %v2160
    %2162 = vdwg.mxu0
    %2163 = vmatpush.msra.mxu0 %v125
    %2164 = vmatpush.msra.mxu0 %v119
    %2165 = vmatpush.msra.mxu0 %v113
    %2166 = vmatpush.msra.mxu0 %v107
    %2167 = vmatpush.msra.mxu0 %v101
    %2168 = vmatpush.msra.mxu0 %v95
    %2169 = vmatpush.msra.mxu0 %v89
    %2170 = vmatpush.msra.mxu0 %v83
    %2171 = vmatpush.msra.mxu0 %v77
    %2172 = vmatpush.msra.mxu0 %v71
    %2173 = vmatpush.msra.mxu0 %v65
    %2174 = vmatpush.msra.mxu0 %v59
    %2175 = vmatpush.msra.mxu0 %v53
    %2176 = vmatpush.msra.mxu0 %v47
    %2177 = vmatpush.msra.mxu0 %v41
    %2178 = vmatpush.msra.mxu0 %v35
    %2179 = vmatmul.f32.gmra.mxu0 %v1951
    %v2180 = vpop.f32.mrf.mxu0
    %v2181 = vadd.f32 0.0, %v2180
    %2182 = vdwg.mxu0
    %2183 = vmatpush.msra.mxu0 %v221
    %2184 = vmatpush.msra.mxu0 %v215
    %2185 = vmatpush.msra.mxu0 %v209
    %2186 = vmatpush.msra.mxu0 %v203
    %2187 = vmatpush.msra.mxu0 %v197
    %2188 = vmatpush.msra.mxu0 %v191
    %2189 = vmatpush.msra.mxu0 %v185
    %2190 = vmatpush.msra.mxu0 %v179
    %2191 = vmatpush.msra.mxu0 %v173
    %2192 = vmatpush.msra.mxu0 %v167
    %2193 = vmatpush.msra.mxu0 %v161
    %2194 = vmatpush.msra.mxu0 %v155
    %2195 = vmatpush.msra.mxu0 %v149
    %2196 = vmatpush.msra.mxu0 %v143
    %2197 = vmatpush.msra.mxu0 %v137
    %2198 = vmatpush.msra.mxu0 %v131
    %2199 = vmatmul.f32.gmra.mxu0 %v1952
    %v2200 = vpop.f32.mrf.mxu0
    %v2201 = vadd.f32 %v2181, %v2200
    %2202 = vdwg.mxu0
    %v2203 = vadd.f32 %v1957, %v2001
    %v2204 = vadd.f32 %v1958, %v2041
    %v2205 = vadd.f32 %v1959, %v2081
    %v2206 = vadd.f32 %v1960, %v2121
    %v2207 = vxor.u32 %v2203, 2147483648
    %v2208 = vxor.u32 %v2204, 2147483648
    %v2209 = vxor.u32 %v2205, 2147483648
    %v2210 = vxor.u32 %v2206, 2147483648
    %v2211 = vmul.f32 %v2207, 1.442695
    %v2212 = vpow.pop %v2211
    %v2213 = vmul.f32 %v2208, 1.442695
    %v2214 = vpow.pop %v2213
    %v2215 = vmul.f32 %v2209, 1.442695
    %v2216 = vpow.pop %v2215
    %v2217 = vmul.f32 %v2210, 1.442695
    %v2218 = vpow.pop %v2217
    %v2219 = vadd.f32 %v2212, 1.0
    %v2220 = vadd.f32 %v2214, 1.0
    %v2221 = vadd.f32 %v2216, 1.0
    %v2222 = vadd.f32 %v2218, 1.0
    %v2223 = vrcp.pop %v2219
    %v2224 = vmul.f32 %v2219, %v2223
    %v2225 = vsub.f32 1.0, %v2224
    %v2226 = vmul.f32 %v2223, %v2225
    %v2227 = vadd.f32 %v2223, %v2226
    %vm2228 = vweird.f32 %v2219
    %vm2229 = vweird.f32 %v2223
    %vm2230 = vmor %vm2228, %vm2229
    %v2231 = vsel %vm2230, %v2223, %v2227
    %v2232 = vand.u32 2147483647, %v2219
    %vm2233 = vcmp.eq.f32.partialorder %v2232, 8.507059e+37
    %v2234 = vand.u32 %v2219, 2147483648
    %v2235 = vor.u32 1.1754944e-38, %v2234
    %v2236 = vsel %vm2233, %v2235, %v2231
    %v2237 = vmul.f32 1.0, %v2236
    %v2238 = vrcp.pop %v2220
    %v2239 = vmul.f32 %v2220, %v2238
    %v2240 = vsub.f32 1.0, %v2239
    %v2241 = vmul.f32 %v2238, %v2240
    %v2242 = vadd.f32 %v2238, %v2241
    %vm2243 = vweird.f32 %v2220
    %vm2244 = vweird.f32 %v2238
    %vm2245 = vmor %vm2243, %vm2244
    %v2246 = vsel %vm2245, %v2238, %v2242
    %v2247 = vand.u32 2147483647, %v2220
    %vm2248 = vcmp.eq.f32.partialorder %v2247, 8.507059e+37
    %v2249 = vand.u32 %v2220, 2147483648
    %v2250 = vor.u32 1.1754944e-38, %v2249
    %v2251 = vsel %vm2248, %v2250, %v2246
    %v2252 = vmul.f32 1.0, %v2251
    %v2253 = vrcp.pop %v2221
    %v2254 = vmul.f32 %v2221, %v2253
    %v2255 = vsub.f32 1.0, %v2254
    %v2256 = vmul.f32 %v2253, %v2255
    %v2257 = vadd.f32 %v2253, %v2256
    %vm2258 = vweird.f32 %v2221
    %vm2259 = vweird.f32 %v2253
    %vm2260 = vmor %vm2258, %vm2259
    %v2261 = vsel %vm2260, %v2253, %v2257
    %v2262 = vand.u32 2147483647, %v2221
    %vm2263 = vcmp.eq.f32.partialorder %v2262, 8.507059e+37
    %v2264 = vand.u32 %v2221, 2147483648
    %v2265 = vor.u32 1.1754944e-38, %v2264
    %v2266 = vsel %vm2263, %v2265, %v2261
    %v2267 = vmul.f32 1.0, %v2266
    %v2268 = vrcp.pop %v2222
    %v2269 = vmul.f32 %v2222, %v2268
    %v2270 = vsub.f32 1.0, %v2269
    %v2271 = vmul.f32 %v2268, %v2270
    %v2272 = vadd.f32 %v2268, %v2271
    %vm2273 = vweird.f32 %v2222
    %vm2274 = vweird.f32 %v2268
    %vm2275 = vmor %vm2273, %vm2274
    %v2276 = vsel %vm2275, %v2268, %v2272
    %v2277 = vand.u32 2147483647, %v2222
    %vm2278 = vcmp.eq.f32.partialorder %v2277, 8.507059e+37
    %v2279 = vand.u32 %v2222, 2147483648
    %v2280 = vor.u32 1.1754944e-38, %v2279
    %v2281 = vsel %vm2278, %v2280, %v2276
    %v2282 = vmul.f32 1.0, %v2281
    %v2283 = vadd.f32 %v2161, %v550
    %v2284 = vadd.f32 %v2201, %v551
    %v2285 = vmul.f32 %v2237, %v2283
    %v2286 = vmul.f32 %v2252, %v2284
    %v2287 = vadd.f32 %v1961, %v2285
    %v2288 = vadd.f32 %v1962, %v2286
    %v2289 = vtanh.pop %v2287
    %v2290 = vtanh.pop %v2288
    %v2291 = vsub.f32 1.0, %v2267
    %v2292 = vsub.f32 1.0, %v2282
    %v2293 = vmul.f32 %v2291, %v2289
    %v2294 = vmul.f32 %v2292, %v2290
    %v2295 = vmul.f32 %v2267, %v1951
    %v2296 = vmul.f32 %v2282, %v1952
    %v2297 = vadd.f32 %v2293, %v2295
    %v2298 = vadd.f32 %v2294, %v2296
    %s2299 = scalar_lea.vmem %s3, 80
    %2300 = vst [vmem:[%s2299] sm:$0xff] %v2297
    %2301 = vst [vmem:[%s2299 + $0x8] sm:$0xff] %v2298
    %s2302 = scalar_lea.vmem %s0, 288
    %v2303 = vld [vmem:[%s2302] sm:$0xff]
    %v2304 = vld [vmem:[%s2302 + $0x8] sm:$0xff]
    %v2305 = vld [vmem:[%s2302 + $0x10] sm:$0xff]
    %v2306 = vld [vmem:[%s2302 + $0x18] sm:$0xff]
    %v2307 = vld [vmem:[%s2302 + $0x20] sm:$0xff]
    %v2308 = vld [vmem:[%s2302 + $0x28] sm:$0xff]
    %2309 = vmatpush.msra.mxu0 %v120
    %2310 = vmatpush.msra.mxu0 %v114
    %2311 = vmatpush.msra.mxu0 %v108
    %2312 = vmatpush.msra.mxu0 %v102
    %2313 = vmatpush.msra.mxu0 %v96
    %2314 = vmatpush.msra.mxu0 %v90
    %2315 = vmatpush.msra.mxu0 %v84
    %2316 = vmatpush.msra.mxu0 %v78
    %2317 = vmatpush.msra.mxu0 %v72
    %2318 = vmatpush.msra.mxu0 %v66
    %2319 = vmatpush.msra.mxu0 %v60
    %2320 = vmatpush.msra.mxu0 %v54
    %2321 = vmatpush.msra.mxu0 %v48
    %2322 = vmatpush.msra.mxu0 %v42
    %2323 = vmatpush.msra.mxu0 %v36
    %2324 = vmatpush.msra.mxu0 %v30
    %2325 = vmatmul.f32.gmra.mxu0 %v2297
    %v2326 = vpop.f32.mrf.mxu0
    %v2327 = vadd.f32 0.0, %v2326
    %2328 = vdwg.mxu0
    %2329 = vmatpush.msra.mxu0 %v216
    %2330 = vmatpush.msra.mxu0 %v210
    %2331 = vmatpush.msra.mxu0 %v204
    %2332 = vmatpush.msra.mxu0 %v198
    %2333 = vmatpush.msra.mxu0 %v192
    %2334 = vmatpush.msra.mxu0 %v186
    %2335 = vmatpush.msra.mxu0 %v180
    %2336 = vmatpush.msra.mxu0 %v174
    %2337 = vmatpush.msra.mxu0 %v168
    %2338 = vmatpush.msra.mxu0 %v162
    %2339 = vmatpush.msra.mxu0 %v156
    %2340 = vmatpush.msra.mxu0 %v150
    %2341 = vmatpush.msra.mxu0 %v144
    %2342 = vmatpush.msra.mxu0 %v138
    %2343 = vmatpush.msra.mxu0 %v132
    %2344 = vmatpush.msra.mxu0 %v126
    %2345 = vmatmul.f32.gmra.mxu0 %v2298
    %v2346 = vpop.f32.mrf.mxu0
    %v2347 = vadd.f32 %v2327, %v2346
    %2348 = vdwg.mxu0
    %2349 = vmatpush.msra.mxu0 %v121
    %2350 = vmatpush.msra.mxu0 %v115
    %2351 = vmatpush.msra.mxu0 %v109
    %2352 = vmatpush.msra.mxu0 %v103
    %2353 = vmatpush.msra.mxu0 %v97
    %2354 = vmatpush.msra.mxu0 %v91
    %2355 = vmatpush.msra.mxu0 %v85
    %2356 = vmatpush.msra.mxu0 %v79
    %2357 = vmatpush.msra.mxu0 %v73
    %2358 = vmatpush.msra.mxu0 %v67
    %2359 = vmatpush.msra.mxu0 %v61
    %2360 = vmatpush.msra.mxu0 %v55
    %2361 = vmatpush.msra.mxu0 %v49
    %2362 = vmatpush.msra.mxu0 %v43
    %2363 = vmatpush.msra.mxu0 %v37
    %2364 = vmatpush.msra.mxu0 %v31
    %2365 = vmatmul.f32.gmra.mxu0 %v2297
    %v2366 = vpop.f32.mrf.mxu0
    %v2367 = vadd.f32 0.0, %v2366
    %2368 = vdwg.mxu0
    %2369 = vmatpush.msra.mxu0 %v217
    %2370 = vmatpush.msra.mxu0 %v211
    %2371 = vmatpush.msra.mxu0 %v205
    %2372 = vmatpush.msra.mxu0 %v199
    %2373 = vmatpush.msra.mxu0 %v193
    %2374 = vmatpush.msra.mxu0 %v187
    %2375 = vmatpush.msra.mxu0 %v181
    %2376 = vmatpush.msra.mxu0 %v175
    %2377 = vmatpush.msra.mxu0 %v169
    %2378 = vmatpush.msra.mxu0 %v163
    %2379 = vmatpush.msra.mxu0 %v157
    %2380 = vmatpush.msra.mxu0 %v151
    %2381 = vmatpush.msra.mxu0 %v145
    %2382 = vmatpush.msra.mxu0 %v139
    %2383 = vmatpush.msra.mxu0 %v133
    %2384 = vmatpush.msra.mxu0 %v127
    %2385 = vmatmul.f32.gmra.mxu0 %v2298
    %v2386 = vpop.f32.mrf.mxu0
    %v2387 = vadd.f32 %v2367, %v2386
    %2388 = vdwg.mxu0
    %2389 = vmatpush.msra.mxu0 %v122
    %2390 = vmatpush.msra.mxu0 %v116
    %2391 = vmatpush.msra.mxu0 %v110
    %2392 = vmatpush.msra.mxu0 %v104
    %2393 = vmatpush.msra.mxu0 %v98
    %2394 = vmatpush.msra.mxu0 %v92
    %2395 = vmatpush.msra.mxu0 %v86
    %2396 = vmatpush.msra.mxu0 %v80
    %2397 = vmatpush.msra.mxu0 %v74
    %2398 = vmatpush.msra.mxu0 %v68
    %2399 = vmatpush.msra.mxu0 %v62
    %2400 = vmatpush.msra.mxu0 %v56
    %2401 = vmatpush.msra.mxu0 %v50
    %2402 = vmatpush.msra.mxu0 %v44
    %2403 = vmatpush.msra.mxu0 %v38
    %2404 = vmatpush.msra.mxu0 %v32
    %2405 = vmatmul.f32.gmra.mxu0 %v2297
    %v2406 = vpop.f32.mrf.mxu0
    %v2407 = vadd.f32 0.0, %v2406
    %2408 = vdwg.mxu0
    %2409 = vmatpush.msra.mxu0 %v218
    %2410 = vmatpush.msra.mxu0 %v212
    %2411 = vmatpush.msra.mxu0 %v206
    %2412 = vmatpush.msra.mxu0 %v200
    %2413 = vmatpush.msra.mxu0 %v194
    %2414 = vmatpush.msra.mxu0 %v188
    %2415 = vmatpush.msra.mxu0 %v182
    %2416 = vmatpush.msra.mxu0 %v176
    %2417 = vmatpush.msra.mxu0 %v170
    %2418 = vmatpush.msra.mxu0 %v164
    %2419 = vmatpush.msra.mxu0 %v158
    %2420 = vmatpush.msra.mxu0 %v152
    %2421 = vmatpush.msra.mxu0 %v146
    %2422 = vmatpush.msra.mxu0 %v140
    %2423 = vmatpush.msra.mxu0 %v134
    %2424 = vmatpush.msra.mxu0 %v128
    %2425 = vmatmul.f32.gmra.mxu0 %v2298
    %v2426 = vpop.f32.mrf.mxu0
    %v2427 = vadd.f32 %v2407, %v2426
    %2428 = vdwg.mxu0
    %2429 = vmatpush.msra.mxu0 %v123
    %2430 = vmatpush.msra.mxu0 %v117
    %2431 = vmatpush.msra.mxu0 %v111
    %2432 = vmatpush.msra.mxu0 %v105
    %2433 = vmatpush.msra.mxu0 %v99
    %2434 = vmatpush.msra.mxu0 %v93
    %2435 = vmatpush.msra.mxu0 %v87
    %2436 = vmatpush.msra.mxu0 %v81
    %2437 = vmatpush.msra.mxu0 %v75
    %2438 = vmatpush.msra.mxu0 %v69
    %2439 = vmatpush.msra.mxu0 %v63
    %2440 = vmatpush.msra.mxu0 %v57
    %2441 = vmatpush.msra.mxu0 %v51
    %2442 = vmatpush.msra.mxu0 %v45
    %2443 = vmatpush.msra.mxu0 %v39
    %2444 = vmatpush.msra.mxu0 %v33
    %2445 = vmatmul.f32.gmra.mxu0 %v2297
    %v2446 = vpop.f32.mrf.mxu0
    %v2447 = vadd.f32 0.0, %v2446
    %2448 = vdwg.mxu0
    %2449 = vmatpush.msra.mxu0 %v219
    %2450 = vmatpush.msra.mxu0 %v213
    %2451 = vmatpush.msra.mxu0 %v207
    %2452 = vmatpush.msra.mxu0 %v201
    %2453 = vmatpush.msra.mxu0 %v195
    %2454 = vmatpush.msra.mxu0 %v189
    %2455 = vmatpush.msra.mxu0 %v183
    %2456 = vmatpush.msra.mxu0 %v177
    %2457 = vmatpush.msra.mxu0 %v171
    %2458 = vmatpush.msra.mxu0 %v165
    %2459 = vmatpush.msra.mxu0 %v159
    %2460 = vmatpush.msra.mxu0 %v153
    %2461 = vmatpush.msra.mxu0 %v147
    %2462 = vmatpush.msra.mxu0 %v141
    %2463 = vmatpush.msra.mxu0 %v135
    %2464 = vmatpush.msra.mxu0 %v129
    %2465 = vmatmul.f32.gmra.mxu0 %v2298
    %v2466 = vpop.f32.mrf.mxu0
    %v2467 = vadd.f32 %v2447, %v2466
    %2468 = vdwg.mxu0
    %2469 = vmatpush.msra.mxu0 %v124
    %2470 = vmatpush.msra.mxu0 %v118
    %2471 = vmatpush.msra.mxu0 %v112
    %2472 = vmatpush.msra.mxu0 %v106
    %2473 = vmatpush.msra.mxu0 %v100
    %2474 = vmatpush.msra.mxu0 %v94
    %2475 = vmatpush.msra.mxu0 %v88
    %2476 = vmatpush.msra.mxu0 %v82
    %2477 = vmatpush.msra.mxu0 %v76
    %2478 = vmatpush.msra.mxu0 %v70
    %2479 = vmatpush.msra.mxu0 %v64
    %2480 = vmatpush.msra.mxu0 %v58
    %2481 = vmatpush.msra.mxu0 %v52
    %2482 = vmatpush.msra.mxu0 %v46
    %2483 = vmatpush.msra.mxu0 %v40
    %2484 = vmatpush.msra.mxu0 %v34
    %2485 = vmatmul.f32.gmra.mxu0 %v2297
    %v2486 = vpop.f32.mrf.mxu0
    %v2487 = vadd.f32 0.0, %v2486
    %2488 = vdwg.mxu0
    %2489 = vmatpush.msra.mxu0 %v220
    %2490 = vmatpush.msra.mxu0 %v214
    %2491 = vmatpush.msra.mxu0 %v208
    %2492 = vmatpush.msra.mxu0 %v202
    %2493 = vmatpush.msra.mxu0 %v196
    %2494 = vmatpush.msra.mxu0 %v190
    %2495 = vmatpush.msra.mxu0 %v184
    %2496 = vmatpush.msra.mxu0 %v178
    %2497 = vmatpush.msra.mxu0 %v172
    %2498 = vmatpush.msra.mxu0 %v166
    %2499 = vmatpush.msra.mxu0 %v160
    %2500 = vmatpush.msra.mxu0 %v154
    %2501 = vmatpush.msra.mxu0 %v148
    %2502 = vmatpush.msra.mxu0 %v142
    %2503 = vmatpush.msra.mxu0 %v136
    %2504 = vmatpush.msra.mxu0 %v130
    %2505 = vmatmul.f32.gmra.mxu0 %v2298
    %v2506 = vpop.f32.mrf.mxu0
    %v2507 = vadd.f32 %v2487, %v2506
    %2508 = vdwg.mxu0
    %2509 = vmatpush.msra.mxu0 %v125
    %2510 = vmatpush.msra.mxu0 %v119
    %2511 = vmatpush.msra.mxu0 %v113
    %2512 = vmatpush.msra.mxu0 %v107
    %2513 = vmatpush.msra.mxu0 %v101
    %2514 = vmatpush.msra.mxu0 %v95
    %2515 = vmatpush.msra.mxu0 %v89
    %2516 = vmatpush.msra.mxu0 %v83
    %2517 = vmatpush.msra.mxu0 %v77
    %2518 = vmatpush.msra.mxu0 %v71
    %2519 = vmatpush.msra.mxu0 %v65
    %2520 = vmatpush.msra.mxu0 %v59
    %2521 = vmatpush.msra.mxu0 %v53
    %2522 = vmatpush.msra.mxu0 %v47
    %2523 = vmatpush.msra.mxu0 %v41
    %2524 = vmatpush.msra.mxu0 %v35
    %2525 = vmatmul.f32.gmra.mxu0 %v2297
    %v2526 = vpop.f32.mrf.mxu0
    %v2527 = vadd.f32 0.0, %v2526
    %2528 = vdwg.mxu0
    %2529 = vmatpush.msra.mxu0 %v221
    %2530 = vmatpush.msra.mxu0 %v215
    %2531 = vmatpush.msra.mxu0 %v209
    %2532 = vmatpush.msra.mxu0 %v203
    %2533 = vmatpush.msra.mxu0 %v197
    %2534 = vmatpush.msra.mxu0 %v191
    %2535 = vmatpush.msra.mxu0 %v185
    %2536 = vmatpush.msra.mxu0 %v179
    %2537 = vmatpush.msra.mxu0 %v173
    %2538 = vmatpush.msra.mxu0 %v167
    %2539 = vmatpush.msra.mxu0 %v161
    %2540 = vmatpush.msra.mxu0 %v155
    %2541 = vmatpush.msra.mxu0 %v149
    %2542 = vmatpush.msra.mxu0 %v143
    %2543 = vmatpush.msra.mxu0 %v137
    %2544 = vmatpush.msra.mxu0 %v131
    %2545 = vmatmul.f32.gmra.mxu0 %v2298
    %v2546 = vpop.f32.mrf.mxu0
    %v2547 = vadd.f32 %v2527, %v2546
    %2548 = vdwg.mxu0
    %v2549 = vadd.f32 %v2303, %v2347
    %v2550 = vadd.f32 %v2304, %v2387
    %v2551 = vadd.f32 %v2305, %v2427
    %v2552 = vadd.f32 %v2306, %v2467
    %v2553 = vxor.u32 %v2549, 2147483648
    %v2554 = vxor.u32 %v2550, 2147483648
    %v2555 = vxor.u32 %v2551, 2147483648
    %v2556 = vxor.u32 %v2552, 2147483648
    %v2557 = vmul.f32 %v2553, 1.442695
    %v2558 = vpow.pop %v2557
    %v2559 = vmul.f32 %v2554, 1.442695
    %v2560 = vpow.pop %v2559
    %v2561 = vmul.f32 %v2555, 1.442695
    %v2562 = vpow.pop %v2561
    %v2563 = vmul.f32 %v2556, 1.442695
    %v2564 = vpow.pop %v2563
    %v2565 = vadd.f32 %v2558, 1.0
    %v2566 = vadd.f32 %v2560, 1.0
    %v2567 = vadd.f32 %v2562, 1.0
    %v2568 = vadd.f32 %v2564, 1.0
    %v2569 = vrcp.pop %v2565
    %v2570 = vmul.f32 %v2565, %v2569
    %v2571 = vsub.f32 1.0, %v2570
    %v2572 = vmul.f32 %v2569, %v2571
    %v2573 = vadd.f32 %v2569, %v2572
    %vm2574 = vweird.f32 %v2565
    %vm2575 = vweird.f32 %v2569
    %vm2576 = vmor %vm2574, %vm2575
    %v2577 = vsel %vm2576, %v2569, %v2573
    %v2578 = vand.u32 2147483647, %v2565
    %vm2579 = vcmp.eq.f32.partialorder %v2578, 8.507059e+37
    %v2580 = vand.u32 %v2565, 2147483648
    %v2581 = vor.u32 1.1754944e-38, %v2580
    %v2582 = vsel %vm2579, %v2581, %v2577
    %v2583 = vmul.f32 1.0, %v2582
    %v2584 = vrcp.pop %v2566
    %v2585 = vmul.f32 %v2566, %v2584
    %v2586 = vsub.f32 1.0, %v2585
    %v2587 = vmul.f32 %v2584, %v2586
    %v2588 = vadd.f32 %v2584, %v2587
    %vm2589 = vweird.f32 %v2566
    %vm2590 = vweird.f32 %v2584
    %vm2591 = vmor %vm2589, %vm2590
    %v2592 = vsel %vm2591, %v2584, %v2588
    %v2593 = vand.u32 2147483647, %v2566
    %vm2594 = vcmp.eq.f32.partialorder %v2593, 8.507059e+37
    %v2595 = vand.u32 %v2566, 2147483648
    %v2596 = vor.u32 1.1754944e-38, %v2595
    %v2597 = vsel %vm2594, %v2596, %v2592
    %v2598 = vmul.f32 1.0, %v2597
    %v2599 = vrcp.pop %v2567
    %v2600 = vmul.f32 %v2567, %v2599
    %v2601 = vsub.f32 1.0, %v2600
    %v2602 = vmul.f32 %v2599, %v2601
    %v2603 = vadd.f32 %v2599, %v2602
    %vm2604 = vweird.f32 %v2567
    %vm2605 = vweird.f32 %v2599
    %vm2606 = vmor %vm2604, %vm2605
    %v2607 = vsel %vm2606, %v2599, %v2603
    %v2608 = vand.u32 2147483647, %v2567
    %vm2609 = vcmp.eq.f32.partialorder %v2608, 8.507059e+37
    %v2610 = vand.u32 %v2567, 2147483648
    %v2611 = vor.u32 1.1754944e-38, %v2610
    %v2612 = vsel %vm2609, %v2611, %v2607
    %v2613 = vmul.f32 1.0, %v2612
    %v2614 = vrcp.pop %v2568
    %v2615 = vmul.f32 %v2568, %v2614
    %v2616 = vsub.f32 1.0, %v2615
    %v2617 = vmul.f32 %v2614, %v2616
    %v2618 = vadd.f32 %v2614, %v2617
    %vm2619 = vweird.f32 %v2568
    %vm2620 = vweird.f32 %v2614
    %vm2621 = vmor %vm2619, %vm2620
    %v2622 = vsel %vm2621, %v2614, %v2618
    %v2623 = vand.u32 2147483647, %v2568
    %vm2624 = vcmp.eq.f32.partialorder %v2623, 8.507059e+37
    %v2625 = vand.u32 %v2568, 2147483648
    %v2626 = vor.u32 1.1754944e-38, %v2625
    %v2627 = vsel %vm2624, %v2626, %v2622
    %v2628 = vmul.f32 1.0, %v2627
    %v2629 = vadd.f32 %v2507, %v550
    %v2630 = vadd.f32 %v2547, %v551
    %v2631 = vmul.f32 %v2583, %v2629
    %v2632 = vmul.f32 %v2598, %v2630
    %v2633 = vadd.f32 %v2307, %v2631
    %v2634 = vadd.f32 %v2308, %v2632
    %v2635 = vtanh.pop %v2633
    %v2636 = vtanh.pop %v2634
    %v2637 = vsub.f32 1.0, %v2613
    %v2638 = vsub.f32 1.0, %v2628
    %v2639 = vmul.f32 %v2637, %v2635
    %v2640 = vmul.f32 %v2638, %v2636
    %v2641 = vmul.f32 %v2613, %v2297
    %v2642 = vmul.f32 %v2628, %v2298
    %v2643 = vadd.f32 %v2639, %v2641
    %v2644 = vadd.f32 %v2640, %v2642
    %s2645 = scalar_lea.vmem %s3, 96
    %2646 = vst [vmem:[%s2645] sm:$0xff] %v2643
    %2647 = vst [vmem:[%s2645 + $0x8] sm:$0xff] %v2644
    %s2648 = scalar_lea.vmem %s0, 336
    %v2649 = vld [vmem:[%s2648] sm:$0xff]
    %v2650 = vld [vmem:[%s2648 + $0x8] sm:$0xff]
    %v2651 = vld [vmem:[%s2648 + $0x10] sm:$0xff]
    %v2652 = vld [vmem:[%s2648 + $0x18] sm:$0xff]
    %v2653 = vld [vmem:[%s2648 + $0x20] sm:$0xff]
    %v2654 = vld [vmem:[%s2648 + $0x28] sm:$0xff]
    %2655 = vmatpush.msra.mxu0 %v120
    %2656 = vmatpush.msra.mxu0 %v114
    %2657 = vmatpush.msra.mxu0 %v108
    %2658 = vmatpush.msra.mxu0 %v102
    %2659 = vmatpush.msra.mxu0 %v96
    %2660 = vmatpush.msra.mxu0 %v90
    %2661 = vmatpush.msra.mxu0 %v84
    %2662 = vmatpush.msra.mxu0 %v78
    %2663 = vmatpush.msra.mxu0 %v72
    %2664 = vmatpush.msra.mxu0 %v66
    %2665 = vmatpush.msra.mxu0 %v60
    %2666 = vmatpush.msra.mxu0 %v54
    %2667 = vmatpush.msra.mxu0 %v48
    %2668 = vmatpush.msra.mxu0 %v42
    %2669 = vmatpush.msra.mxu0 %v36
    %2670 = vmatpush.msra.mxu0 %v30
    %2671 = vmatmul.f32.gmra.mxu0 %v2643
    %v2672 = vpop.f32.mrf.mxu0
    %v2673 = vadd.f32 0.0, %v2672
    %2674 = vdwg.mxu0
    %2675 = vmatpush.msra.mxu0 %v216
    %2676 = vmatpush.msra.mxu0 %v210
    %2677 = vmatpush.msra.mxu0 %v204
    %2678 = vmatpush.msra.mxu0 %v198
    %2679 = vmatpush.msra.mxu0 %v192
    %2680 = vmatpush.msra.mxu0 %v186
    %2681 = vmatpush.msra.mxu0 %v180
    %2682 = vmatpush.msra.mxu0 %v174
    %2683 = vmatpush.msra.mxu0 %v168
    %2684 = vmatpush.msra.mxu0 %v162
    %2685 = vmatpush.msra.mxu0 %v156
    %2686 = vmatpush.msra.mxu0 %v150
    %2687 = vmatpush.msra.mxu0 %v144
    %2688 = vmatpush.msra.mxu0 %v138
    %2689 = vmatpush.msra.mxu0 %v132
    %2690 = vmatpush.msra.mxu0 %v126
    %2691 = vmatmul.f32.gmra.mxu0 %v2644
    %v2692 = vpop.f32.mrf.mxu0
    %v2693 = vadd.f32 %v2673, %v2692
    %2694 = vdwg.mxu0
    %2695 = vmatpush.msra.mxu0 %v121
    %2696 = vmatpush.msra.mxu0 %v115
    %2697 = vmatpush.msra.mxu0 %v109
    %2698 = vmatpush.msra.mxu0 %v103
    %2699 = vmatpush.msra.mxu0 %v97
    %2700 = vmatpush.msra.mxu0 %v91
    %2701 = vmatpush.msra.mxu0 %v85
    %2702 = vmatpush.msra.mxu0 %v79
    %2703 = vmatpush.msra.mxu0 %v73
    %2704 = vmatpush.msra.mxu0 %v67
    %2705 = vmatpush.msra.mxu0 %v61
    %2706 = vmatpush.msra.mxu0 %v55
    %2707 = vmatpush.msra.mxu0 %v49
    %2708 = vmatpush.msra.mxu0 %v43
    %2709 = vmatpush.msra.mxu0 %v37
    %2710 = vmatpush.msra.mxu0 %v31
    %2711 = vmatmul.f32.gmra.mxu0 %v2643
    %v2712 = vpop.f32.mrf.mxu0
    %v2713 = vadd.f32 0.0, %v2712
    %2714 = vdwg.mxu0
    %2715 = vmatpush.msra.mxu0 %v217
    %2716 = vmatpush.msra.mxu0 %v211
    %2717 = vmatpush.msra.mxu0 %v205
    %2718 = vmatpush.msra.mxu0 %v199
    %2719 = vmatpush.msra.mxu0 %v193
    %2720 = vmatpush.msra.mxu0 %v187
    %2721 = vmatpush.msra.mxu0 %v181
    %2722 = vmatpush.msra.mxu0 %v175
    %2723 = vmatpush.msra.mxu0 %v169
    %2724 = vmatpush.msra.mxu0 %v163
    %2725 = vmatpush.msra.mxu0 %v157
    %2726 = vmatpush.msra.mxu0 %v151
    %2727 = vmatpush.msra.mxu0 %v145
    %2728 = vmatpush.msra.mxu0 %v139
    %2729 = vmatpush.msra.mxu0 %v133
    %2730 = vmatpush.msra.mxu0 %v127
    %2731 = vmatmul.f32.gmra.mxu0 %v2644
    %v2732 = vpop.f32.mrf.mxu0
    %v2733 = vadd.f32 %v2713, %v2732
    %2734 = vdwg.mxu0
    %2735 = vmatpush.msra.mxu0 %v122
    %2736 = vmatpush.msra.mxu0 %v116
    %2737 = vmatpush.msra.mxu0 %v110
    %2738 = vmatpush.msra.mxu0 %v104
    %2739 = vmatpush.msra.mxu0 %v98
    %2740 = vmatpush.msra.mxu0 %v92
    %2741 = vmatpush.msra.mxu0 %v86
    %2742 = vmatpush.msra.mxu0 %v80
    %2743 = vmatpush.msra.mxu0 %v74
    %2744 = vmatpush.msra.mxu0 %v68
    %2745 = vmatpush.msra.mxu0 %v62
    %2746 = vmatpush.msra.mxu0 %v56
    %2747 = vmatpush.msra.mxu0 %v50
    %2748 = vmatpush.msra.mxu0 %v44
    %2749 = vmatpush.msra.mxu0 %v38
    %2750 = vmatpush.msra.mxu0 %v32
    %2751 = vmatmul.f32.gmra.mxu0 %v2643
    %v2752 = vpop.f32.mrf.mxu0
    %v2753 = vadd.f32 0.0, %v2752
    %2754 = vdwg.mxu0
    %2755 = vmatpush.msra.mxu0 %v218
    %2756 = vmatpush.msra.mxu0 %v212
    %2757 = vmatpush.msra.mxu0 %v206
    %2758 = vmatpush.msra.mxu0 %v200
    %2759 = vmatpush.msra.mxu0 %v194
    %2760 = vmatpush.msra.mxu0 %v188
    %2761 = vmatpush.msra.mxu0 %v182
    %2762 = vmatpush.msra.mxu0 %v176
    %2763 = vmatpush.msra.mxu0 %v170
    %2764 = vmatpush.msra.mxu0 %v164
    %2765 = vmatpush.msra.mxu0 %v158
    %2766 = vmatpush.msra.mxu0 %v152
    %2767 = vmatpush.msra.mxu0 %v146
    %2768 = vmatpush.msra.mxu0 %v140
    %2769 = vmatpush.msra.mxu0 %v134
    %2770 = vmatpush.msra.mxu0 %v128
    %2771 = vmatmul.f32.gmra.mxu0 %v2644
    %v2772 = vpop.f32.mrf.mxu0
    %v2773 = vadd.f32 %v2753, %v2772
    %2774 = vdwg.mxu0
    %2775 = vmatpush.msra.mxu0 %v123
    %2776 = vmatpush.msra.mxu0 %v117
    %2777 = vmatpush.msra.mxu0 %v111
    %2778 = vmatpush.msra.mxu0 %v105
    %2779 = vmatpush.msra.mxu0 %v99
    %2780 = vmatpush.msra.mxu0 %v93
    %2781 = vmatpush.msra.mxu0 %v87
    %2782 = vmatpush.msra.mxu0 %v81
    %2783 = vmatpush.msra.mxu0 %v75
    %2784 = vmatpush.msra.mxu0 %v69
    %2785 = vmatpush.msra.mxu0 %v63
    %2786 = vmatpush.msra.mxu0 %v57
    %2787 = vmatpush.msra.mxu0 %v51
    %2788 = vmatpush.msra.mxu0 %v45
    %2789 = vmatpush.msra.mxu0 %v39
    %2790 = vmatpush.msra.mxu0 %v33
    %2791 = vmatmul.f32.gmra.mxu0 %v2643
    %v2792 = vpop.f32.mrf.mxu0
    %v2793 = vadd.f32 0.0, %v2792
    %2794 = vdwg.mxu0
    %2795 = vmatpush.msra.mxu0 %v219
    %2796 = vmatpush.msra.mxu0 %v213
    %2797 = vmatpush.msra.mxu0 %v207
    %2798 = vmatpush.msra.mxu0 %v201
    %2799 = vmatpush.msra.mxu0 %v195
    %2800 = vmatpush.msra.mxu0 %v189
    %2801 = vmatpush.msra.mxu0 %v183
    %2802 = vmatpush.msra.mxu0 %v177
    %2803 = vmatpush.msra.mxu0 %v171
    %2804 = vmatpush.msra.mxu0 %v165
    %2805 = vmatpush.msra.mxu0 %v159
    %2806 = vmatpush.msra.mxu0 %v153
    %2807 = vmatpush.msra.mxu0 %v147
    %2808 = vmatpush.msra.mxu0 %v141
    %2809 = vmatpush.msra.mxu0 %v135
    %2810 = vmatpush.msra.mxu0 %v129
    %2811 = vmatmul.f32.gmra.mxu0 %v2644
    %v2812 = vpop.f32.mrf.mxu0
    %v2813 = vadd.f32 %v2793, %v2812
    %2814 = vdwg.mxu0
    %2815 = vmatpush.msra.mxu0 %v124
    %2816 = vmatpush.msra.mxu0 %v118
    %2817 = vmatpush.msra.mxu0 %v112
    %2818 = vmatpush.msra.mxu0 %v106
    %2819 = vmatpush.msra.mxu0 %v100
    %2820 = vmatpush.msra.mxu0 %v94
    %2821 = vmatpush.msra.mxu0 %v88
    %2822 = vmatpush.msra.mxu0 %v82
    %2823 = vmatpush.msra.mxu0 %v76
    %2824 = vmatpush.msra.mxu0 %v70
    %2825 = vmatpush.msra.mxu0 %v64
    %2826 = vmatpush.msra.mxu0 %v58
    %2827 = vmatpush.msra.mxu0 %v52
    %2828 = vmatpush.msra.mxu0 %v46
    %2829 = vmatpush.msra.mxu0 %v40
    %2830 = vmatpush.msra.mxu0 %v34
    %2831 = vmatmul.f32.gmra.mxu0 %v2643
    %v2832 = vpop.f32.mrf.mxu0
    %v2833 = vadd.f32 0.0, %v2832
    %2834 = vdwg.mxu0
    %2835 = vmatpush.msra.mxu0 %v220
    %2836 = vmatpush.msra.mxu0 %v214
    %2837 = vmatpush.msra.mxu0 %v208
    %2838 = vmatpush.msra.mxu0 %v202
    %2839 = vmatpush.msra.mxu0 %v196
    %2840 = vmatpush.msra.mxu0 %v190
    %2841 = vmatpush.msra.mxu0 %v184
    %2842 = vmatpush.msra.mxu0 %v178
    %2843 = vmatpush.msra.mxu0 %v172
    %2844 = vmatpush.msra.mxu0 %v166
    %2845 = vmatpush.msra.mxu0 %v160
    %2846 = vmatpush.msra.mxu0 %v154
    %2847 = vmatpush.msra.mxu0 %v148
    %2848 = vmatpush.msra.mxu0 %v142
    %2849 = vmatpush.msra.mxu0 %v136
    %2850 = vmatpush.msra.mxu0 %v130
    %2851 = vmatmul.f32.gmra.mxu0 %v2644
    %v2852 = vpop.f32.mrf.mxu0
    %v2853 = vadd.f32 %v2833, %v2852
    %2854 = vdwg.mxu0
    %2855 = vmatpush.msra.mxu0 %v125
    %2856 = vmatpush.msra.mxu0 %v119
    %2857 = vmatpush.msra.mxu0 %v113
    %2858 = vmatpush.msra.mxu0 %v107
    %2859 = vmatpush.msra.mxu0 %v101
    %2860 = vmatpush.msra.mxu0 %v95
    %2861 = vmatpush.msra.mxu0 %v89
    %2862 = vmatpush.msra.mxu0 %v83
    %2863 = vmatpush.msra.mxu0 %v77
    %2864 = vmatpush.msra.mxu0 %v71
    %2865 = vmatpush.msra.mxu0 %v65
    %2866 = vmatpush.msra.mxu0 %v59
    %2867 = vmatpush.msra.mxu0 %v53
    %2868 = vmatpush.msra.mxu0 %v47
    %2869 = vmatpush.msra.mxu0 %v41
    %2870 = vmatpush.msra.mxu0 %v35
    %2871 = vmatmul.f32.gmra.mxu0 %v2643
    %v2872 = vpop.f32.mrf.mxu0
    %v2873 = vadd.f32 0.0, %v2872
    %2874 = vdwg.mxu0
    %2875 = vmatpush.msra.mxu0 %v221
    %2876 = vmatpush.msra.mxu0 %v215
    %2877 = vmatpush.msra.mxu0 %v209
    %2878 = vmatpush.msra.mxu0 %v203
    %2879 = vmatpush.msra.mxu0 %v197
    %2880 = vmatpush.msra.mxu0 %v191
    %2881 = vmatpush.msra.mxu0 %v185
    %2882 = vmatpush.msra.mxu0 %v179
    %2883 = vmatpush.msra.mxu0 %v173
    %2884 = vmatpush.msra.mxu0 %v167
    %2885 = vmatpush.msra.mxu0 %v161
    %2886 = vmatpush.msra.mxu0 %v155
    %2887 = vmatpush.msra.mxu0 %v149
    %2888 = vmatpush.msra.mxu0 %v143
    %2889 = vmatpush.msra.mxu0 %v137
    %2890 = vmatpush.msra.mxu0 %v131
    %2891 = vmatmul.f32.gmra.mxu0 %v2644
    %v2892 = vpop.f32.mrf.mxu0
    %v2893 = vadd.f32 %v2873, %v2892
    %2894 = vdwg.mxu0
    %v2895 = vadd.f32 %v2649, %v2693
    %v2896 = vadd.f32 %v2650, %v2733
    %v2897 = vadd.f32 %v2651, %v2773
    %v2898 = vadd.f32 %v2652, %v2813
    %v2899 = vxor.u32 %v2895, 2147483648
    %v2900 = vxor.u32 %v2896, 2147483648
    %v2901 = vxor.u32 %v2897, 2147483648
    %v2902 = vxor.u32 %v2898, 2147483648
    %v2903 = vmul.f32 %v2899, 1.442695
    %v2904 = vpow.pop %v2903
    %v2905 = vmul.f32 %v2900, 1.442695
    %v2906 = vpow.pop %v2905
    %v2907 = vmul.f32 %v2901, 1.442695
    %v2908 = vpow.pop %v2907
    %v2909 = vmul.f32 %v2902, 1.442695
    %v2910 = vpow.pop %v2909
    %v2911 = vadd.f32 %v2904, 1.0
    %v2912 = vadd.f32 %v2906, 1.0
    %v2913 = vadd.f32 %v2908, 1.0
    %v2914 = vadd.f32 %v2910, 1.0
    %v2915 = vrcp.pop %v2911
    %v2916 = vmul.f32 %v2911, %v2915
    %v2917 = vsub.f32 1.0, %v2916
    %v2918 = vmul.f32 %v2915, %v2917
    %v2919 = vadd.f32 %v2915, %v2918
    %vm2920 = vweird.f32 %v2911
    %vm2921 = vweird.f32 %v2915
    %vm2922 = vmor %vm2920, %vm2921
    %v2923 = vsel %vm2922, %v2915, %v2919
    %v2924 = vand.u32 2147483647, %v2911
    %vm2925 = vcmp.eq.f32.partialorder %v2924, 8.507059e+37
    %v2926 = vand.u32 %v2911, 2147483648
    %v2927 = vor.u32 1.1754944e-38, %v2926
    %v2928 = vsel %vm2925, %v2927, %v2923
    %v2929 = vmul.f32 1.0, %v2928
    %v2930 = vrcp.pop %v2912
    %v2931 = vmul.f32 %v2912, %v2930
    %v2932 = vsub.f32 1.0, %v2931
    %v2933 = vmul.f32 %v2930, %v2932
    %v2934 = vadd.f32 %v2930, %v2933
    %vm2935 = vweird.f32 %v2912
    %vm2936 = vweird.f32 %v2930
    %vm2937 = vmor %vm2935, %vm2936
    %v2938 = vsel %vm2937, %v2930, %v2934
    %v2939 = vand.u32 2147483647, %v2912
    %vm2940 = vcmp.eq.f32.partialorder %v2939, 8.507059e+37
    %v2941 = vand.u32 %v2912, 2147483648
    %v2942 = vor.u32 1.1754944e-38, %v2941
    %v2943 = vsel %vm2940, %v2942, %v2938
    %v2944 = vmul.f32 1.0, %v2943
    %v2945 = vrcp.pop %v2913
    %v2946 = vmul.f32 %v2913, %v2945
    %v2947 = vsub.f32 1.0, %v2946
    %v2948 = vmul.f32 %v2945, %v2947
    %v2949 = vadd.f32 %v2945, %v2948
    %vm2950 = vweird.f32 %v2913
    %vm2951 = vweird.f32 %v2945
    %vm2952 = vmor %vm2950, %vm2951
    %v2953 = vsel %vm2952, %v2945, %v2949
    %v2954 = vand.u32 2147483647, %v2913
    %vm2955 = vcmp.eq.f32.partialorder %v2954, 8.507059e+37
    %v2956 = vand.u32 %v2913, 2147483648
    %v2957 = vor.u32 1.1754944e-38, %v2956
    %v2958 = vsel %vm2955, %v2957, %v2953
    %v2959 = vmul.f32 1.0, %v2958
    %v2960 = vrcp.pop %v2914
    %v2961 = vmul.f32 %v2914, %v2960
    %v2962 = vsub.f32 1.0, %v2961
    %v2963 = vmul.f32 %v2960, %v2962
    %v2964 = vadd.f32 %v2960, %v2963
    %vm2965 = vweird.f32 %v2914
    %vm2966 = vweird.f32 %v2960
    %vm2967 = vmor %vm2965, %vm2966
    %v2968 = vsel %vm2967, %v2960, %v2964
    %v2969 = vand.u32 2147483647, %v2914
    %vm2970 = vcmp.eq.f32.partialorder %v2969, 8.507059e+37
    %v2971 = vand.u32 %v2914, 2147483648
    %v2972 = vor.u32 1.1754944e-38, %v2971
    %v2973 = vsel %vm2970, %v2972, %v2968
    %v2974 = vmul.f32 1.0, %v2973
    %v2975 = vadd.f32 %v2853, %v550
    %v2976 = vadd.f32 %v2893, %v551
    %v2977 = vmul.f32 %v2929, %v2975
    %v2978 = vmul.f32 %v2944, %v2976
    %v2979 = vadd.f32 %v2653, %v2977
    %v2980 = vadd.f32 %v2654, %v2978
    %v2981 = vtanh.pop %v2979
    %v2982 = vtanh.pop %v2980
    %v2983 = vsub.f32 1.0, %v2959
    %v2984 = vsub.f32 1.0, %v2974
    %v2985 = vmul.f32 %v2983, %v2981
    %v2986 = vmul.f32 %v2984, %v2982
    %v2987 = vmul.f32 %v2959, %v2643
    %v2988 = vmul.f32 %v2974, %v2644
    %v2989 = vadd.f32 %v2985, %v2987
    %v2990 = vadd.f32 %v2986, %v2988
    %s2991 = scalar_lea.vmem %s3, 112
    %2992 = vst [vmem:[%s2991] sm:$0xff] %v2989
    %2993 = vst [vmem:[%s2991 + $0x8] sm:$0xff] %v2990
    // Predicated region
    $region18: #{transformer_forward.2} parent=1 // pred_check
      _
    $region19: #{transformer_forward.2} parent=1 // pred_check_branch
      %2995 = sbr.rel (0) target = $region21
    $region20: #{transformer_forward.2} parent=1 // pred_region
      _
    $region21: #{transformer_forward.2} parent=1 // pred_fallthru
      _
    // Predicated region
    $region22: #{transformer_forward.2} parent=1 // pred_check
      _
    $region23: #{transformer_forward.2} parent=1 // pred_check_branch
      %2997 = sbr.rel (0) target = $region25
    $region24: #{transformer_forward.2} parent=1 // pred_region
      _
    $region25: #{transformer_forward.2} parent=1 // pred_fallthru
      _
    %2998 = vsyncpa [#allocation3], 1

</llo_original>
